<compile_context>
chip_gen: v7x
topology: tpu7x:2x2x1
jax: 0.10.0
libtpu: 0.0.40
codegen_flags: <defaults>
</compile_context>

<pallas_src>
import functools

import jax
import jax.numpy as jnp
from jax.experimental import pallas as pl
from jax.experimental.pallas import tpu as pltpu

_PREC = jax.lax.Precision.HIGHEST


def _param_offsets(D, H):
    """Row offsets of each section inside the packed (rows, H) parameter slab.

    Every section starts on an 8-row (sublane) boundary so in-kernel slices are
    aligned.  Layout: [W_ih^T | W_hh^T | fused bias | W_out^T (lane-padded) | b_out].
    """
    r8 = lambda n: -(-n // 8) * 8
    o_wih = 0
    o_whh = o_wih + r8(D)
    o_b = o_whh + r8(H)
    o_wout = o_b + 8
    o_bout = o_wout + r8(H)
    total = o_bout + 8
    return o_wih, o_whh, o_b, o_wout, o_bout, total


def pack_params(w_ih, w_hh, b_ih, b_hh, w_out, b_out):
    """One-time (per model) preprocessing: transpose to right-multiply form, fold the
    two RNN biases, zero-pad the head to H lanes, and pack everything into a single
    lane-padded f32 slab so the kernel sees exactly one constant operand."""
    H, D = w_ih.shape
    O = w_out.shape[0]
    assert w_hh.shape == (H, H) and w_out.shape == (O, H) and O <= H
    o_wih, o_whh, o_b, o_wout, o_bout, total = _param_offsets(D, H)
    p = jnp.zeros((total, H), jnp.float32)
    p = p.at[o_wih:o_wih + D, :].set(jnp.transpose(w_ih).astype(jnp.float32))
    p = p.at[o_whh:o_whh + H, :].set(jnp.transpose(w_hh).astype(jnp.float32))
    p = p.at[o_b, :].set((b_ih + b_hh).astype(jnp.float32))
    p = p.at[o_wout:o_wout + H, :O].set(jnp.transpose(w_out).astype(jnp.float32))
    p = p.at[o_bout, :O].set(b_out.astype(jnp.float32))
    return p


def _rnn_kernel(x_ref, p_ref, o_ref):
    # x_ref: (T*B, D) time-major rows; p_ref: packed params (rows, H); o_ref: (B, O).
    TB, D = x_ref.shape
    H = p_ref.shape[1]
    B, O = o_ref.shape
    T = TB // B
    o_wih, o_whh, o_b, o_wout, o_bout, _ = _param_offsets(D, H)

    p = p_ref[...]
    wih = p[o_wih:o_wih + D, :]            # (D, H)
    whh = p[o_whh:o_whh + H, :]            # (H, H)
    bias = p[o_b:o_b + 1, :]               # (1, H)   = b_ih + b_hh
    wout = p[o_wout:o_wout + H, :]         # (H, H)   zero-padded beyond column O-1
    bout = p[o_bout:o_bout + 1, :]         # (1, H)   zero-padded beyond column O-1

    # Hoisted input projection: one MXU matmul over all T*B rows, time-major output.
    pre = jnp.dot(x_ref[...], wih, preferred_element_type=jnp.float32,
                  precision=_PREC) + bias  # (T*B, H)

    # Serial recurrence. T is a small static constant -> fully unrolled, every slice is
    # a static contiguous sublane slice (rows t*B .. t*B+B-1), and the only work on the
    # dependence chain is one tiny matmul + tanh per step.
    h = jnp.zeros((B, H), jnp.float32)
    for t in range(T):
        h = jnp.tanh(pre[t * B:(t + 1) * B, :]
                     + jnp.dot(h, whh, preferred_element_type=jnp.float32,
                               precision=_PREC))

    # Fused head: ReLU + Linear on the last hidden state (padded lanes are zero).
    act = jnp.maximum(h, 0.0)
    y = jnp.dot(act, wout, preferred_element_type=jnp.float32,
                precision=_PREC) + bout    # (B, H)
    o_ref[...] = y[:, :O].astype(o_ref.dtype)


@functools.partial(jax.jit, static_argnums=(2,))
def rnn_forward(x_btd, packed_params, out_features):
    """x_btd: (B, T, D) batch_first, like PyTorch. Returns (B, out_features)."""
    B, T, D = x_btd.shape
    # One tiny per-call transpose to time-major so the kernel's per-step slices are
    # contiguous; this replaces T strided sublane gathers on the serial critical path.
    x_tb = jnp.transpose(x_btd.astype(jnp.float32), (1, 0, 2)).reshape(T * B, D)

    vmem = pl.BlockSpec(memory_space=pltpu.MemorySpace.VMEM)
    return pl.pallas_call(
        _rnn_kernel,
        out_shape=jax.ShapeDtypeStruct((B, out_features), jnp.float32),
        in_specs=[vmem, vmem],
        out_specs=vmem,
    )(x_tb, packed_params)


def rnn_reference(x_btd, w_ih, w_hh, b_ih, b_hh, w_out, b_out):
    """Pure-JAX reference matching PyTorch nn.RNN(batch_first, tanh) + ReLU + Linear."""
    B, T, D = x_btd.shape
    H = w_hh.shape[0]
    h = jnp.zeros((B, H), jnp.float32)
    for t in range(T):
        x_t = x_btd[:, t, :]
        h = jnp.tanh(x_t @ w_ih.T + b_ih + h @ w_hh.T + b_hh)
    act = jnp.maximum(h, 0.0)
    return act @ w_out.T + b_out


if __name__ == "__main__":
    # layer_specs equivalent:
    #   [{'type': 'rnn', 'input_size': 16, 'hidden_size': 32, 'num_layers': 1},
    #    {'type': 'activation', 'name': 'relu'},
    #    {'type': 'linear', 'in_features': 32, 'out_features': 8}]
    B, T, D, H, O = 2, 8, 16, 32, 8

    key = jax.random.PRNGKey(0)
    kx, k1, k2, k3, k4, k5, k6 = jax.random.split(key, 7)

    # Deterministic init mirroring PyTorch's U(-1/sqrt(H), 1/sqrt(H)).
    bound = 1.0 / jnp.sqrt(jnp.float32(H))
    x = jax.random.normal(kx, (B, T, D), jnp.float32)
    w_ih = jax.random.uniform(k1, (H, D), jnp.float32, -bound, bound)
    w_hh = jax.random.uniform(k2, (H, H), jnp.float32, -bound, bound)
    b_ih = jax.random.uniform(k3, (H,), jnp.float32, -bound, bound)
    b_hh = jax.random.uniform(k4, (H,), jnp.float32, -bound, bound)
    w_out = jax.random.uniform(k5, (O, H), jnp.float32, -bound, bound)
    b_out = jax.random.uniform(k6, (O,), jnp.float32, -bound, bound)

    # One-time weight preparation (hoisted out of the per-call path).
    packed = jax.block_until_ready(
        pack_params(w_ih, w_hh, b_ih, b_hh, w_out, b_out))

    out = rnn_forward(x, packed, O)
    out = jax.block_until_ready(out)

    ref = rnn_reference(x, w_ih, w_hh, b_ih, b_hh, w_out, b_out)
    assert out.shape == (B, O), out.shape
    assert jnp.allclose(out, ref, atol=1e-5, rtol=1e-5), (out, ref)

    print("KERNEL_OK")
</pallas_src>

<mosaic_0001>
module attributes {stable_mosaic.version = 11 : i64} {
  func.func @_rnn_kernel(%arg0: memref<16x16xf32, #tpu.memory_space<vmem>>, %arg1: memref<96x32xf32, #tpu.memory_space<vmem>>, %arg2: memref<2x8xf32, #tpu.memory_space<vmem>>) attributes {dimension_semantics = [], scalar_prefetch = 0 : i64, scratch_operands = 0 : i64, tpu.core_type = #tpu.core_type<tc>} {
    %c0 = arith.constant 0 : index
    %c0_0 = arith.constant 0 : index
    %0 = vector.load %arg1[%c0, %c0_0] : memref<96x32xf32, #tpu.memory_space<vmem>>, vector<96x32xf32>
    %1 = vector.extract_strided_slice %0 {offsets = [0, 0], sizes = [16, 32], strides = [1, 1]} : vector<96x32xf32> to vector<16x32xf32>
    %2 = vector.extract_strided_slice %0 {offsets = [16, 0], sizes = [32, 32], strides = [1, 1]} : vector<96x32xf32> to vector<32x32xf32>
    %3 = vector.extract_strided_slice %0 {offsets = [48, 0], sizes = [1, 32], strides = [1, 1]} : vector<96x32xf32> to vector<1x32xf32>
    %4 = vector.extract_strided_slice %0 {offsets = [56, 0], sizes = [32, 32], strides = [1, 1]} : vector<96x32xf32> to vector<32x32xf32>
    %5 = vector.extract_strided_slice %0 {offsets = [88, 0], sizes = [1, 32], strides = [1, 1]} : vector<96x32xf32> to vector<1x32xf32>
    %c0_1 = arith.constant 0 : index
    %c0_2 = arith.constant 0 : index
    %6 = vector.load %arg0[%c0_1, %c0_2] : memref<16x16xf32, #tpu.memory_space<vmem>>, vector<16x16xf32>
    %cst = arith.constant dense<0.000000e+00> : vector<16x32xf32>
    %7 = tpu.matmul %6, %1, %cst {dimension_numbers = #tpu.dot_dimension_numbers<[1], [0], [0], [1], [0, 0, 1, 1], [], []>, precision = #tpu.contract_precision<fp32>} : vector<16x16xf32>, vector<16x32xf32>, vector<16x32xf32> -> vector<16x32xf32>
    %8 = vector.broadcast %3 : vector<1x32xf32> to vector<16x32xf32>
    %9 = arith.addf %7, %8 : vector<16x32xf32>
    %cst_3 = arith.constant 0.000000e+00 : f32
    %10 = vector.broadcast %cst_3 : f32 to vector<2x32xf32>
    %11 = vector.extract_strided_slice %9 {offsets = [0, 0], sizes = [2, 32], strides = [1, 1]} : vector<16x32xf32> to vector<2x32xf32>
    %cst_4 = arith.constant dense<0.000000e+00> : vector<2x32xf32>
    %12 = tpu.matmul %10, %2, %cst_4 {dimension_numbers = #tpu.dot_dimension_numbers<[1], [0], [0], [1], [0, 0, 1, 1], [], []>, precision = #tpu.contract_precision<fp32>} : vector<2x32xf32>, vector<32x32xf32>, vector<2x32xf32> -> vector<2x32xf32>
    %13 = arith.addf %11, %12 : vector<2x32xf32>
    %14 = math.tanh %13 : vector<2x32xf32>
    %15 = vector.extract_strided_slice %9 {offsets = [2, 0], sizes = [2, 32], strides = [1, 1]} : vector<16x32xf32> to vector<2x32xf32>
    %cst_5 = arith.constant dense<0.000000e+00> : vector<2x32xf32>
    %16 = tpu.matmul %14, %2, %cst_5 {dimension_numbers = #tpu.dot_dimension_numbers<[1], [0], [0], [1], [0, 0, 1, 1], [], []>, precision = #tpu.contract_precision<fp32>} : vector<2x32xf32>, vector<32x32xf32>, vector<2x32xf32> -> vector<2x32xf32>
    %17 = arith.addf %15, %16 : vector<2x32xf32>
    %18 = math.tanh %17 : vector<2x32xf32>
    %19 = vector.extract_strided_slice %9 {offsets = [4, 0], sizes = [2, 32], strides = [1, 1]} : vector<16x32xf32> to vector<2x32xf32>
    %cst_6 = arith.constant dense<0.000000e+00> : vector<2x32xf32>
    %20 = tpu.matmul %18, %2, %cst_6 {dimension_numbers = #tpu.dot_dimension_numbers<[1], [0], [0], [1], [0, 0, 1, 1], [], []>, precision = #tpu.contract_precision<fp32>} : vector<2x32xf32>, vector<32x32xf32>, vector<2x32xf32> -> vector<2x32xf32>
    %21 = arith.addf %19, %20 : vector<2x32xf32>
    %22 = math.tanh %21 : vector<2x32xf32>
    %23 = vector.extract_strided_slice %9 {offsets = [6, 0], sizes = [2, 32], strides = [1, 1]} : vector<16x32xf32> to vector<2x32xf32>
    %cst_7 = arith.constant dense<0.000000e+00> : vector<2x32xf32>
    %24 = tpu.matmul %22, %2, %cst_7 {dimension_numbers = #tpu.dot_dimension_numbers<[1], [0], [0], [1], [0, 0, 1, 1], [], []>, precision = #tpu.contract_precision<fp32>} : vector<2x32xf32>, vector<32x32xf32>, vector<2x32xf32> -> vector<2x32xf32>
    %25 = arith.addf %23, %24 : vector<2x32xf32>
    %26 = math.tanh %25 : vector<2x32xf32>
    %27 = vector.extract_strided_slice %9 {offsets = [8, 0], sizes = [2, 32], strides = [1, 1]} : vector<16x32xf32> to vector<2x32xf32>
    %cst_8 = arith.constant dense<0.000000e+00> : vector<2x32xf32>
    %28 = tpu.matmul %26, %2, %cst_8 {dimension_numbers = #tpu.dot_dimension_numbers<[1], [0], [0], [1], [0, 0, 1, 1], [], []>, precision = #tpu.contract_precision<fp32>} : vector<2x32xf32>, vector<32x32xf32>, vector<2x32xf32> -> vector<2x32xf32>
    %29 = arith.addf %27, %28 : vector<2x32xf32>
    %30 = math.tanh %29 : vector<2x32xf32>
    %31 = vector.extract_strided_slice %9 {offsets = [10, 0], sizes = [2, 32], strides = [1, 1]} : vector<16x32xf32> to vector<2x32xf32>
    %cst_9 = arith.constant dense<0.000000e+00> : vector<2x32xf32>
    %32 = tpu.matmul %30, %2, %cst_9 {dimension_numbers = #tpu.dot_dimension_numbers<[1], [0], [0], [1], [0, 0, 1, 1], [], []>, precision = #tpu.contract_precision<fp32>} : vector<2x32xf32>, vector<32x32xf32>, vector<2x32xf32> -> vector<2x32xf32>
    %33 = arith.addf %31, %32 : vector<2x32xf32>
    %34 = math.tanh %33 : vector<2x32xf32>
    %35 = vector.extract_strided_slice %9 {offsets = [12, 0], sizes = [2, 32], strides = [1, 1]} : vector<16x32xf32> to vector<2x32xf32>
    %cst_10 = arith.constant dense<0.000000e+00> : vector<2x32xf32>
    %36 = tpu.matmul %34, %2, %cst_10 {dimension_numbers = #tpu.dot_dimension_numbers<[1], [0], [0], [1], [0, 0, 1, 1], [], []>, precision = #tpu.contract_precision<fp32>} : vector<2x32xf32>, vector<32x32xf32>, vector<2x32xf32> -> vector<2x32xf32>
    %37 = arith.addf %35, %36 : vector<2x32xf32>
    %38 = math.tanh %37 : vector<2x32xf32>
    %39 = vector.extract_strided_slice %9 {offsets = [14, 0], sizes = [2, 32], strides = [1, 1]} : vector<16x32xf32> to vector<2x32xf32>
    %cst_11 = arith.constant dense<0.000000e+00> : vector<2x32xf32>
    %40 = tpu.matmul %38, %2, %cst_11 {dimension_numbers = #tpu.dot_dimension_numbers<[1], [0], [0], [1], [0, 0, 1, 1], [], []>, precision = #tpu.contract_precision<fp32>} : vector<2x32xf32>, vector<32x32xf32>, vector<2x32xf32> -> vector<2x32xf32>
    %41 = arith.addf %39, %40 : vector<2x32xf32>
    %42 = math.tanh %41 : vector<2x32xf32>
    %cst_12 = arith.constant 0.000000e+00 : f32
    %43 = vector.broadcast %cst_12 : f32 to vector<2x32xf32>
    %44 = arith.maximumf %42, %43 : vector<2x32xf32>
    %cst_13 = arith.constant dense<0.000000e+00> : vector<2x32xf32>
    %45 = tpu.matmul %44, %4, %cst_13 {dimension_numbers = #tpu.dot_dimension_numbers<[1], [0], [0], [1], [0, 0, 1, 1], [], []>, precision = #tpu.contract_precision<fp32>} : vector<2x32xf32>, vector<32x32xf32>, vector<2x32xf32> -> vector<2x32xf32>
    %46 = vector.broadcast %5 : vector<1x32xf32> to vector<2x32xf32>
    %47 = arith.addf %45, %46 : vector<2x32xf32>
    %48 = vector.extract_strided_slice %47 {offsets = [0, 0], sizes = [2, 8], strides = [1, 1]} : vector<2x32xf32> to vector<2x8xf32>
    %c0_14 = arith.constant 0 : index
    %c0_15 = arith.constant 0 : index
    %49 = vector.load %arg2[%c0_14, %c0_15] : memref<2x8xf32, #tpu.memory_space<vmem>>, vector<2x8xf32>
    tpu.vector_store %arg2[%c0_14, %c0_15], %48 {strides = array<i32>} : memref<2x8xf32, #tpu.memory_space<vmem>>, vector<2x8xf32>,
    return
  }
}

</mosaic_0001>

<llo_original>
// kernel: rnn_forward.1
$region0: #{rnn_forward.1}
  #allocation0 [shape = 'u32[]', space=smem, size = 0x4, offset = 0x4, fixed_abs, tag = 'smem constant byte address 0x4 - core index']
  #allocation1 [shape = 'u32[144,128]{1,0:T(1,128)}', space=vmem, size = 0x12000, scoped, tag = 'internal scratch']
  %s0 = inlined_call_operand.vmem [shape: f32[16,16], index: 0, kind: input, shape index: {}]
  %s1 = inlined_call_operand.vmem [shape: f32[96,32], index: 1, kind: input, shape index: {}]
  %s2 = inlined_call_operand.hbm [shape: f32[2,8], index: 2, kind: output, shape index: {}]
  %s3 = sld [smem:[#allocation0]]
  $region18: #{rnn_forward.1} parent=0
    _
  %s5 = ssub.s32 1, %s3
  %s6 = scalar_select 0, %s5, %s3
  $region1: #{rnn_forward.1} parent=0
    #allocation2 [shape = 'u8[1024]{0}', space=vmem, size = 0x400, scoped, tag = 'output window, operand 0, single buffered']
    #allocation3 [shape = 's32[1]{0}', space=sflag, size = 0x4, scoped, tag = 'scoped memory for rnn_forward.1']
    %7 = vsyncpa [#allocation3], 0
    // Predicated region
    $region2: #{rnn_forward.1} parent=1 // pred_check
      _
    $region3: #{rnn_forward.1} parent=1 // pred_check_branch
      %9 = sbr.rel (0) target = $region5
    $region4: #{rnn_forward.1} parent=1 // pred_region
      _
    $region5: #{rnn_forward.1} parent=1 // pred_fallthru
      _
    // Predicated region
    $region6: #{rnn_forward.1} parent=1 // pred_check
      _
    $region7: #{rnn_forward.1} parent=1 // pred_check_branch
      %11 = sbr.rel (0) target = $region9
    $region8: #{rnn_forward.1} parent=1 // pred_region
      _
    $region9: #{rnn_forward.1} parent=1 // pred_fallthru
      _
    %v12 = vld [vmem:[%s1] sm:$0xff]
    %v13 = vld [vmem:[%s1 + $0x8] sm:$0xff]
    %v14 = vld [vmem:[%s1 + $0x10] sm:$0xff]
    %v15 = vld [vmem:[%s1 + $0x18] sm:$0xff]
    %v16 = vld [vmem:[%s1 + $0x20] sm:$0xff]
    %v17 = vld [vmem:[%s1 + $0x28] sm:$0xff]
    %v18 = vld [vmem:[%s1 + $0x30] sm:$0xff]
    %v19 = vld [vmem:[%s1 + $0x38] sm:$0xff]
    %v20 = vld [vmem:[%s1 + $0x40] sm:$0xff]
    %v21 = vld [vmem:[%s1 + $0x48] sm:$0xff]
    %v22 = vld [vmem:[%s1 + $0x50] sm:$0xff]
    %v23 = vld [vmem:[%s1 + $0x58] sm:$0xff]
    %v24 = vld [vmem:[%s0] sm:$0xff]
    %v25 = vld [vmem:[%s0 + $0x8] sm:$0xff]
    %v26 = vlaneseq
    %v27 = vshrl.u32 %v26, 7
    %v28 = vsub.s32 0, %v27
    %v29 = vrot.slane %v18, %v28
    %vm30 = vcmask 130048
    %v32 = vsel %vm30, %v24, 0
    %v35 = vsel %vm30, %v25, 0
    %37 = vmatprep.subr.mxu0 0.0
    %v38 = vand.u32 %v12, 4294901760
    %39 = vmatpush1.msra.mxu0 %v38
    %40 = vmatprep.subr.mxu0 0.0
    %v41 = vand.u32 %v13, 4294901760
    %42 = vmatpush1.msra.mxu0 %v41
    %43 = vmatprep.subr.mxu0 0.0
    %44 = vmatpush1.msra.mxu0 0.0
    %45 = vmatprep.subr.mxu0 0.0
    %46 = vmatpush1.msra.mxu0 0.0
    %47 = vmatprep.subr.mxu0 0.0
    %48 = vmatpush1.msra.mxu0 0.0
    %49 = vmatprep.subr.mxu0 0.0
    %50 = vmatpush1.msra.mxu0 0.0
    %51 = vmatprep.subr.mxu0 0.0
    %52 = vmatpush1.msra.mxu0 0.0
    %53 = vmatprep.subr.mxu0 0.0
    %54 = vmatpush1.msra.mxu0 0.0
    %55 = vmatprep.subr.mxu0 0.0
    %56 = vmatpush1.msra.mxu0 0.0
    %57 = vmatprep.subr.mxu0 0.0
    %58 = vmatpush1.msra.mxu0 0.0
    %59 = vmatprep.subr.mxu0 0.0
    %60 = vmatpush1.msra.mxu0 0.0
    %61 = vmatprep.subr.mxu0 0.0
    %62 = vmatpush1.msra.mxu0 0.0
    %63 = vmatprep.subr.mxu0 0.0
    %64 = vmatpush1.msra.mxu0 0.0
    %65 = vmatprep.subr.mxu0 0.0
    %66 = vmatpush1.msra.mxu0 0.0
    %67 = vmatprep.subr.mxu0 0.0
    %68 = vmatpush1.msra.mxu0 0.0
    %69 = vmatprep.subr.mxu0 0.0
    %70 = vmatpush1.msra.mxu0 0.0
    %71 = vmatprep.subr.mxu0 0.0
    %72 = vmatpush1.msra.mxu0 0.0
    %73 = vmatprep.subr.mxu0 0.0
    %74 = vmatpush1.msra.mxu0 0.0
    %75 = vmatprep.subr.mxu0 0.0
    %76 = vmatpush1.msra.mxu0 0.0
    %77 = vmatprep.subr.mxu0 0.0
    %78 = vmatpush1.msra.mxu0 0.0
    %79 = vmatprep.subr.mxu0 0.0
    %80 = vmatpush1.msra.mxu0 0.0
    %81 = vmatprep.subr.mxu0 0.0
    %82 = vmatpush1.msra.mxu0 0.0
    %83 = vmatprep.subr.mxu0 0.0
    %84 = vmatpush1.msra.mxu0 0.0
    %85 = vmatprep.subr.mxu0 0.0
    %86 = vmatpush1.msra.mxu0 0.0
    %87 = vmatprep.subr.mxu0 0.0
    %88 = vmatpush1.msra.mxu0 0.0
    %89 = vmatprep.subr.mxu0 0.0
    %90 = vmatpush1.msra.mxu0 0.0
    %91 = vmatprep.subr.mxu0 0.0
    %92 = vmatpush1.msra.mxu0 0.0
    %93 = vmatprep.subr.mxu0 0.0
    %94 = vmatpush1.msra.mxu0 0.0
    %95 = vmatprep.subr.mxu0 0.0
    %96 = vmatpush1.msra.mxu0 0.0
    %97 = vmatprep.subr.mxu0 0.0
    %98 = vmatpush1.msra.mxu0 0.0
    %99 = vmatprep.subr.mxu0 0.0
    %100 = vmatpush1.msra.mxu0 0.0
    %101 = vmatprep.subr.mxu0 0.0
    %102 = vmatpush1.msra.mxu0 0.0
    %103 = vmatprep.mubr.f32.mxu0 0.0
    %v104 = vand.u32 %v32, 4294901760
    %v105 = vsub.f32 %v32, %v104
    %v106 = vand.u32 %v105, 4294901760
    %v107 = vsub.f32 %v105, %v106
    %v108 = vand.u32 %v107, 4294901760
    %109 = vmatmul.mubr.f32.gmra.mrb[0].mxu0 %v108
    %v110 = vpop.f32.mrb[0].mxu0
    %v111 = vadd.f32 %v29, %v110
    %v112 = vpop.f32.mrb[0].mxu0
    %113 = vmatprep.mubr.f32.mxu0 0.0
    %v114 = vand.u32 %v35, 4294901760
    %v115 = vsub.f32 %v35, %v114
    %v116 = vand.u32 %v115, 4294901760
    %v117 = vsub.f32 %v115, %v116
    %v118 = vand.u32 %v117, 4294901760
    %119 = vmatmul.mubr.f32.gmra.mrb[0].mxu0 %v118
    %v120 = vpop.f32.mrb[0].mxu0
    %v121 = vadd.f32 %v29, %v120
    %v122 = vpop.f32.mrb[0].mxu0
    %123 = vdwg.mxu0
    %124 = vmatprep.subr.mxu0 0.0
    %v125 = vand.u32 %v12, 4294901760
    %v126 = vsub.f32 %v12, %v125
    %v127 = vand.u32 %v126, 4294901760
    %v128 = vsub.f32 %v126, %v127
    %v129 = vand.u32 %v128, 4294901760
    %130 = vmatpush1.msra.mxu0 %v129
    %131 = vmatprep.subr.mxu0 0.0
    %v132 = vand.u32 %v13, 4294901760
    %v133 = vsub.f32 %v13, %v132
    %v134 = vand.u32 %v133, 4294901760
    %v135 = vsub.f32 %v133, %v134
    %v136 = vand.u32 %v135, 4294901760
    %137 = vmatpush1.msra.mxu0 %v136
    %138 = vmatprep.subr.mxu0 0.0
    %139 = vmatpush1.msra.mxu0 0.0
    %140 = vmatprep.subr.mxu0 0.0
    %141 = vmatpush1.msra.mxu0 0.0
    %142 = vmatprep.subr.mxu0 0.0
    %143 = vmatpush1.msra.mxu0 0.0
    %144 = vmatprep.subr.mxu0 0.0
    %145 = vmatpush1.msra.mxu0 0.0
    %146 = vmatprep.subr.mxu0 0.0
    %147 = vmatpush1.msra.mxu0 0.0
    %148 = vmatprep.subr.mxu0 0.0
    %149 = vmatpush1.msra.mxu0 0.0
    %150 = vmatprep.subr.mxu0 0.0
    %151 = vmatpush1.msra.mxu0 0.0
    %152 = vmatprep.subr.mxu0 0.0
    %153 = vmatpush1.msra.mxu0 0.0
    %154 = vmatprep.subr.mxu0 0.0
    %155 = vmatpush1.msra.mxu0 0.0
    %156 = vmatprep.subr.mxu0 0.0
    %157 = vmatpush1.msra.mxu0 0.0
    %158 = vmatprep.subr.mxu0 0.0
    %159 = vmatpush1.msra.mxu0 0.0
    %160 = vmatprep.subr.mxu0 0.0
    %161 = vmatpush1.msra.mxu0 0.0
    %162 = vmatprep.subr.mxu0 0.0
    %163 = vmatpush1.msra.mxu0 0.0
    %164 = vmatprep.subr.mxu0 0.0
    %165 = vmatpush1.msra.mxu0 0.0
    %166 = vmatprep.subr.mxu0 0.0
    %167 = vmatpush1.msra.mxu0 0.0
    %168 = vmatprep.subr.mxu0 0.0
    %169 = vmatpush1.msra.mxu0 0.0
    %170 = vmatprep.subr.mxu0 0.0
    %171 = vmatpush1.msra.mxu0 0.0
    %172 = vmatprep.subr.mxu0 0.0
    %173 = vmatpush1.msra.mxu0 0.0
    %174 = vmatprep.subr.mxu0 0.0
    %175 = vmatpush1.msra.mxu0 0.0
    %176 = vmatprep.subr.mxu0 0.0
    %177 = vmatpush1.msra.mxu0 0.0
    %178 = vmatprep.subr.mxu0 0.0
    %179 = vmatpush1.msra.mxu0 0.0
    %180 = vmatprep.subr.mxu0 0.0
    %181 = vmatpush1.msra.mxu0 0.0
    %182 = vmatprep.subr.mxu0 0.0
    %183 = vmatpush1.msra.mxu0 0.0
    %184 = vmatprep.subr.mxu0 0.0
    %185 = vmatpush1.msra.mxu0 0.0
    %186 = vmatprep.subr.mxu0 0.0
    %187 = vmatpush1.msra.mxu0 0.0
    %188 = vmatprep.subr.mxu0 0.0
    %189 = vmatpush1.msra.mxu0 0.0
    %190 = vmatprep.subr.mxu0 0.0
    %191 = vmatpush1.msra.mxu0 0.0
    %192 = vmatprep.subr.mxu0 0.0
    %193 = vmatpush1.msra.mxu0 0.0
    %194 = vmatprep.subr.mxu0 0.0
    %195 = vmatpush1.msra.mxu0 0.0
    %196 = vmatprep.subr.mxu0 0.0
    %197 = vmatpush1.msra.mxu0 0.0
    %198 = vmatprep.mubr.f32.mxu0 0.0
    %v199 = vand.u32 %v32, 4294901760
    %200 = vmatmul.mubr.f32.gmra.mrb[0].mxu0 %v199
    %v201 = vpop.f32.mrb[0].mxu0
    %v202 = vadd.f32 %v111, %v201
    %v203 = vpop.f32.mrb[0].mxu0
    %204 = vmatprep.mubr.f32.mxu0 0.0
    %v205 = vand.u32 %v35, 4294901760
    %206 = vmatmul.mubr.f32.gmra.mrb[0].mxu0 %v205
    %v207 = vpop.f32.mrb[0].mxu0
    %v208 = vadd.f32 %v121, %v207
    %v209 = vpop.f32.mrb[0].mxu0
    %210 = vdwg.mxu0
    %211 = vmatprep.subr.mxu0 0.0
    %v212 = vand.u32 %v12, 4294901760
    %v213 = vsub.f32 %v12, %v212
    %214 = vmatpush1.msra.mxu0 %v213
    %215 = vmatprep.subr.mxu0 0.0
    %v216 = vand.u32 %v13, 4294901760
    %v217 = vsub.f32 %v13, %v216
    %218 = vmatpush1.msra.mxu0 %v217
    %219 = vmatprep.subr.mxu0 0.0
    %220 = vmatpush1.msra.mxu0 0.0
    %221 = vmatprep.subr.mxu0 0.0
    %222 = vmatpush1.msra.mxu0 0.0
    %223 = vmatprep.subr.mxu0 0.0
    %224 = vmatpush1.msra.mxu0 0.0
    %225 = vmatprep.subr.mxu0 0.0
    %226 = vmatpush1.msra.mxu0 0.0
    %227 = vmatprep.subr.mxu0 0.0
    %228 = vmatpush1.msra.mxu0 0.0
    %229 = vmatprep.subr.mxu0 0.0
    %230 = vmatpush1.msra.mxu0 0.0
    %231 = vmatprep.subr.mxu0 0.0
    %232 = vmatpush1.msra.mxu0 0.0
    %233 = vmatprep.subr.mxu0 0.0
    %234 = vmatpush1.msra.mxu0 0.0
    %235 = vmatprep.subr.mxu0 0.0
    %236 = vmatpush1.msra.mxu0 0.0
    %237 = vmatprep.subr.mxu0 0.0
    %238 = vmatpush1.msra.mxu0 0.0
    %239 = vmatprep.subr.mxu0 0.0
    %240 = vmatpush1.msra.mxu0 0.0
    %241 = vmatprep.subr.mxu0 0.0
    %242 = vmatpush1.msra.mxu0 0.0
    %243 = vmatprep.subr.mxu0 0.0
    %244 = vmatpush1.msra.mxu0 0.0
    %245 = vmatprep.subr.mxu0 0.0
    %246 = vmatpush1.msra.mxu0 0.0
    %247 = vmatprep.subr.mxu0 0.0
    %248 = vmatpush1.msra.mxu0 0.0
    %249 = vmatprep.subr.mxu0 0.0
    %250 = vmatpush1.msra.mxu0 0.0
    %251 = vmatprep.subr.mxu0 0.0
    %252 = vmatpush1.msra.mxu0 0.0
    %253 = vmatprep.subr.mxu0 0.0
    %254 = vmatpush1.msra.mxu0 0.0
    %255 = vmatprep.subr.mxu0 0.0
    %256 = vmatpush1.msra.mxu0 0.0
    %257 = vmatprep.subr.mxu0 0.0
    %258 = vmatpush1.msra.mxu0 0.0
    %259 = vmatprep.subr.mxu0 0.0
    %260 = vmatpush1.msra.mxu0 0.0
    %261 = vmatprep.subr.mxu0 0.0
    %262 = vmatpush1.msra.mxu0 0.0
    %263 = vmatprep.subr.mxu0 0.0
    %264 = vmatpush1.msra.mxu0 0.0
    %265 = vmatprep.subr.mxu0 0.0
    %266 = vmatpush1.msra.mxu0 0.0
    %267 = vmatprep.subr.mxu0 0.0
    %268 = vmatpush1.msra.mxu0 0.0
    %269 = vmatprep.subr.mxu0 0.0
    %270 = vmatpush1.msra.mxu0 0.0
    %271 = vmatprep.subr.mxu0 0.0
    %272 = vmatpush1.msra.mxu0 0.0
    %273 = vmatprep.subr.mxu0 0.0
    %274 = vmatpush1.msra.mxu0 0.0
    %275 = vmatprep.subr.mxu0 0.0
    %276 = vmatpush1.msra.mxu0 0.0
    %277 = vmatprep.subr.mxu0 0.0
    %278 = vmatpush1.msra.mxu0 0.0
    %279 = vmatprep.mubr.f32.mxu0 0.0
    %v280 = vand.u32 %v32, 4294901760
    %v281 = vsub.f32 %v32, %v280
    %282 = vmatmul.mubr.f32.gmra.mrb[0].mxu0 %v281
    %v283 = vpop.f32.mrb[0].mxu0
    %v284 = vadd.f32 %v202, %v283
    %v285 = vpop.f32.mrb[0].mxu0
    %286 = vmatprep.mubr.f32.mxu0 0.0
    %v287 = vand.u32 %v35, 4294901760
    %v288 = vsub.f32 %v35, %v287
    %289 = vmatmul.mubr.f32.gmra.mrb[0].mxu0 %v288
    %v290 = vpop.f32.mrb[0].mxu0
    %v291 = vadd.f32 %v208, %v290
    %v292 = vpop.f32.mrb[0].mxu0
    %293 = vdwg.mxu0
    %294 = vmatprep.subr.mxu0 0.0
    %v295 = vand.u32 %v12, 4294901760
    %296 = vmatpush1.msra.mxu0 %v295
    %297 = vmatprep.subr.mxu0 0.0
    %v298 = vand.u32 %v13, 4294901760
    %299 = vmatpush1.msra.mxu0 %v298
    %300 = vmatprep.subr.mxu0 0.0
    %301 = vmatpush1.msra.mxu0 0.0
    %302 = vmatprep.subr.mxu0 0.0
    %303 = vmatpush1.msra.mxu0 0.0
    %304 = vmatprep.subr.mxu0 0.0
    %305 = vmatpush1.msra.mxu0 0.0
    %306 = vmatprep.subr.mxu0 0.0
    %307 = vmatpush1.msra.mxu0 0.0
    %308 = vmatprep.subr.mxu0 0.0
    %309 = vmatpush1.msra.mxu0 0.0
    %310 = vmatprep.subr.mxu0 0.0
    %311 = vmatpush1.msra.mxu0 0.0
    %312 = vmatprep.subr.mxu0 0.0
    %313 = vmatpush1.msra.mxu0 0.0
    %314 = vmatprep.subr.mxu0 0.0
    %315 = vmatpush1.msra.mxu0 0.0
    %316 = vmatprep.subr.mxu0 0.0
    %317 = vmatpush1.msra.mxu0 0.0
    %318 = vmatprep.subr.mxu0 0.0
    %319 = vmatpush1.msra.mxu0 0.0
    %320 = vmatprep.subr.mxu0 0.0
    %321 = vmatpush1.msra.mxu0 0.0
    %322 = vmatprep.subr.mxu0 0.0
    %323 = vmatpush1.msra.mxu0 0.0
    %324 = vmatprep.subr.mxu0 0.0
    %325 = vmatpush1.msra.mxu0 0.0
    %326 = vmatprep.subr.mxu0 0.0
    %327 = vmatpush1.msra.mxu0 0.0
    %328 = vmatprep.subr.mxu0 0.0
    %329 = vmatpush1.msra.mxu0 0.0
    %330 = vmatprep.subr.mxu0 0.0
    %331 = vmatpush1.msra.mxu0 0.0
    %332 = vmatprep.subr.mxu0 0.0
    %333 = vmatpush1.msra.mxu0 0.0
    %334 = vmatprep.subr.mxu0 0.0
    %335 = vmatpush1.msra.mxu0 0.0
    %336 = vmatprep.subr.mxu0 0.0
    %337 = vmatpush1.msra.mxu0 0.0
    %338 = vmatprep.subr.mxu0 0.0
    %339 = vmatpush1.msra.mxu0 0.0
    %340 = vmatprep.subr.mxu0 0.0
    %341 = vmatpush1.msra.mxu0 0.0
    %342 = vmatprep.subr.mxu0 0.0
    %343 = vmatpush1.msra.mxu0 0.0
    %344 = vmatprep.subr.mxu0 0.0
    %345 = vmatpush1.msra.mxu0 0.0
    %346 = vmatprep.subr.mxu0 0.0
    %347 = vmatpush1.msra.mxu0 0.0
    %348 = vmatprep.subr.mxu0 0.0
    %349 = vmatpush1.msra.mxu0 0.0
    %350 = vmatprep.subr.mxu0 0.0
    %351 = vmatpush1.msra.mxu0 0.0
    %352 = vmatprep.subr.mxu0 0.0
    %353 = vmatpush1.msra.mxu0 0.0
    %354 = vmatprep.subr.mxu0 0.0
    %355 = vmatpush1.msra.mxu0 0.0
    %356 = vmatprep.subr.mxu0 0.0
    %357 = vmatpush1.msra.mxu0 0.0
    %358 = vmatprep.subr.mxu0 0.0
    %359 = vmatpush1.msra.mxu0 0.0
    %360 = vmatprep.mubr.f32.mxu0 0.0
    %v361 = vand.u32 %v32, 4294901760
    %v362 = vsub.f32 %v32, %v361
    %v363 = vand.u32 %v362, 4294901760
    %364 = vmatmul.mubr.f32.gmra.mrb[0].mxu0 %v363
    %v365 = vpop.f32.mrb[0].mxu0
    %v366 = vadd.f32 %v284, %v365
    %v367 = vpop.f32.mrb[0].mxu0
    %368 = vmatprep.mubr.f32.mxu0 0.0
    %v369 = vand.u32 %v35, 4294901760
    %v370 = vsub.f32 %v35, %v369
    %v371 = vand.u32 %v370, 4294901760
    %372 = vmatmul.mubr.f32.gmra.mrb[0].mxu0 %v371
    %v373 = vpop.f32.mrb[0].mxu0
    %v374 = vadd.f32 %v291, %v373
    %v375 = vpop.f32.mrb[0].mxu0
    %376 = vdwg.mxu0
    %377 = vmatprep.subr.mxu0 0.0
    %v378 = vand.u32 %v12, 4294901760
    %v379 = vsub.f32 %v12, %v378
    %v380 = vand.u32 %v379, 4294901760
    %381 = vmatpush1.msra.mxu0 %v380
    %382 = vmatprep.subr.mxu0 0.0
    %v383 = vand.u32 %v13, 4294901760
    %v384 = vsub.f32 %v13, %v383
    %v385 = vand.u32 %v384, 4294901760
    %386 = vmatpush1.msra.mxu0 %v385
    %387 = vmatprep.subr.mxu0 0.0
    %388 = vmatpush1.msra.mxu0 0.0
    %389 = vmatprep.subr.mxu0 0.0
    %390 = vmatpush1.msra.mxu0 0.0
    %391 = vmatprep.subr.mxu0 0.0
    %392 = vmatpush1.msra.mxu0 0.0
    %393 = vmatprep.subr.mxu0 0.0
    %394 = vmatpush1.msra.mxu0 0.0
    %395 = vmatprep.subr.mxu0 0.0
    %396 = vmatpush1.msra.mxu0 0.0
    %397 = vmatprep.subr.mxu0 0.0
    %398 = vmatpush1.msra.mxu0 0.0
    %399 = vmatprep.subr.mxu0 0.0
    %400 = vmatpush1.msra.mxu0 0.0
    %401 = vmatprep.subr.mxu0 0.0
    %402 = vmatpush1.msra.mxu0 0.0
    %403 = vmatprep.subr.mxu0 0.0
    %404 = vmatpush1.msra.mxu0 0.0
    %405 = vmatprep.subr.mxu0 0.0
    %406 = vmatpush1.msra.mxu0 0.0
    %407 = vmatprep.subr.mxu0 0.0
    %408 = vmatpush1.msra.mxu0 0.0
    %409 = vmatprep.subr.mxu0 0.0
    %410 = vmatpush1.msra.mxu0 0.0
    %411 = vmatprep.subr.mxu0 0.0
    %412 = vmatpush1.msra.mxu0 0.0
    %413 = vmatprep.subr.mxu0 0.0
    %414 = vmatpush1.msra.mxu0 0.0
    %415 = vmatprep.subr.mxu0 0.0
    %416 = vmatpush1.msra.mxu0 0.0
    %417 = vmatprep.subr.mxu0 0.0
    %418 = vmatpush1.msra.mxu0 0.0
    %419 = vmatprep.subr.mxu0 0.0
    %420 = vmatpush1.msra.mxu0 0.0
    %421 = vmatprep.subr.mxu0 0.0
    %422 = vmatpush1.msra.mxu0 0.0
    %423 = vmatprep.subr.mxu0 0.0
    %424 = vmatpush1.msra.mxu0 0.0
    %425 = vmatprep.subr.mxu0 0.0
    %426 = vmatpush1.msra.mxu0 0.0
    %427 = vmatprep.subr.mxu0 0.0
    %428 = vmatpush1.msra.mxu0 0.0
    %429 = vmatprep.subr.mxu0 0.0
    %430 = vmatpush1.msra.mxu0 0.0
    %431 = vmatprep.subr.mxu0 0.0
    %432 = vmatpush1.msra.mxu0 0.0
    %433 = vmatprep.subr.mxu0 0.0
    %434 = vmatpush1.msra.mxu0 0.0
    %435 = vmatprep.subr.mxu0 0.0
    %436 = vmatpush1.msra.mxu0 0.0
    %437 = vmatprep.subr.mxu0 0.0
    %438 = vmatpush1.msra.mxu0 0.0
    %439 = vmatprep.subr.mxu0 0.0
    %440 = vmatpush1.msra.mxu0 0.0
    %441 = vmatprep.subr.mxu0 0.0
    %442 = vmatpush1.msra.mxu0 0.0
    %443 = vmatprep.subr.mxu0 0.0
    %444 = vmatpush1.msra.mxu0 0.0
    %445 = vmatprep.subr.mxu0 0.0
    %446 = vmatpush1.msra.mxu0 0.0
    %447 = vmatprep.mubr.f32.mxu0 0.0
    %v448 = vand.u32 %v32, 4294901760
    %449 = vmatmul.mubr.f32.gmra.mrb[0].mxu0 %v448
    %v450 = vpop.f32.mrb[0].mxu0
    %v451 = vadd.f32 %v366, %v450
    %v452 = vpop.f32.mrb[0].mxu0
    %453 = vmatprep.mubr.f32.mxu0 0.0
    %v454 = vand.u32 %v35, 4294901760
    %455 = vmatmul.mubr.f32.gmra.mrb[0].mxu0 %v454
    %v456 = vpop.f32.mrb[0].mxu0
    %v457 = vadd.f32 %v374, %v456
    %v458 = vpop.f32.mrb[0].mxu0
    %459 = vdwg.mxu0
    %460 = vmatprep.subr.mxu0 0.0
    %v461 = vand.u32 %v12, 4294901760
    %462 = vmatpush1.msra.mxu0 %v461
    %463 = vmatprep.subr.mxu0 0.0
    %v464 = vand.u32 %v13, 4294901760
    %465 = vmatpush1.msra.mxu0 %v464
    %466 = vmatprep.subr.mxu0 0.0
    %467 = vmatpush1.msra.mxu0 0.0
    %468 = vmatprep.subr.mxu0 0.0
    %469 = vmatpush1.msra.mxu0 0.0
    %470 = vmatprep.subr.mxu0 0.0
    %471 = vmatpush1.msra.mxu0 0.0
    %472 = vmatprep.subr.mxu0 0.0
    %473 = vmatpush1.msra.mxu0 0.0
    %474 = vmatprep.subr.mxu0 0.0
    %475 = vmatpush1.msra.mxu0 0.0
    %476 = vmatprep.subr.mxu0 0.0
    %477 = vmatpush1.msra.mxu0 0.0
    %478 = vmatprep.subr.mxu0 0.0
    %479 = vmatpush1.msra.mxu0 0.0
    %480 = vmatprep.subr.mxu0 0.0
    %481 = vmatpush1.msra.mxu0 0.0
    %482 = vmatprep.subr.mxu0 0.0
    %483 = vmatpush1.msra.mxu0 0.0
    %484 = vmatprep.subr.mxu0 0.0
    %485 = vmatpush1.msra.mxu0 0.0
    %486 = vmatprep.subr.mxu0 0.0
    %487 = vmatpush1.msra.mxu0 0.0
    %488 = vmatprep.subr.mxu0 0.0
    %489 = vmatpush1.msra.mxu0 0.0
    %490 = vmatprep.subr.mxu0 0.0
    %491 = vmatpush1.msra.mxu0 0.0
    %492 = vmatprep.subr.mxu0 0.0
    %493 = vmatpush1.msra.mxu0 0.0
    %494 = vmatprep.subr.mxu0 0.0
    %495 = vmatpush1.msra.mxu0 0.0
    %496 = vmatprep.subr.mxu0 0.0
    %497 = vmatpush1.msra.mxu0 0.0
    %498 = vmatprep.subr.mxu0 0.0
    %499 = vmatpush1.msra.mxu0 0.0
    %500 = vmatprep.subr.mxu0 0.0
    %501 = vmatpush1.msra.mxu0 0.0
    %502 = vmatprep.subr.mxu0 0.0
    %503 = vmatpush1.msra.mxu0 0.0
    %504 = vmatprep.subr.mxu0 0.0
    %505 = vmatpush1.msra.mxu0 0.0
    %506 = vmatprep.subr.mxu0 0.0
    %507 = vmatpush1.msra.mxu0 0.0
    %508 = vmatprep.subr.mxu0 0.0
    %509 = vmatpush1.msra.mxu0 0.0
    %510 = vmatprep.subr.mxu0 0.0
    %511 = vmatpush1.msra.mxu0 0.0
    %512 = vmatprep.subr.mxu0 0.0
    %513 = vmatpush1.msra.mxu0 0.0
    %514 = vmatprep.subr.mxu0 0.0
    %515 = vmatpush1.msra.mxu0 0.0
    %516 = vmatprep.subr.mxu0 0.0
    %517 = vmatpush1.msra.mxu0 0.0
    %518 = vmatprep.subr.mxu0 0.0
    %519 = vmatpush1.msra.mxu0 0.0
    %520 = vmatprep.subr.mxu0 0.0
    %521 = vmatpush1.msra.mxu0 0.0
    %522 = vmatprep.subr.mxu0 0.0
    %523 = vmatpush1.msra.mxu0 0.0
    %524 = vmatprep.subr.mxu0 0.0
    %525 = vmatpush1.msra.mxu0 0.0
    %526 = vmatprep.mubr.f32.mxu0 0.0
    %v527 = vand.u32 %v32, 4294901760
    %528 = vmatmul.mubr.f32.gmra.mrb[0].mxu0 %v527
    %v529 = vpop.f32.mrb[0].mxu0
    %v530 = vadd.f32 %v451, %v529
    %v531 = vpop.f32.mrb[0].mxu0
    %532 = vmatprep.mubr.f32.mxu0 0.0
    %v533 = vand.u32 %v35, 4294901760
    %534 = vmatmul.mubr.f32.gmra.mrb[0].mxu0 %v533
    %v535 = vpop.f32.mrb[0].mxu0
    %v536 = vadd.f32 %v457, %v535
    %v537 = vpop.f32.mrb[0].mxu0
    %538 = vdwg.mxu0
    %vm539 = vcmask 261120
    %v541 = vsel %vm539, 0.0, 0
    %543 = vmatprep.subr.mxu0 0.0
    %v544 = vand.u32 %v14, 4294901760
    %545 = vmatpush1.msra.mxu0 %v544
    %546 = vmatprep.subr.mxu0 0.0
    %v547 = vand.u32 %v15, 4294901760
    %548 = vmatpush1.msra.mxu0 %v547
    %549 = vmatprep.subr.mxu0 0.0
    %v550 = vand.u32 %v16, 4294901760
    %551 = vmatpush1.msra.mxu0 %v550
    %552 = vmatprep.subr.mxu0 0.0
    %v553 = vand.u32 %v17, 4294901760
    %554 = vmatpush1.msra.mxu0 %v553
    %555 = vmatprep.subr.mxu0 0.0
    %556 = vmatpush1.msra.mxu0 0.0
    %557 = vmatprep.subr.mxu0 0.0
    %558 = vmatpush1.msra.mxu0 0.0
    %559 = vmatprep.subr.mxu0 0.0
    %560 = vmatpush1.msra.mxu0 0.0
    %561 = vmatprep.subr.mxu0 0.0
    %562 = vmatpush1.msra.mxu0 0.0
    %563 = vmatprep.subr.mxu0 0.0
    %564 = vmatpush1.msra.mxu0 0.0
    %565 = vmatprep.subr.mxu0 0.0
    %566 = vmatpush1.msra.mxu0 0.0
    %567 = vmatprep.subr.mxu0 0.0
    %568 = vmatpush1.msra.mxu0 0.0
    %569 = vmatprep.subr.mxu0 0.0
    %570 = vmatpush1.msra.mxu0 0.0
    %571 = vmatprep.subr.mxu0 0.0
    %572 = vmatpush1.msra.mxu0 0.0
    %573 = vmatprep.subr.mxu0 0.0
    %574 = vmatpush1.msra.mxu0 0.0
    %575 = vmatprep.subr.mxu0 0.0
    %576 = vmatpush1.msra.mxu0 0.0
    %577 = vmatprep.subr.mxu0 0.0
    %578 = vmatpush1.msra.mxu0 0.0
    %579 = vmatprep.subr.mxu0 0.0
    %580 = vmatpush1.msra.mxu0 0.0
    %581 = vmatprep.subr.mxu0 0.0
    %582 = vmatpush1.msra.mxu0 0.0
    %583 = vmatprep.subr.mxu0 0.0
    %584 = vmatpush1.msra.mxu0 0.0
    %585 = vmatprep.subr.mxu0 0.0
    %586 = vmatpush1.msra.mxu0 0.0
    %587 = vmatprep.subr.mxu0 0.0
    %588 = vmatpush1.msra.mxu0 0.0
    %589 = vmatprep.subr.mxu0 0.0
    %590 = vmatpush1.msra.mxu0 0.0
    %591 = vmatprep.subr.mxu0 0.0
    %592 = vmatpush1.msra.mxu0 0.0
    %593 = vmatprep.subr.mxu0 0.0
    %594 = vmatpush1.msra.mxu0 0.0
    %595 = vmatprep.subr.mxu0 0.0
    %596 = vmatpush1.msra.mxu0 0.0
    %597 = vmatprep.subr.mxu0 0.0
    %598 = vmatpush1.msra.mxu0 0.0
    %599 = vmatprep.subr.mxu0 0.0
    %600 = vmatpush1.msra.mxu0 0.0
    %601 = vmatprep.subr.mxu0 0.0
    %602 = vmatpush1.msra.mxu0 0.0
    %603 = vmatprep.subr.mxu0 0.0
    %604 = vmatpush1.msra.mxu0 0.0
    %605 = vmatprep.subr.mxu0 0.0
    %606 = vmatpush1.msra.mxu0 0.0
    %607 = vmatprep.subr.mxu0 0.0
    %608 = vmatpush1.msra.mxu0 0.0
    %609 = vmatprep.subr.mxu0 0.0
    %610 = vmatpush1.msra.mxu0 0.0
    %611 = vmatprep.mubr.f32.mxu0 0.0
    %v612 = vand.u32 %v541, 4294901760
    %v613 = vsub.f32 %v541, %v612
    %v614 = vand.u32 %v613, 4294901760
    %v615 = vsub.f32 %v613, %v614
    %v616 = vand.u32 %v615, 4294901760
    %617 = vmatmul.mubr.f32.gmra.mrb[0].mxu0 %v616
    %v618 = vpop.f32.mrb[0].mxu0
    %v619 = vadd.f32 0.0, %v618
    %v620 = vpop.f32.mrb[0].mxu0
    %621 = vdwg.mxu0
    %622 = vmatprep.subr.mxu0 0.0
    %v623 = vand.u32 %v14, 4294901760
    %v624 = vsub.f32 %v14, %v623
    %v625 = vand.u32 %v624, 4294901760
    %v626 = vsub.f32 %v624, %v625
    %v627 = vand.u32 %v626, 4294901760
    %628 = vmatpush1.msra.mxu0 %v627
    %629 = vmatprep.subr.mxu0 0.0
    %v630 = vand.u32 %v15, 4294901760
    %v631 = vsub.f32 %v15, %v630
    %v632 = vand.u32 %v631, 4294901760
    %v633 = vsub.f32 %v631, %v632
    %v634 = vand.u32 %v633, 4294901760
    %635 = vmatpush1.msra.mxu0 %v634
    %636 = vmatprep.subr.mxu0 0.0
    %v637 = vand.u32 %v16, 4294901760
    %v638 = vsub.f32 %v16, %v637
    %v639 = vand.u32 %v638, 4294901760
    %v640 = vsub.f32 %v638, %v639
    %v641 = vand.u32 %v640, 4294901760
    %642 = vmatpush1.msra.mxu0 %v641
    %643 = vmatprep.subr.mxu0 0.0
    %v644 = vand.u32 %v17, 4294901760
    %v645 = vsub.f32 %v17, %v644
    %v646 = vand.u32 %v645, 4294901760
    %v647 = vsub.f32 %v645, %v646
    %v648 = vand.u32 %v647, 4294901760
    %649 = vmatpush1.msra.mxu0 %v648
    %650 = vmatprep.subr.mxu0 0.0
    %651 = vmatpush1.msra.mxu0 0.0
    %652 = vmatprep.subr.mxu0 0.0
    %653 = vmatpush1.msra.mxu0 0.0
    %654 = vmatprep.subr.mxu0 0.0
    %655 = vmatpush1.msra.mxu0 0.0
    %656 = vmatprep.subr.mxu0 0.0
    %657 = vmatpush1.msra.mxu0 0.0
    %658 = vmatprep.subr.mxu0 0.0
    %659 = vmatpush1.msra.mxu0 0.0
    %660 = vmatprep.subr.mxu0 0.0
    %661 = vmatpush1.msra.mxu0 0.0
    %662 = vmatprep.subr.mxu0 0.0
    %663 = vmatpush1.msra.mxu0 0.0
    %664 = vmatprep.subr.mxu0 0.0
    %665 = vmatpush1.msra.mxu0 0.0
    %666 = vmatprep.subr.mxu0 0.0
    %667 = vmatpush1.msra.mxu0 0.0
    %668 = vmatprep.subr.mxu0 0.0
    %669 = vmatpush1.msra.mxu0 0.0
    %670 = vmatprep.subr.mxu0 0.0
    %671 = vmatpush1.msra.mxu0 0.0
    %672 = vmatprep.subr.mxu0 0.0
    %673 = vmatpush1.msra.mxu0 0.0
    %674 = vmatprep.subr.mxu0 0.0
    %675 = vmatpush1.msra.mxu0 0.0
    %676 = vmatprep.subr.mxu0 0.0
    %677 = vmatpush1.msra.mxu0 0.0
    %678 = vmatprep.subr.mxu0 0.0
    %679 = vmatpush1.msra.mxu0 0.0
    %680 = vmatprep.subr.mxu0 0.0
    %681 = vmatpush1.msra.mxu0 0.0
    %682 = vmatprep.subr.mxu0 0.0
    %683 = vmatpush1.msra.mxu0 0.0
    %684 = vmatprep.subr.mxu0 0.0
    %685 = vmatpush1.msra.mxu0 0.0
    %686 = vmatprep.subr.mxu0 0.0
    %687 = vmatpush1.msra.mxu0 0.0
    %688 = vmatprep.subr.mxu0 0.0
    %689 = vmatpush1.msra.mxu0 0.0
    %690 = vmatprep.subr.mxu0 0.0
    %691 = vmatpush1.msra.mxu0 0.0
    %692 = vmatprep.subr.mxu0 0.0
    %693 = vmatpush1.msra.mxu0 0.0
    %694 = vmatprep.subr.mxu0 0.0
    %695 = vmatpush1.msra.mxu0 0.0
    %696 = vmatprep.subr.mxu0 0.0
    %697 = vmatpush1.msra.mxu0 0.0
    %698 = vmatprep.subr.mxu0 0.0
    %699 = vmatpush1.msra.mxu0 0.0
    %700 = vmatprep.subr.mxu0 0.0
    %701 = vmatpush1.msra.mxu0 0.0
    %702 = vmatprep.subr.mxu0 0.0
    %703 = vmatpush1.msra.mxu0 0.0
    %704 = vmatprep.subr.mxu0 0.0
    %705 = vmatpush1.msra.mxu0 0.0
    %706 = vmatprep.mubr.f32.mxu0 0.0
    %v707 = vand.u32 %v541, 4294901760
    %708 = vmatmul.mubr.f32.gmra.mrb[0].mxu0 %v707
    %v709 = vpop.f32.mrb[0].mxu0
    %v710 = vadd.f32 %v619, %v709
    %v711 = vpop.f32.mrb[0].mxu0
    %712 = vdwg.mxu0
    %713 = vmatprep.subr.mxu0 0.0
    %v714 = vand.u32 %v14, 4294901760
    %v715 = vsub.f32 %v14, %v714
    %716 = vmatpush1.msra.mxu0 %v715
    %717 = vmatprep.subr.mxu0 0.0
    %v718 = vand.u32 %v15, 4294901760
    %v719 = vsub.f32 %v15, %v718
    %720 = vmatpush1.msra.mxu0 %v719
    %721 = vmatprep.subr.mxu0 0.0
    %v722 = vand.u32 %v16, 4294901760
    %v723 = vsub.f32 %v16, %v722
    %724 = vmatpush1.msra.mxu0 %v723
    %725 = vmatprep.subr.mxu0 0.0
    %v726 = vand.u32 %v17, 4294901760
    %v727 = vsub.f32 %v17, %v726
    %728 = vmatpush1.msra.mxu0 %v727
    %729 = vmatprep.subr.mxu0 0.0
    %730 = vmatpush1.msra.mxu0 0.0
    %731 = vmatprep.subr.mxu0 0.0
    %732 = vmatpush1.msra.mxu0 0.0
    %733 = vmatprep.subr.mxu0 0.0
    %734 = vmatpush1.msra.mxu0 0.0
    %735 = vmatprep.subr.mxu0 0.0
    %736 = vmatpush1.msra.mxu0 0.0
    %737 = vmatprep.subr.mxu0 0.0
    %738 = vmatpush1.msra.mxu0 0.0
    %739 = vmatprep.subr.mxu0 0.0
    %740 = vmatpush1.msra.mxu0 0.0
    %741 = vmatprep.subr.mxu0 0.0
    %742 = vmatpush1.msra.mxu0 0.0
    %743 = vmatprep.subr.mxu0 0.0
    %744 = vmatpush1.msra.mxu0 0.0
    %745 = vmatprep.subr.mxu0 0.0
    %746 = vmatpush1.msra.mxu0 0.0
    %747 = vmatprep.subr.mxu0 0.0
    %748 = vmatpush1.msra.mxu0 0.0
    %749 = vmatprep.subr.mxu0 0.0
    %750 = vmatpush1.msra.mxu0 0.0
    %751 = vmatprep.subr.mxu0 0.0
    %752 = vmatpush1.msra.mxu0 0.0
    %753 = vmatprep.subr.mxu0 0.0
    %754 = vmatpush1.msra.mxu0 0.0
    %755 = vmatprep.subr.mxu0 0.0
    %756 = vmatpush1.msra.mxu0 0.0
    %757 = vmatprep.subr.mxu0 0.0
    %758 = vmatpush1.msra.mxu0 0.0
    %759 = vmatprep.subr.mxu0 0.0
    %760 = vmatpush1.msra.mxu0 0.0
    %761 = vmatprep.subr.mxu0 0.0
    %762 = vmatpush1.msra.mxu0 0.0
    %763 = vmatprep.subr.mxu0 0.0
    %764 = vmatpush1.msra.mxu0 0.0
    %765 = vmatprep.subr.mxu0 0.0
    %766 = vmatpush1.msra.mxu0 0.0
    %767 = vmatprep.subr.mxu0 0.0
    %768 = vmatpush1.msra.mxu0 0.0
    %769 = vmatprep.subr.mxu0 0.0
    %770 = vmatpush1.msra.mxu0 0.0
    %771 = vmatprep.subr.mxu0 0.0
    %772 = vmatpush1.msra.mxu0 0.0
    %773 = vmatprep.subr.mxu0 0.0
    %774 = vmatpush1.msra.mxu0 0.0
    %775 = vmatprep.subr.mxu0 0.0
    %776 = vmatpush1.msra.mxu0 0.0
    %777 = vmatprep.subr.mxu0 0.0
    %778 = vmatpush1.msra.mxu0 0.0
    %779 = vmatprep.subr.mxu0 0.0
    %780 = vmatpush1.msra.mxu0 0.0
    %781 = vmatprep.subr.mxu0 0.0
    %782 = vmatpush1.msra.mxu0 0.0
    %783 = vmatprep.subr.mxu0 0.0
    %784 = vmatpush1.msra.mxu0 0.0
    %785 = vmatprep.mubr.f32.mxu0 0.0
    %v786 = vand.u32 %v541, 4294901760
    %v787 = vsub.f32 %v541, %v786
    %788 = vmatmul.mubr.f32.gmra.mrb[0].mxu0 %v787
    %v789 = vpop.f32.mrb[0].mxu0
    %v790 = vadd.f32 %v710, %v789
    %v791 = vpop.f32.mrb[0].mxu0
    %792 = vdwg.mxu0
    %793 = vmatprep.subr.mxu0 0.0
    %v794 = vand.u32 %v14, 4294901760
    %795 = vmatpush1.msra.mxu0 %v794
    %796 = vmatprep.subr.mxu0 0.0
    %v797 = vand.u32 %v15, 4294901760
    %798 = vmatpush1.msra.mxu0 %v797
    %799 = vmatprep.subr.mxu0 0.0
    %v800 = vand.u32 %v16, 4294901760
    %801 = vmatpush1.msra.mxu0 %v800
    %802 = vmatprep.subr.mxu0 0.0
    %v803 = vand.u32 %v17, 4294901760
    %804 = vmatpush1.msra.mxu0 %v803
    %805 = vmatprep.subr.mxu0 0.0
    %806 = vmatpush1.msra.mxu0 0.0
    %807 = vmatprep.subr.mxu0 0.0
    %808 = vmatpush1.msra.mxu0 0.0
    %809 = vmatprep.subr.mxu0 0.0
    %810 = vmatpush1.msra.mxu0 0.0
    %811 = vmatprep.subr.mxu0 0.0
    %812 = vmatpush1.msra.mxu0 0.0
    %813 = vmatprep.subr.mxu0 0.0
    %814 = vmatpush1.msra.mxu0 0.0
    %815 = vmatprep.subr.mxu0 0.0
    %816 = vmatpush1.msra.mxu0 0.0
    %817 = vmatprep.subr.mxu0 0.0
    %818 = vmatpush1.msra.mxu0 0.0
    %819 = vmatprep.subr.mxu0 0.0
    %820 = vmatpush1.msra.mxu0 0.0
    %821 = vmatprep.subr.mxu0 0.0
    %822 = vmatpush1.msra.mxu0 0.0
    %823 = vmatprep.subr.mxu0 0.0
    %824 = vmatpush1.msra.mxu0 0.0
    %825 = vmatprep.subr.mxu0 0.0
    %826 = vmatpush1.msra.mxu0 0.0
    %827 = vmatprep.subr.mxu0 0.0
    %828 = vmatpush1.msra.mxu0 0.0
    %829 = vmatprep.subr.mxu0 0.0
    %830 = vmatpush1.msra.mxu0 0.0
    %831 = vmatprep.subr.mxu0 0.0
    %832 = vmatpush1.msra.mxu0 0.0
    %833 = vmatprep.subr.mxu0 0.0
    %834 = vmatpush1.msra.mxu0 0.0
    %835 = vmatprep.subr.mxu0 0.0
    %836 = vmatpush1.msra.mxu0 0.0
    %837 = vmatprep.subr.mxu0 0.0
    %838 = vmatpush1.msra.mxu0 0.0
    %839 = vmatprep.subr.mxu0 0.0
    %840 = vmatpush1.msra.mxu0 0.0
    %841 = vmatprep.subr.mxu0 0.0
    %842 = vmatpush1.msra.mxu0 0.0
    %843 = vmatprep.subr.mxu0 0.0
    %844 = vmatpush1.msra.mxu0 0.0
    %845 = vmatprep.subr.mxu0 0.0
    %846 = vmatpush1.msra.mxu0 0.0
    %847 = vmatprep.subr.mxu0 0.0
    %848 = vmatpush1.msra.mxu0 0.0
    %849 = vmatprep.subr.mxu0 0.0
    %850 = vmatpush1.msra.mxu0 0.0
    %851 = vmatprep.subr.mxu0 0.0
    %852 = vmatpush1.msra.mxu0 0.0
    %853 = vmatprep.subr.mxu0 0.0
    %854 = vmatpush1.msra.mxu0 0.0
    %855 = vmatprep.subr.mxu0 0.0
    %856 = vmatpush1.msra.mxu0 0.0
    %857 = vmatprep.subr.mxu0 0.0
    %858 = vmatpush1.msra.mxu0 0.0
    %859 = vmatprep.subr.mxu0 0.0
    %860 = vmatpush1.msra.mxu0 0.0
    %861 = vmatprep.mubr.f32.mxu0 0.0
    %v862 = vand.u32 %v541, 4294901760
    %v863 = vsub.f32 %v541, %v862
    %v864 = vand.u32 %v863, 4294901760
    %865 = vmatmul.mubr.f32.gmra.mrb[0].mxu0 %v864
    %v866 = vpop.f32.mrb[0].mxu0
    %v867 = vadd.f32 %v790, %v866
    %v868 = vpop.f32.mrb[0].mxu0
    %869 = vdwg.mxu0
    %870 = vmatprep.subr.mxu0 0.0
    %v871 = vand.u32 %v14, 4294901760
    %v872 = vsub.f32 %v14, %v871
    %v873 = vand.u32 %v872, 4294901760
    %874 = vmatpush1.msra.mxu0 %v873
    %875 = vmatprep.subr.mxu0 0.0
    %v876 = vand.u32 %v15, 4294901760
    %v877 = vsub.f32 %v15, %v876
    %v878 = vand.u32 %v877, 4294901760
    %879 = vmatpush1.msra.mxu0 %v878
    %880 = vmatprep.subr.mxu0 0.0
    %v881 = vand.u32 %v16, 4294901760
    %v882 = vsub.f32 %v16, %v881
    %v883 = vand.u32 %v882, 4294901760
    %884 = vmatpush1.msra.mxu0 %v883
    %885 = vmatprep.subr.mxu0 0.0
    %v886 = vand.u32 %v17, 4294901760
    %v887 = vsub.f32 %v17, %v886
    %v888 = vand.u32 %v887, 4294901760
    %889 = vmatpush1.msra.mxu0 %v888
    %890 = vmatprep.subr.mxu0 0.0
    %891 = vmatpush1.msra.mxu0 0.0
    %892 = vmatprep.subr.mxu0 0.0
    %893 = vmatpush1.msra.mxu0 0.0
    %894 = vmatprep.subr.mxu0 0.0
    %895 = vmatpush1.msra.mxu0 0.0
    %896 = vmatprep.subr.mxu0 0.0
    %897 = vmatpush1.msra.mxu0 0.0
    %898 = vmatprep.subr.mxu0 0.0
    %899 = vmatpush1.msra.mxu0 0.0
    %900 = vmatprep.subr.mxu0 0.0
    %901 = vmatpush1.msra.mxu0 0.0
    %902 = vmatprep.subr.mxu0 0.0
    %903 = vmatpush1.msra.mxu0 0.0
    %904 = vmatprep.subr.mxu0 0.0
    %905 = vmatpush1.msra.mxu0 0.0
    %906 = vmatprep.subr.mxu0 0.0
    %907 = vmatpush1.msra.mxu0 0.0
    %908 = vmatprep.subr.mxu0 0.0
    %909 = vmatpush1.msra.mxu0 0.0
    %910 = vmatprep.subr.mxu0 0.0
    %911 = vmatpush1.msra.mxu0 0.0
    %912 = vmatprep.subr.mxu0 0.0
    %913 = vmatpush1.msra.mxu0 0.0
    %914 = vmatprep.subr.mxu0 0.0
    %915 = vmatpush1.msra.mxu0 0.0
    %916 = vmatprep.subr.mxu0 0.0
    %917 = vmatpush1.msra.mxu0 0.0
    %918 = vmatprep.subr.mxu0 0.0
    %919 = vmatpush1.msra.mxu0 0.0
    %920 = vmatprep.subr.mxu0 0.0
    %921 = vmatpush1.msra.mxu0 0.0
    %922 = vmatprep.subr.mxu0 0.0
    %923 = vmatpush1.msra.mxu0 0.0
    %924 = vmatprep.subr.mxu0 0.0
    %925 = vmatpush1.msra.mxu0 0.0
    %926 = vmatprep.subr.mxu0 0.0
    %927 = vmatpush1.msra.mxu0 0.0
    %928 = vmatprep.subr.mxu0 0.0
    %929 = vmatpush1.msra.mxu0 0.0
    %930 = vmatprep.subr.mxu0 0.0
    %931 = vmatpush1.msra.mxu0 0.0
    %932 = vmatprep.subr.mxu0 0.0
    %933 = vmatpush1.msra.mxu0 0.0
    %934 = vmatprep.subr.mxu0 0.0
    %935 = vmatpush1.msra.mxu0 0.0
    %936 = vmatprep.subr.mxu0 0.0
    %937 = vmatpush1.msra.mxu0 0.0
    %938 = vmatprep.subr.mxu0 0.0
    %939 = vmatpush1.msra.mxu0 0.0
    %940 = vmatprep.subr.mxu0 0.0
    %941 = vmatpush1.msra.mxu0 0.0
    %942 = vmatprep.subr.mxu0 0.0
    %943 = vmatpush1.msra.mxu0 0.0
    %944 = vmatprep.subr.mxu0 0.0
    %945 = vmatpush1.msra.mxu0 0.0
    %946 = vmatprep.mubr.f32.mxu0 0.0
    %v947 = vand.u32 %v541, 4294901760
    %948 = vmatmul.mubr.f32.gmra.mrb[0].mxu0 %v947
    %v949 = vpop.f32.mrb[0].mxu0
    %v950 = vadd.f32 %v867, %v949
    %v951 = vpop.f32.mrb[0].mxu0
    %952 = vdwg.mxu0
    %953 = vmatprep.subr.mxu0 0.0
    %v954 = vand.u32 %v14, 4294901760
    %955 = vmatpush1.msra.mxu0 %v954
    %956 = vmatprep.subr.mxu0 0.0
    %v957 = vand.u32 %v15, 4294901760
    %958 = vmatpush1.msra.mxu0 %v957
    %959 = vmatprep.subr.mxu0 0.0
    %v960 = vand.u32 %v16, 4294901760
    %961 = vmatpush1.msra.mxu0 %v960
    %962 = vmatprep.subr.mxu0 0.0
    %v963 = vand.u32 %v17, 4294901760
    %964 = vmatpush1.msra.mxu0 %v963
    %965 = vmatprep.subr.mxu0 0.0
    %966 = vmatpush1.msra.mxu0 0.0
    %967 = vmatprep.subr.mxu0 0.0
    %968 = vmatpush1.msra.mxu0 0.0
    %969 = vmatprep.subr.mxu0 0.0
    %970 = vmatpush1.msra.mxu0 0.0
    %971 = vmatprep.subr.mxu0 0.0
    %972 = vmatpush1.msra.mxu0 0.0
    %973 = vmatprep.subr.mxu0 0.0
    %974 = vmatpush1.msra.mxu0 0.0
    %975 = vmatprep.subr.mxu0 0.0
    %976 = vmatpush1.msra.mxu0 0.0
    %977 = vmatprep.subr.mxu0 0.0
    %978 = vmatpush1.msra.mxu0 0.0
    %979 = vmatprep.subr.mxu0 0.0
    %980 = vmatpush1.msra.mxu0 0.0
    %981 = vmatprep.subr.mxu0 0.0
    %982 = vmatpush1.msra.mxu0 0.0
    %983 = vmatprep.subr.mxu0 0.0
    %984 = vmatpush1.msra.mxu0 0.0
    %985 = vmatprep.subr.mxu0 0.0
    %986 = vmatpush1.msra.mxu0 0.0
    %987 = vmatprep.subr.mxu0 0.0
    %988 = vmatpush1.msra.mxu0 0.0
    %989 = vmatprep.subr.mxu0 0.0
    %990 = vmatpush1.msra.mxu0 0.0
    %991 = vmatprep.subr.mxu0 0.0
    %992 = vmatpush1.msra.mxu0 0.0
    %993 = vmatprep.subr.mxu0 0.0
    %994 = vmatpush1.msra.mxu0 0.0
    %995 = vmatprep.subr.mxu0 0.0
    %996 = vmatpush1.msra.mxu0 0.0
    %997 = vmatprep.subr.mxu0 0.0
    %998 = vmatpush1.msra.mxu0 0.0
    %999 = vmatprep.subr.mxu0 0.0
    %1000 = vmatpush1.msra.mxu0 0.0
    %1001 = vmatprep.subr.mxu0 0.0
    %1002 = vmatpush1.msra.mxu0 0.0
    %1003 = vmatprep.subr.mxu0 0.0
    %1004 = vmatpush1.msra.mxu0 0.0
    %1005 = vmatprep.subr.mxu0 0.0
    %1006 = vmatpush1.msra.mxu0 0.0
    %1007 = vmatprep.subr.mxu0 0.0
    %1008 = vmatpush1.msra.mxu0 0.0
    %1009 = vmatprep.subr.mxu0 0.0
    %1010 = vmatpush1.msra.mxu0 0.0
    %1011 = vmatprep.subr.mxu0 0.0
    %1012 = vmatpush1.msra.mxu0 0.0
    %1013 = vmatprep.subr.mxu0 0.0
    %1014 = vmatpush1.msra.mxu0 0.0
    %1015 = vmatprep.subr.mxu0 0.0
    %1016 = vmatpush1.msra.mxu0 0.0
    %1017 = vmatprep.subr.mxu0 0.0
    %1018 = vmatpush1.msra.mxu0 0.0
    %1019 = vmatprep.subr.mxu0 0.0
    %1020 = vmatpush1.msra.mxu0 0.0
    %1021 = vmatprep.mubr.f32.mxu0 0.0
    %v1022 = vand.u32 %v541, 4294901760
    %1023 = vmatmul.mubr.f32.gmra.mrb[0].mxu0 %v1022
    %v1024 = vpop.f32.mrb[0].mxu0
    %v1025 = vadd.f32 %v950, %v1024
    %v1026 = vpop.f32.mrb[0].mxu0
    %1027 = vdwg.mxu0
    %v1028 = vadd.f32 %v530, %v1025
    %v1029 = vtanh.pop %v1028
    %v1031 = vsel %vm539, %v1029, 0
    %1033 = vmatprep.subr.mxu0 0.0
    %v1034 = vand.u32 %v14, 4294901760
    %1035 = vmatpush1.msra.mxu0 %v1034
    %1036 = vmatprep.subr.mxu0 0.0
    %v1037 = vand.u32 %v15, 4294901760
    %1038 = vmatpush1.msra.mxu0 %v1037
    %1039 = vmatprep.subr.mxu0 0.0
    %v1040 = vand.u32 %v16, 4294901760
    %1041 = vmatpush1.msra.mxu0 %v1040
    %1042 = vmatprep.subr.mxu0 0.0
    %v1043 = vand.u32 %v17, 4294901760
    %1044 = vmatpush1.msra.mxu0 %v1043
    %1045 = vmatprep.subr.mxu0 0.0
    %1046 = vmatpush1.msra.mxu0 0.0
    %1047 = vmatprep.subr.mxu0 0.0
    %1048 = vmatpush1.msra.mxu0 0.0
    %1049 = vmatprep.subr.mxu0 0.0
    %1050 = vmatpush1.msra.mxu0 0.0
    %1051 = vmatprep.subr.mxu0 0.0
    %1052 = vmatpush1.msra.mxu0 0.0
    %1053 = vmatprep.subr.mxu0 0.0
    %1054 = vmatpush1.msra.mxu0 0.0
    %1055 = vmatprep.subr.mxu0 0.0
    %1056 = vmatpush1.msra.mxu0 0.0
    %1057 = vmatprep.subr.mxu0 0.0
    %1058 = vmatpush1.msra.mxu0 0.0
    %1059 = vmatprep.subr.mxu0 0.0
    %1060 = vmatpush1.msra.mxu0 0.0
    %1061 = vmatprep.subr.mxu0 0.0
    %1062 = vmatpush1.msra.mxu0 0.0
    %1063 = vmatprep.subr.mxu0 0.0
    %1064 = vmatpush1.msra.mxu0 0.0
    %1065 = vmatprep.subr.mxu0 0.0
    %1066 = vmatpush1.msra.mxu0 0.0
    %1067 = vmatprep.subr.mxu0 0.0
    %1068 = vmatpush1.msra.mxu0 0.0
    %1069 = vmatprep.subr.mxu0 0.0
    %1070 = vmatpush1.msra.mxu0 0.0
    %1071 = vmatprep.subr.mxu0 0.0
    %1072 = vmatpush1.msra.mxu0 0.0
    %1073 = vmatprep.subr.mxu0 0.0
    %1074 = vmatpush1.msra.mxu0 0.0
    %1075 = vmatprep.subr.mxu0 0.0
    %1076 = vmatpush1.msra.mxu0 0.0
    %1077 = vmatprep.subr.mxu0 0.0
    %1078 = vmatpush1.msra.mxu0 0.0
    %1079 = vmatprep.subr.mxu0 0.0
    %1080 = vmatpush1.msra.mxu0 0.0
    %1081 = vmatprep.subr.mxu0 0.0
    %1082 = vmatpush1.msra.mxu0 0.0
    %1083 = vmatprep.subr.mxu0 0.0
    %1084 = vmatpush1.msra.mxu0 0.0
    %1085 = vmatprep.subr.mxu0 0.0
    %1086 = vmatpush1.msra.mxu0 0.0
    %1087 = vmatprep.subr.mxu0 0.0
    %1088 = vmatpush1.msra.mxu0 0.0
    %1089 = vmatprep.subr.mxu0 0.0
    %1090 = vmatpush1.msra.mxu0 0.0
    %1091 = vmatprep.subr.mxu0 0.0
    %1092 = vmatpush1.msra.mxu0 0.0
    %1093 = vmatprep.subr.mxu0 0.0
    %1094 = vmatpush1.msra.mxu0 0.0
    %1095 = vmatprep.subr.mxu0 0.0
    %1096 = vmatpush1.msra.mxu0 0.0
    %1097 = vmatprep.subr.mxu0 0.0
    %1098 = vmatpush1.msra.mxu0 0.0
    %1099 = vmatprep.subr.mxu0 0.0
    %1100 = vmatpush1.msra.mxu0 0.0
    %1101 = vmatprep.mubr.f32.mxu0 0.0
    %v1102 = vand.u32 %v1031, 4294901760
    %v1103 = vsub.f32 %v1031, %v1102
    %v1104 = vand.u32 %v1103, 4294901760
    %v1105 = vsub.f32 %v1103, %v1104
    %v1106 = vand.u32 %v1105, 4294901760
    %1107 = vmatmul.mubr.f32.gmra.mrb[0].mxu0 %v1106
    %v1108 = vpop.f32.mrb[0].mxu0
    %v1109 = vadd.f32 0.0, %v1108
    %v1110 = vpop.f32.mrb[0].mxu0
    %1111 = vdwg.mxu0
    %1112 = vmatprep.subr.mxu0 0.0
    %v1113 = vand.u32 %v14, 4294901760
    %v1114 = vsub.f32 %v14, %v1113
    %v1115 = vand.u32 %v1114, 4294901760
    %v1116 = vsub.f32 %v1114, %v1115
    %v1117 = vand.u32 %v1116, 4294901760
    %1118 = vmatpush1.msra.mxu0 %v1117
    %1119 = vmatprep.subr.mxu0 0.0
    %v1120 = vand.u32 %v15, 4294901760
    %v1121 = vsub.f32 %v15, %v1120
    %v1122 = vand.u32 %v1121, 4294901760
    %v1123 = vsub.f32 %v1121, %v1122
    %v1124 = vand.u32 %v1123, 4294901760
    %1125 = vmatpush1.msra.mxu0 %v1124
    %1126 = vmatprep.subr.mxu0 0.0
    %v1127 = vand.u32 %v16, 4294901760
    %v1128 = vsub.f32 %v16, %v1127
    %v1129 = vand.u32 %v1128, 4294901760
    %v1130 = vsub.f32 %v1128, %v1129
    %v1131 = vand.u32 %v1130, 4294901760
    %1132 = vmatpush1.msra.mxu0 %v1131
    %1133 = vmatprep.subr.mxu0 0.0
    %v1134 = vand.u32 %v17, 4294901760
    %v1135 = vsub.f32 %v17, %v1134
    %v1136 = vand.u32 %v1135, 4294901760
    %v1137 = vsub.f32 %v1135, %v1136
    %v1138 = vand.u32 %v1137, 4294901760
    %1139 = vmatpush1.msra.mxu0 %v1138
    %1140 = vmatprep.subr.mxu0 0.0
    %1141 = vmatpush1.msra.mxu0 0.0
    %1142 = vmatprep.subr.mxu0 0.0
    %1143 = vmatpush1.msra.mxu0 0.0
    %1144 = vmatprep.subr.mxu0 0.0
    %1145 = vmatpush1.msra.mxu0 0.0
    %1146 = vmatprep.subr.mxu0 0.0
    %1147 = vmatpush1.msra.mxu0 0.0
    %1148 = vmatprep.subr.mxu0 0.0
    %1149 = vmatpush1.msra.mxu0 0.0
    %1150 = vmatprep.subr.mxu0 0.0
    %1151 = vmatpush1.msra.mxu0 0.0
    %1152 = vmatprep.subr.mxu0 0.0
    %1153 = vmatpush1.msra.mxu0 0.0
    %1154 = vmatprep.subr.mxu0 0.0
    %1155 = vmatpush1.msra.mxu0 0.0
    %1156 = vmatprep.subr.mxu0 0.0
    %1157 = vmatpush1.msra.mxu0 0.0
    %1158 = vmatprep.subr.mxu0 0.0
    %1159 = vmatpush1.msra.mxu0 0.0
    %1160 = vmatprep.subr.mxu0 0.0
    %1161 = vmatpush1.msra.mxu0 0.0
    %1162 = vmatprep.subr.mxu0 0.0
    %1163 = vmatpush1.msra.mxu0 0.0
    %1164 = vmatprep.subr.mxu0 0.0
    %1165 = vmatpush1.msra.mxu0 0.0
    %1166 = vmatprep.subr.mxu0 0.0
    %1167 = vmatpush1.msra.mxu0 0.0
    %1168 = vmatprep.subr.mxu0 0.0
    %1169 = vmatpush1.msra.mxu0 0.0
    %1170 = vmatprep.subr.mxu0 0.0
    %1171 = vmatpush1.msra.mxu0 0.0
    %1172 = vmatprep.subr.mxu0 0.0
    %1173 = vmatpush1.msra.mxu0 0.0
    %1174 = vmatprep.subr.mxu0 0.0
    %1175 = vmatpush1.msra.mxu0 0.0
    %1176 = vmatprep.subr.mxu0 0.0
    %1177 = vmatpush1.msra.mxu0 0.0
    %1178 = vmatprep.subr.mxu0 0.0
    %1179 = vmatpush1.msra.mxu0 0.0
    %1180 = vmatprep.subr.mxu0 0.0
    %1181 = vmatpush1.msra.mxu0 0.0
    %1182 = vmatprep.subr.mxu0 0.0
    %1183 = vmatpush1.msra.mxu0 0.0
    %1184 = vmatprep.subr.mxu0 0.0
    %1185 = vmatpush1.msra.mxu0 0.0
    %1186 = vmatprep.subr.mxu0 0.0
    %1187 = vmatpush1.msra.mxu0 0.0
    %1188 = vmatprep.subr.mxu0 0.0
    %1189 = vmatpush1.msra.mxu0 0.0
    %1190 = vmatprep.subr.mxu0 0.0
    %1191 = vmatpush1.msra.mxu0 0.0
    %1192 = vmatprep.subr.mxu0 0.0
    %1193 = vmatpush1.msra.mxu0 0.0
    %1194 = vmatprep.subr.mxu0 0.0
    %1195 = vmatpush1.msra.mxu0 0.0
    %1196 = vmatprep.mubr.f32.mxu0 0.0
    %v1197 = vand.u32 %v1031, 4294901760
    %1198 = vmatmul.mubr.f32.gmra.mrb[0].mxu0 %v1197
    %v1199 = vpop.f32.mrb[0].mxu0
    %v1200 = vadd.f32 %v1109, %v1199
    %v1201 = vpop.f32.mrb[0].mxu0
    %1202 = vdwg.mxu0
    %1203 = vmatprep.subr.mxu0 0.0
    %v1204 = vand.u32 %v14, 4294901760
    %v1205 = vsub.f32 %v14, %v1204
    %1206 = vmatpush1.msra.mxu0 %v1205
    %1207 = vmatprep.subr.mxu0 0.0
    %v1208 = vand.u32 %v15, 4294901760
    %v1209 = vsub.f32 %v15, %v1208
    %1210 = vmatpush1.msra.mxu0 %v1209
    %1211 = vmatprep.subr.mxu0 0.0
    %v1212 = vand.u32 %v16, 4294901760
    %v1213 = vsub.f32 %v16, %v1212
    %1214 = vmatpush1.msra.mxu0 %v1213
    %1215 = vmatprep.subr.mxu0 0.0
    %v1216 = vand.u32 %v17, 4294901760
    %v1217 = vsub.f32 %v17, %v1216
    %1218 = vmatpush1.msra.mxu0 %v1217
    %1219 = vmatprep.subr.mxu0 0.0
    %1220 = vmatpush1.msra.mxu0 0.0
    %1221 = vmatprep.subr.mxu0 0.0
    %1222 = vmatpush1.msra.mxu0 0.0
    %1223 = vmatprep.subr.mxu0 0.0
    %1224 = vmatpush1.msra.mxu0 0.0
    %1225 = vmatprep.subr.mxu0 0.0
    %1226 = vmatpush1.msra.mxu0 0.0
    %1227 = vmatprep.subr.mxu0 0.0
    %1228 = vmatpush1.msra.mxu0 0.0
    %1229 = vmatprep.subr.mxu0 0.0
    %1230 = vmatpush1.msra.mxu0 0.0
    %1231 = vmatprep.subr.mxu0 0.0
    %1232 = vmatpush1.msra.mxu0 0.0
    %1233 = vmatprep.subr.mxu0 0.0
    %1234 = vmatpush1.msra.mxu0 0.0
    %1235 = vmatprep.subr.mxu0 0.0
    %1236 = vmatpush1.msra.mxu0 0.0
    %1237 = vmatprep.subr.mxu0 0.0
    %1238 = vmatpush1.msra.mxu0 0.0
    %1239 = vmatprep.subr.mxu0 0.0
    %1240 = vmatpush1.msra.mxu0 0.0
    %1241 = vmatprep.subr.mxu0 0.0
    %1242 = vmatpush1.msra.mxu0 0.0
    %1243 = vmatprep.subr.mxu0 0.0
    %1244 = vmatpush1.msra.mxu0 0.0
    %1245 = vmatprep.subr.mxu0 0.0
    %1246 = vmatpush1.msra.mxu0 0.0
    %1247 = vmatprep.subr.mxu0 0.0
    %1248 = vmatpush1.msra.mxu0 0.0
    %1249 = vmatprep.subr.mxu0 0.0
    %1250 = vmatpush1.msra.mxu0 0.0
    %1251 = vmatprep.subr.mxu0 0.0
    %1252 = vmatpush1.msra.mxu0 0.0
    %1253 = vmatprep.subr.mxu0 0.0
    %1254 = vmatpush1.msra.mxu0 0.0
    %1255 = vmatprep.subr.mxu0 0.0
    %1256 = vmatpush1.msra.mxu0 0.0
    %1257 = vmatprep.subr.mxu0 0.0
    %1258 = vmatpush1.msra.mxu0 0.0
    %1259 = vmatprep.subr.mxu0 0.0
    %1260 = vmatpush1.msra.mxu0 0.0
    %1261 = vmatprep.subr.mxu0 0.0
    %1262 = vmatpush1.msra.mxu0 0.0
    %1263 = vmatprep.subr.mxu0 0.0
    %1264 = vmatpush1.msra.mxu0 0.0
    %1265 = vmatprep.subr.mxu0 0.0
    %1266 = vmatpush1.msra.mxu0 0.0
    %1267 = vmatprep.subr.mxu0 0.0
    %1268 = vmatpush1.msra.mxu0 0.0
    %1269 = vmatprep.subr.mxu0 0.0
    %1270 = vmatpush1.msra.mxu0 0.0
    %1271 = vmatprep.subr.mxu0 0.0
    %1272 = vmatpush1.msra.mxu0 0.0
    %1273 = vmatprep.subr.mxu0 0.0
    %1274 = vmatpush1.msra.mxu0 0.0
    %1275 = vmatprep.mubr.f32.mxu0 0.0
    %v1276 = vand.u32 %v1031, 4294901760
    %v1277 = vsub.f32 %v1031, %v1276
    %1278 = vmatmul.mubr.f32.gmra.mrb[0].mxu0 %v1277
    %v1279 = vpop.f32.mrb[0].mxu0
    %v1280 = vadd.f32 %v1200, %v1279
    %v1281 = vpop.f32.mrb[0].mxu0
    %1282 = vdwg.mxu0
    %1283 = vmatprep.subr.mxu0 0.0
    %v1284 = vand.u32 %v14, 4294901760
    %1285 = vmatpush1.msra.mxu0 %v1284
    %1286 = vmatprep.subr.mxu0 0.0
    %v1287 = vand.u32 %v15, 4294901760
    %1288 = vmatpush1.msra.mxu0 %v1287
    %1289 = vmatprep.subr.mxu0 0.0
    %v1290 = vand.u32 %v16, 4294901760
    %1291 = vmatpush1.msra.mxu0 %v1290
    %1292 = vmatprep.subr.mxu0 0.0
    %v1293 = vand.u32 %v17, 4294901760
    %1294 = vmatpush1.msra.mxu0 %v1293
    %1295 = vmatprep.subr.mxu0 0.0
    %1296 = vmatpush1.msra.mxu0 0.0
    %1297 = vmatprep.subr.mxu0 0.0
    %1298 = vmatpush1.msra.mxu0 0.0
    %1299 = vmatprep.subr.mxu0 0.0
    %1300 = vmatpush1.msra.mxu0 0.0
    %1301 = vmatprep.subr.mxu0 0.0
    %1302 = vmatpush1.msra.mxu0 0.0
    %1303 = vmatprep.subr.mxu0 0.0
    %1304 = vmatpush1.msra.mxu0 0.0
    %1305 = vmatprep.subr.mxu0 0.0
    %1306 = vmatpush1.msra.mxu0 0.0
    %1307 = vmatprep.subr.mxu0 0.0
    %1308 = vmatpush1.msra.mxu0 0.0
    %1309 = vmatprep.subr.mxu0 0.0
    %1310 = vmatpush1.msra.mxu0 0.0
    %1311 = vmatprep.subr.mxu0 0.0
    %1312 = vmatpush1.msra.mxu0 0.0
    %1313 = vmatprep.subr.mxu0 0.0
    %1314 = vmatpush1.msra.mxu0 0.0
    %1315 = vmatprep.subr.mxu0 0.0
    %1316 = vmatpush1.msra.mxu0 0.0
    %1317 = vmatprep.subr.mxu0 0.0
    %1318 = vmatpush1.msra.mxu0 0.0
    %1319 = vmatprep.subr.mxu0 0.0
    %1320 = vmatpush1.msra.mxu0 0.0
    %1321 = vmatprep.subr.mxu0 0.0
    %1322 = vmatpush1.msra.mxu0 0.0
    %1323 = vmatprep.subr.mxu0 0.0
    %1324 = vmatpush1.msra.mxu0 0.0
    %1325 = vmatprep.subr.mxu0 0.0
    %1326 = vmatpush1.msra.mxu0 0.0
    %1327 = vmatprep.subr.mxu0 0.0
    %1328 = vmatpush1.msra.mxu0 0.0
    %1329 = vmatprep.subr.mxu0 0.0
    %1330 = vmatpush1.msra.mxu0 0.0
    %1331 = vmatprep.subr.mxu0 0.0
    %1332 = vmatpush1.msra.mxu0 0.0
    %1333 = vmatprep.subr.mxu0 0.0
    %1334 = vmatpush1.msra.mxu0 0.0
    %1335 = vmatprep.subr.mxu0 0.0
    %1336 = vmatpush1.msra.mxu0 0.0
    %1337 = vmatprep.subr.mxu0 0.0
    %1338 = vmatpush1.msra.mxu0 0.0
    %1339 = vmatprep.subr.mxu0 0.0
    %1340 = vmatpush1.msra.mxu0 0.0
    %1341 = vmatprep.subr.mxu0 0.0
    %1342 = vmatpush1.msra.mxu0 0.0
    %1343 = vmatprep.subr.mxu0 0.0
    %1344 = vmatpush1.msra.mxu0 0.0
    %1345 = vmatprep.subr.mxu0 0.0
    %1346 = vmatpush1.msra.mxu0 0.0
    %1347 = vmatprep.subr.mxu0 0.0
    %1348 = vmatpush1.msra.mxu0 0.0
    %1349 = vmatprep.subr.mxu0 0.0
    %1350 = vmatpush1.msra.mxu0 0.0
    %1351 = vmatprep.mubr.f32.mxu0 0.0
    %v1352 = vand.u32 %v1031, 4294901760
    %v1353 = vsub.f32 %v1031, %v1352
    %v1354 = vand.u32 %v1353, 4294901760
    %1355 = vmatmul.mubr.f32.gmra.mrb[0].mxu0 %v1354
    %v1356 = vpop.f32.mrb[0].mxu0
    %v1357 = vadd.f32 %v1280, %v1356
    %v1358 = vpop.f32.mrb[0].mxu0
    %1359 = vdwg.mxu0
    %1360 = vmatprep.subr.mxu0 0.0
    %v1361 = vand.u32 %v14, 4294901760
    %v1362 = vsub.f32 %v14, %v1361
    %v1363 = vand.u32 %v1362, 4294901760
    %1364 = vmatpush1.msra.mxu0 %v1363
    %1365 = vmatprep.subr.mxu0 0.0
    %v1366 = vand.u32 %v15, 4294901760
    %v1367 = vsub.f32 %v15, %v1366
    %v1368 = vand.u32 %v1367, 4294901760
    %1369 = vmatpush1.msra.mxu0 %v1368
    %1370 = vmatprep.subr.mxu0 0.0
    %v1371 = vand.u32 %v16, 4294901760
    %v1372 = vsub.f32 %v16, %v1371
    %v1373 = vand.u32 %v1372, 4294901760
    %1374 = vmatpush1.msra.mxu0 %v1373
    %1375 = vmatprep.subr.mxu0 0.0
    %v1376 = vand.u32 %v17, 4294901760
    %v1377 = vsub.f32 %v17, %v1376
    %v1378 = vand.u32 %v1377, 4294901760
    %1379 = vmatpush1.msra.mxu0 %v1378
    %1380 = vmatprep.subr.mxu0 0.0
    %1381 = vmatpush1.msra.mxu0 0.0
    %1382 = vmatprep.subr.mxu0 0.0
    %1383 = vmatpush1.msra.mxu0 0.0
    %1384 = vmatprep.subr.mxu0 0.0
    %1385 = vmatpush1.msra.mxu0 0.0
    %1386 = vmatprep.subr.mxu0 0.0
    %1387 = vmatpush1.msra.mxu0 0.0
    %1388 = vmatprep.subr.mxu0 0.0
    %1389 = vmatpush1.msra.mxu0 0.0
    %1390 = vmatprep.subr.mxu0 0.0
    %1391 = vmatpush1.msra.mxu0 0.0
    %1392 = vmatprep.subr.mxu0 0.0
    %1393 = vmatpush1.msra.mxu0 0.0
    %1394 = vmatprep.subr.mxu0 0.0
    %1395 = vmatpush1.msra.mxu0 0.0
    %1396 = vmatprep.subr.mxu0 0.0
    %1397 = vmatpush1.msra.mxu0 0.0
    %1398 = vmatprep.subr.mxu0 0.0
    %1399 = vmatpush1.msra.mxu0 0.0
    %1400 = vmatprep.subr.mxu0 0.0
    %1401 = vmatpush1.msra.mxu0 0.0
    %1402 = vmatprep.subr.mxu0 0.0
    %1403 = vmatpush1.msra.mxu0 0.0
    %1404 = vmatprep.subr.mxu0 0.0
    %1405 = vmatpush1.msra.mxu0 0.0
    %1406 = vmatprep.subr.mxu0 0.0
    %1407 = vmatpush1.msra.mxu0 0.0
    %1408 = vmatprep.subr.mxu0 0.0
    %1409 = vmatpush1.msra.mxu0 0.0
    %1410 = vmatprep.subr.mxu0 0.0
    %1411 = vmatpush1.msra.mxu0 0.0
    %1412 = vmatprep.subr.mxu0 0.0
    %1413 = vmatpush1.msra.mxu0 0.0
    %1414 = vmatprep.subr.mxu0 0.0
    %1415 = vmatpush1.msra.mxu0 0.0
    %1416 = vmatprep.subr.mxu0 0.0
    %1417 = vmatpush1.msra.mxu0 0.0
    %1418 = vmatprep.subr.mxu0 0.0
    %1419 = vmatpush1.msra.mxu0 0.0
    %1420 = vmatprep.subr.mxu0 0.0
    %1421 = vmatpush1.msra.mxu0 0.0
    %1422 = vmatprep.subr.mxu0 0.0
    %1423 = vmatpush1.msra.mxu0 0.0
    %1424 = vmatprep.subr.mxu0 0.0
    %1425 = vmatpush1.msra.mxu0 0.0
    %1426 = vmatprep.subr.mxu0 0.0
    %1427 = vmatpush1.msra.mxu0 0.0
    %1428 = vmatprep.subr.mxu0 0.0
    %1429 = vmatpush1.msra.mxu0 0.0
    %1430 = vmatprep.subr.mxu0 0.0
    %1431 = vmatpush1.msra.mxu0 0.0
    %1432 = vmatprep.subr.mxu0 0.0
    %1433 = vmatpush1.msra.mxu0 0.0
    %1434 = vmatprep.subr.mxu0 0.0
    %1435 = vmatpush1.msra.mxu0 0.0
    %1436 = vmatprep.mubr.f32.mxu0 0.0
    %v1437 = vand.u32 %v1031, 4294901760
    %1438 = vmatmul.mubr.f32.gmra.mrb[0].mxu0 %v1437
    %v1439 = vpop.f32.mrb[0].mxu0
    %v1440 = vadd.f32 %v1357, %v1439
    %v1441 = vpop.f32.mrb[0].mxu0
    %1442 = vdwg.mxu0
    %1443 = vmatprep.subr.mxu0 0.0
    %v1444 = vand.u32 %v14, 4294901760
    %1445 = vmatpush1.msra.mxu0 %v1444
    %1446 = vmatprep.subr.mxu0 0.0
    %v1447 = vand.u32 %v15, 4294901760
    %1448 = vmatpush1.msra.mxu0 %v1447
    %1449 = vmatprep.subr.mxu0 0.0
    %v1450 = vand.u32 %v16, 4294901760
    %1451 = vmatpush1.msra.mxu0 %v1450
    %1452 = vmatprep.subr.mxu0 0.0
    %v1453 = vand.u32 %v17, 4294901760
    %1454 = vmatpush1.msra.mxu0 %v1453
    %1455 = vmatprep.subr.mxu0 0.0
    %1456 = vmatpush1.msra.mxu0 0.0
    %1457 = vmatprep.subr.mxu0 0.0
    %1458 = vmatpush1.msra.mxu0 0.0
    %1459 = vmatprep.subr.mxu0 0.0
    %1460 = vmatpush1.msra.mxu0 0.0
    %1461 = vmatprep.subr.mxu0 0.0
    %1462 = vmatpush1.msra.mxu0 0.0
    %1463 = vmatprep.subr.mxu0 0.0
    %1464 = vmatpush1.msra.mxu0 0.0
    %1465 = vmatprep.subr.mxu0 0.0
    %1466 = vmatpush1.msra.mxu0 0.0
    %1467 = vmatprep.subr.mxu0 0.0
    %1468 = vmatpush1.msra.mxu0 0.0
    %1469 = vmatprep.subr.mxu0 0.0
    %1470 = vmatpush1.msra.mxu0 0.0
    %1471 = vmatprep.subr.mxu0 0.0
    %1472 = vmatpush1.msra.mxu0 0.0
    %1473 = vmatprep.subr.mxu0 0.0
    %1474 = vmatpush1.msra.mxu0 0.0
    %1475 = vmatprep.subr.mxu0 0.0
    %1476 = vmatpush1.msra.mxu0 0.0
    %1477 = vmatprep.subr.mxu0 0.0
    %1478 = vmatpush1.msra.mxu0 0.0
    %1479 = vmatprep.subr.mxu0 0.0
    %1480 = vmatpush1.msra.mxu0 0.0
    %1481 = vmatprep.subr.mxu0 0.0
    %1482 = vmatpush1.msra.mxu0 0.0
    %1483 = vmatprep.subr.mxu0 0.0
    %1484 = vmatpush1.msra.mxu0 0.0
    %1485 = vmatprep.subr.mxu0 0.0
    %1486 = vmatpush1.msra.mxu0 0.0
    %1487 = vmatprep.subr.mxu0 0.0
    %1488 = vmatpush1.msra.mxu0 0.0
    %1489 = vmatprep.subr.mxu0 0.0
    %1490 = vmatpush1.msra.mxu0 0.0
    %1491 = vmatprep.subr.mxu0 0.0
    %1492 = vmatpush1.msra.mxu0 0.0
    %1493 = vmatprep.subr.mxu0 0.0
    %1494 = vmatpush1.msra.mxu0 0.0
    %1495 = vmatprep.subr.mxu0 0.0
    %1496 = vmatpush1.msra.mxu0 0.0
    %1497 = vmatprep.subr.mxu0 0.0
    %1498 = vmatpush1.msra.mxu0 0.0
    %1499 = vmatprep.subr.mxu0 0.0
    %1500 = vmatpush1.msra.mxu0 0.0
    %1501 = vmatprep.subr.mxu0 0.0
    %1502 = vmatpush1.msra.mxu0 0.0
    %1503 = vmatprep.subr.mxu0 0.0
    %1504 = vmatpush1.msra.mxu0 0.0
    %1505 = vmatprep.subr.mxu0 0.0
    %1506 = vmatpush1.msra.mxu0 0.0
    %1507 = vmatprep.subr.mxu0 0.0
    %1508 = vmatpush1.msra.mxu0 0.0
    %1509 = vmatprep.subr.mxu0 0.0
    %1510 = vmatpush1.msra.mxu0 0.0
    %1511 = vmatprep.mubr.f32.mxu0 0.0
    %v1512 = vand.u32 %v1031, 4294901760
    %1513 = vmatmul.mubr.f32.gmra.mrb[0].mxu0 %v1512
    %v1514 = vpop.f32.mrb[0].mxu0
    %v1515 = vadd.f32 %v1440, %v1514
    %v1516 = vpop.f32.mrb[0].mxu0
    %1517 = vdwg.mxu0
    %v1519 = vrot.slane %v1515, 6
    %v1521 = vadd.f32 %v530, %v1519
    %v1522 = vtanh.pop %v1521
    %v1524 = vrot.slane %v1522, 2
    %v1525 = vsel %vm539, %v1524, 0
    %1527 = vmatprep.subr.mxu0 0.0
    %v1528 = vand.u32 %v14, 4294901760
    %1529 = vmatpush1.msra.mxu0 %v1528
    %1530 = vmatprep.subr.mxu0 0.0
    %v1531 = vand.u32 %v15, 4294901760
    %1532 = vmatpush1.msra.mxu0 %v1531
    %1533 = vmatprep.subr.mxu0 0.0
    %v1534 = vand.u32 %v16, 4294901760
    %1535 = vmatpush1.msra.mxu0 %v1534
    %1536 = vmatprep.subr.mxu0 0.0
    %v1537 = vand.u32 %v17, 4294901760
    %1538 = vmatpush1.msra.mxu0 %v1537
    %1539 = vmatprep.subr.mxu0 0.0
    %1540 = vmatpush1.msra.mxu0 0.0
    %1541 = vmatprep.subr.mxu0 0.0
    %1542 = vmatpush1.msra.mxu0 0.0
    %1543 = vmatprep.subr.mxu0 0.0
    %1544 = vmatpush1.msra.mxu0 0.0
    %1545 = vmatprep.subr.mxu0 0.0
    %1546 = vmatpush1.msra.mxu0 0.0
    %1547 = vmatprep.subr.mxu0 0.0
    %1548 = vmatpush1.msra.mxu0 0.0
    %1549 = vmatprep.subr.mxu0 0.0
    %1550 = vmatpush1.msra.mxu0 0.0
    %1551 = vmatprep.subr.mxu0 0.0
    %1552 = vmatpush1.msra.mxu0 0.0
    %1553 = vmatprep.subr.mxu0 0.0
    %1554 = vmatpush1.msra.mxu0 0.0
    %1555 = vmatprep.subr.mxu0 0.0
    %1556 = vmatpush1.msra.mxu0 0.0
    %1557 = vmatprep.subr.mxu0 0.0
    %1558 = vmatpush1.msra.mxu0 0.0
    %1559 = vmatprep.subr.mxu0 0.0
    %1560 = vmatpush1.msra.mxu0 0.0
    %1561 = vmatprep.subr.mxu0 0.0
    %1562 = vmatpush1.msra.mxu0 0.0
    %1563 = vmatprep.subr.mxu0 0.0
    %1564 = vmatpush1.msra.mxu0 0.0
    %1565 = vmatprep.subr.mxu0 0.0
    %1566 = vmatpush1.msra.mxu0 0.0
    %1567 = vmatprep.subr.mxu0 0.0
    %1568 = vmatpush1.msra.mxu0 0.0
    %1569 = vmatprep.subr.mxu0 0.0
    %1570 = vmatpush1.msra.mxu0 0.0
    %1571 = vmatprep.subr.mxu0 0.0
    %1572 = vmatpush1.msra.mxu0 0.0
    %1573 = vmatprep.subr.mxu0 0.0
    %1574 = vmatpush1.msra.mxu0 0.0
    %1575 = vmatprep.subr.mxu0 0.0
    %1576 = vmatpush1.msra.mxu0 0.0
    %1577 = vmatprep.subr.mxu0 0.0
    %1578 = vmatpush1.msra.mxu0 0.0
    %1579 = vmatprep.subr.mxu0 0.0
    %1580 = vmatpush1.msra.mxu0 0.0
    %1581 = vmatprep.subr.mxu0 0.0
    %1582 = vmatpush1.msra.mxu0 0.0
    %1583 = vmatprep.subr.mxu0 0.0
    %1584 = vmatpush1.msra.mxu0 0.0
    %1585 = vmatprep.subr.mxu0 0.0
    %1586 = vmatpush1.msra.mxu0 0.0
    %1587 = vmatprep.subr.mxu0 0.0
    %1588 = vmatpush1.msra.mxu0 0.0
    %1589 = vmatprep.subr.mxu0 0.0
    %1590 = vmatpush1.msra.mxu0 0.0
    %1591 = vmatprep.subr.mxu0 0.0
    %1592 = vmatpush1.msra.mxu0 0.0
    %1593 = vmatprep.subr.mxu0 0.0
    %1594 = vmatpush1.msra.mxu0 0.0
    %1595 = vmatprep.mubr.f32.mxu0 0.0
    %v1596 = vand.u32 %v1525, 4294901760
    %v1597 = vsub.f32 %v1525, %v1596
    %v1598 = vand.u32 %v1597, 4294901760
    %v1599 = vsub.f32 %v1597, %v1598
    %v1600 = vand.u32 %v1599, 4294901760
    %1601 = vmatmul.mubr.f32.gmra.mrb[0].mxu0 %v1600
    %v1602 = vpop.f32.mrb[0].mxu0
    %v1603 = vadd.f32 0.0, %v1602
    %v1604 = vpop.f32.mrb[0].mxu0
    %1605 = vdwg.mxu0
    %1606 = vmatprep.subr.mxu0 0.0
    %v1607 = vand.u32 %v14, 4294901760
    %v1608 = vsub.f32 %v14, %v1607
    %v1609 = vand.u32 %v1608, 4294901760
    %v1610 = vsub.f32 %v1608, %v1609
    %v1611 = vand.u32 %v1610, 4294901760
    %1612 = vmatpush1.msra.mxu0 %v1611
    %1613 = vmatprep.subr.mxu0 0.0
    %v1614 = vand.u32 %v15, 4294901760
    %v1615 = vsub.f32 %v15, %v1614
    %v1616 = vand.u32 %v1615, 4294901760
    %v1617 = vsub.f32 %v1615, %v1616
    %v1618 = vand.u32 %v1617, 4294901760
    %1619 = vmatpush1.msra.mxu0 %v1618
    %1620 = vmatprep.subr.mxu0 0.0
    %v1621 = vand.u32 %v16, 4294901760
    %v1622 = vsub.f32 %v16, %v1621
    %v1623 = vand.u32 %v1622, 4294901760
    %v1624 = vsub.f32 %v1622, %v1623
    %v1625 = vand.u32 %v1624, 4294901760
    %1626 = vmatpush1.msra.mxu0 %v1625
    %1627 = vmatprep.subr.mxu0 0.0
    %v1628 = vand.u32 %v17, 4294901760
    %v1629 = vsub.f32 %v17, %v1628
    %v1630 = vand.u32 %v1629, 4294901760
    %v1631 = vsub.f32 %v1629, %v1630
    %v1632 = vand.u32 %v1631, 4294901760
    %1633 = vmatpush1.msra.mxu0 %v1632
    %1634 = vmatprep.subr.mxu0 0.0
    %1635 = vmatpush1.msra.mxu0 0.0
    %1636 = vmatprep.subr.mxu0 0.0
    %1637 = vmatpush1.msra.mxu0 0.0
    %1638 = vmatprep.subr.mxu0 0.0
    %1639 = vmatpush1.msra.mxu0 0.0
    %1640 = vmatprep.subr.mxu0 0.0
    %1641 = vmatpush1.msra.mxu0 0.0
    %1642 = vmatprep.subr.mxu0 0.0
    %1643 = vmatpush1.msra.mxu0 0.0
    %1644 = vmatprep.subr.mxu0 0.0
    %1645 = vmatpush1.msra.mxu0 0.0
    %1646 = vmatprep.subr.mxu0 0.0
    %1647 = vmatpush1.msra.mxu0 0.0
    %1648 = vmatprep.subr.mxu0 0.0
    %1649 = vmatpush1.msra.mxu0 0.0
    %1650 = vmatprep.subr.mxu0 0.0
    %1651 = vmatpush1.msra.mxu0 0.0
    %1652 = vmatprep.subr.mxu0 0.0
    %1653 = vmatpush1.msra.mxu0 0.0
    %1654 = vmatprep.subr.mxu0 0.0
    %1655 = vmatpush1.msra.mxu0 0.0
    %1656 = vmatprep.subr.mxu0 0.0
    %1657 = vmatpush1.msra.mxu0 0.0
    %1658 = vmatprep.subr.mxu0 0.0
    %1659 = vmatpush1.msra.mxu0 0.0
    %1660 = vmatprep.subr.mxu0 0.0
    %1661 = vmatpush1.msra.mxu0 0.0
    %1662 = vmatprep.subr.mxu0 0.0
    %1663 = vmatpush1.msra.mxu0 0.0
    %1664 = vmatprep.subr.mxu0 0.0
    %1665 = vmatpush1.msra.mxu0 0.0
    %1666 = vmatprep.subr.mxu0 0.0
    %1667 = vmatpush1.msra.mxu0 0.0
    %1668 = vmatprep.subr.mxu0 0.0
    %1669 = vmatpush1.msra.mxu0 0.0
    %1670 = vmatprep.subr.mxu0 0.0
    %1671 = vmatpush1.msra.mxu0 0.0
    %1672 = vmatprep.subr.mxu0 0.0
    %1673 = vmatpush1.msra.mxu0 0.0
    %1674 = vmatprep.subr.mxu0 0.0
    %1675 = vmatpush1.msra.mxu0 0.0
    %1676 = vmatprep.subr.mxu0 0.0
    %1677 = vmatpush1.msra.mxu0 0.0
    %1678 = vmatprep.subr.mxu0 0.0
    %1679 = vmatpush1.msra.mxu0 0.0
    %1680 = vmatprep.subr.mxu0 0.0
    %1681 = vmatpush1.msra.mxu0 0.0
    %1682 = vmatprep.subr.mxu0 0.0
    %1683 = vmatpush1.msra.mxu0 0.0
    %1684 = vmatprep.subr.mxu0 0.0
    %1685 = vmatpush1.msra.mxu0 0.0
    %1686 = vmatprep.subr.mxu0 0.0
    %1687 = vmatpush1.msra.mxu0 0.0
    %1688 = vmatprep.subr.mxu0 0.0
    %1689 = vmatpush1.msra.mxu0 0.0
    %1690 = vmatprep.mubr.f32.mxu0 0.0
    %v1691 = vand.u32 %v1525, 4294901760
    %1692 = vmatmul.mubr.f32.gmra.mrb[0].mxu0 %v1691
    %v1693 = vpop.f32.mrb[0].mxu0
    %v1694 = vadd.f32 %v1603, %v1693
    %v1695 = vpop.f32.mrb[0].mxu0
    %1696 = vdwg.mxu0
    %1697 = vmatprep.subr.mxu0 0.0
    %v1698 = vand.u32 %v14, 4294901760
    %v1699 = vsub.f32 %v14, %v1698
    %1700 = vmatpush1.msra.mxu0 %v1699
    %1701 = vmatprep.subr.mxu0 0.0
    %v1702 = vand.u32 %v15, 4294901760
    %v1703 = vsub.f32 %v15, %v1702
    %1704 = vmatpush1.msra.mxu0 %v1703
    %1705 = vmatprep.subr.mxu0 0.0
    %v1706 = vand.u32 %v16, 4294901760
    %v1707 = vsub.f32 %v16, %v1706
    %1708 = vmatpush1.msra.mxu0 %v1707
    %1709 = vmatprep.subr.mxu0 0.0
    %v1710 = vand.u32 %v17, 4294901760
    %v1711 = vsub.f32 %v17, %v1710
    %1712 = vmatpush1.msra.mxu0 %v1711
    %1713 = vmatprep.subr.mxu0 0.0
    %1714 = vmatpush1.msra.mxu0 0.0
    %1715 = vmatprep.subr.mxu0 0.0
    %1716 = vmatpush1.msra.mxu0 0.0
    %1717 = vmatprep.subr.mxu0 0.0
    %1718 = vmatpush1.msra.mxu0 0.0
    %1719 = vmatprep.subr.mxu0 0.0
    %1720 = vmatpush1.msra.mxu0 0.0
    %1721 = vmatprep.subr.mxu0 0.0
    %1722 = vmatpush1.msra.mxu0 0.0
    %1723 = vmatprep.subr.mxu0 0.0
    %1724 = vmatpush1.msra.mxu0 0.0
    %1725 = vmatprep.subr.mxu0 0.0
    %1726 = vmatpush1.msra.mxu0 0.0
    %1727 = vmatprep.subr.mxu0 0.0
    %1728 = vmatpush1.msra.mxu0 0.0
    %1729 = vmatprep.subr.mxu0 0.0
    %1730 = vmatpush1.msra.mxu0 0.0
    %1731 = vmatprep.subr.mxu0 0.0
    %1732 = vmatpush1.msra.mxu0 0.0
    %1733 = vmatprep.subr.mxu0 0.0
    %1734 = vmatpush1.msra.mxu0 0.0
    %1735 = vmatprep.subr.mxu0 0.0
    %1736 = vmatpush1.msra.mxu0 0.0
    %1737 = vmatprep.subr.mxu0 0.0
    %1738 = vmatpush1.msra.mxu0 0.0
    %1739 = vmatprep.subr.mxu0 0.0
    %1740 = vmatpush1.msra.mxu0 0.0
    %1741 = vmatprep.subr.mxu0 0.0
    %1742 = vmatpush1.msra.mxu0 0.0
    %1743 = vmatprep.subr.mxu0 0.0
    %1744 = vmatpush1.msra.mxu0 0.0
    %1745 = vmatprep.subr.mxu0 0.0
    %1746 = vmatpush1.msra.mxu0 0.0
    %1747 = vmatprep.subr.mxu0 0.0
    %1748 = vmatpush1.msra.mxu0 0.0
    %1749 = vmatprep.subr.mxu0 0.0
    %1750 = vmatpush1.msra.mxu0 0.0
    %1751 = vmatprep.subr.mxu0 0.0
    %1752 = vmatpush1.msra.mxu0 0.0
    %1753 = vmatprep.subr.mxu0 0.0
    %1754 = vmatpush1.msra.mxu0 0.0
    %1755 = vmatprep.subr.mxu0 0.0
    %1756 = vmatpush1.msra.mxu0 0.0
    %1757 = vmatprep.subr.mxu0 0.0
    %1758 = vmatpush1.msra.mxu0 0.0
    %1759 = vmatprep.subr.mxu0 0.0
    %1760 = vmatpush1.msra.mxu0 0.0
    %1761 = vmatprep.subr.mxu0 0.0
    %1762 = vmatpush1.msra.mxu0 0.0
    %1763 = vmatprep.subr.mxu0 0.0
    %1764 = vmatpush1.msra.mxu0 0.0
    %1765 = vmatprep.subr.mxu0 0.0
    %1766 = vmatpush1.msra.mxu0 0.0
    %1767 = vmatprep.subr.mxu0 0.0
    %1768 = vmatpush1.msra.mxu0 0.0
    %1769 = vmatprep.mubr.f32.mxu0 0.0
    %v1770 = vand.u32 %v1525, 4294901760
    %v1771 = vsub.f32 %v1525, %v1770
    %1772 = vmatmul.mubr.f32.gmra.mrb[0].mxu0 %v1771
    %v1773 = vpop.f32.mrb[0].mxu0
    %v1774 = vadd.f32 %v1694, %v1773
    %v1775 = vpop.f32.mrb[0].mxu0
    %1776 = vdwg.mxu0
    %1777 = vmatprep.subr.mxu0 0.0
    %v1778 = vand.u32 %v14, 4294901760
    %1779 = vmatpush1.msra.mxu0 %v1778
    %1780 = vmatprep.subr.mxu0 0.0
    %v1781 = vand.u32 %v15, 4294901760
    %1782 = vmatpush1.msra.mxu0 %v1781
    %1783 = vmatprep.subr.mxu0 0.0
    %v1784 = vand.u32 %v16, 4294901760
    %1785 = vmatpush1.msra.mxu0 %v1784
    %1786 = vmatprep.subr.mxu0 0.0
    %v1787 = vand.u32 %v17, 4294901760
    %1788 = vmatpush1.msra.mxu0 %v1787
    %1789 = vmatprep.subr.mxu0 0.0
    %1790 = vmatpush1.msra.mxu0 0.0
    %1791 = vmatprep.subr.mxu0 0.0
    %1792 = vmatpush1.msra.mxu0 0.0
    %1793 = vmatprep.subr.mxu0 0.0
    %1794 = vmatpush1.msra.mxu0 0.0
    %1795 = vmatprep.subr.mxu0 0.0
    %1796 = vmatpush1.msra.mxu0 0.0
    %1797 = vmatprep.subr.mxu0 0.0
    %1798 = vmatpush1.msra.mxu0 0.0
    %1799 = vmatprep.subr.mxu0 0.0
    %1800 = vmatpush1.msra.mxu0 0.0
    %1801 = vmatprep.subr.mxu0 0.0
    %1802 = vmatpush1.msra.mxu0 0.0
    %1803 = vmatprep.subr.mxu0 0.0
    %1804 = vmatpush1.msra.mxu0 0.0
    %1805 = vmatprep.subr.mxu0 0.0
    %1806 = vmatpush1.msra.mxu0 0.0
    %1807 = vmatprep.subr.mxu0 0.0
    %1808 = vmatpush1.msra.mxu0 0.0
    %1809 = vmatprep.subr.mxu0 0.0
    %1810 = vmatpush1.msra.mxu0 0.0
    %1811 = vmatprep.subr.mxu0 0.0
    %1812 = vmatpush1.msra.mxu0 0.0
    %1813 = vmatprep.subr.mxu0 0.0
    %1814 = vmatpush1.msra.mxu0 0.0
    %1815 = vmatprep.subr.mxu0 0.0
    %1816 = vmatpush1.msra.mxu0 0.0
    %1817 = vmatprep.subr.mxu0 0.0
    %1818 = vmatpush1.msra.mxu0 0.0
    %1819 = vmatprep.subr.mxu0 0.0
    %1820 = vmatpush1.msra.mxu0 0.0
    %1821 = vmatprep.subr.mxu0 0.0
    %1822 = vmatpush1.msra.mxu0 0.0
    %1823 = vmatprep.subr.mxu0 0.0
    %1824 = vmatpush1.msra.mxu0 0.0
    %1825 = vmatprep.subr.mxu0 0.0
    %1826 = vmatpush1.msra.mxu0 0.0
    %1827 = vmatprep.subr.mxu0 0.0
    %1828 = vmatpush1.msra.mxu0 0.0
    %1829 = vmatprep.subr.mxu0 0.0
    %1830 = vmatpush1.msra.mxu0 0.0
    %1831 = vmatprep.subr.mxu0 0.0
    %1832 = vmatpush1.msra.mxu0 0.0
    %1833 = vmatprep.subr.mxu0 0.0
    %1834 = vmatpush1.msra.mxu0 0.0
    %1835 = vmatprep.subr.mxu0 0.0
    %1836 = vmatpush1.msra.mxu0 0.0
    %1837 = vmatprep.subr.mxu0 0.0
    %1838 = vmatpush1.msra.mxu0 0.0
    %1839 = vmatprep.subr.mxu0 0.0
    %1840 = vmatpush1.msra.mxu0 0.0
    %1841 = vmatprep.subr.mxu0 0.0
    %1842 = vmatpush1.msra.mxu0 0.0
    %1843 = vmatprep.subr.mxu0 0.0
    %1844 = vmatpush1.msra.mxu0 0.0
    %1845 = vmatprep.mubr.f32.mxu0 0.0
    %v1846 = vand.u32 %v1525, 4294901760
    %v1847 = vsub.f32 %v1525, %v1846
    %v1848 = vand.u32 %v1847, 4294901760
    %1849 = vmatmul.mubr.f32.gmra.mrb[0].mxu0 %v1848
    %v1850 = vpop.f32.mrb[0].mxu0
    %v1851 = vadd.f32 %v1774, %v1850
    %v1852 = vpop.f32.mrb[0].mxu0
    %1853 = vdwg.mxu0
    %1854 = vmatprep.subr.mxu0 0.0
    %v1855 = vand.u32 %v14, 4294901760
    %v1856 = vsub.f32 %v14, %v1855
    %v1857 = vand.u32 %v1856, 4294901760
    %1858 = vmatpush1.msra.mxu0 %v1857
    %1859 = vmatprep.subr.mxu0 0.0
    %v1860 = vand.u32 %v15, 4294901760
    %v1861 = vsub.f32 %v15, %v1860
    %v1862 = vand.u32 %v1861, 4294901760
    %1863 = vmatpush1.msra.mxu0 %v1862
    %1864 = vmatprep.subr.mxu0 0.0
    %v1865 = vand.u32 %v16, 4294901760
    %v1866 = vsub.f32 %v16, %v1865
    %v1867 = vand.u32 %v1866, 4294901760
    %1868 = vmatpush1.msra.mxu0 %v1867
    %1869 = vmatprep.subr.mxu0 0.0
    %v1870 = vand.u32 %v17, 4294901760
    %v1871 = vsub.f32 %v17, %v1870
    %v1872 = vand.u32 %v1871, 4294901760
    %1873 = vmatpush1.msra.mxu0 %v1872
    %1874 = vmatprep.subr.mxu0 0.0
    %1875 = vmatpush1.msra.mxu0 0.0
    %1876 = vmatprep.subr.mxu0 0.0
    %1877 = vmatpush1.msra.mxu0 0.0
    %1878 = vmatprep.subr.mxu0 0.0
    %1879 = vmatpush1.msra.mxu0 0.0
    %1880 = vmatprep.subr.mxu0 0.0
    %1881 = vmatpush1.msra.mxu0 0.0
    %1882 = vmatprep.subr.mxu0 0.0
    %1883 = vmatpush1.msra.mxu0 0.0
    %1884 = vmatprep.subr.mxu0 0.0
    %1885 = vmatpush1.msra.mxu0 0.0
    %1886 = vmatprep.subr.mxu0 0.0
    %1887 = vmatpush1.msra.mxu0 0.0
    %1888 = vmatprep.subr.mxu0 0.0
    %1889 = vmatpush1.msra.mxu0 0.0
    %1890 = vmatprep.subr.mxu0 0.0
    %1891 = vmatpush1.msra.mxu0 0.0
    %1892 = vmatprep.subr.mxu0 0.0
    %1893 = vmatpush1.msra.mxu0 0.0
    %1894 = vmatprep.subr.mxu0 0.0
    %1895 = vmatpush1.msra.mxu0 0.0
    %1896 = vmatprep.subr.mxu0 0.0
    %1897 = vmatpush1.msra.mxu0 0.0
    %1898 = vmatprep.subr.mxu0 0.0
    %1899 = vmatpush1.msra.mxu0 0.0
    %1900 = vmatprep.subr.mxu0 0.0
    %1901 = vmatpush1.msra.mxu0 0.0
    %1902 = vmatprep.subr.mxu0 0.0
    %1903 = vmatpush1.msra.mxu0 0.0
    %1904 = vmatprep.subr.mxu0 0.0
    %1905 = vmatpush1.msra.mxu0 0.0
    %1906 = vmatprep.subr.mxu0 0.0
    %1907 = vmatpush1.msra.mxu0 0.0
    %1908 = vmatprep.subr.mxu0 0.0
    %1909 = vmatpush1.msra.mxu0 0.0
    %1910 = vmatprep.subr.mxu0 0.0
    %1911 = vmatpush1.msra.mxu0 0.0
    %1912 = vmatprep.subr.mxu0 0.0
    %1913 = vmatpush1.msra.mxu0 0.0
    %1914 = vmatprep.subr.mxu0 0.0
    %1915 = vmatpush1.msra.mxu0 0.0
    %1916 = vmatprep.subr.mxu0 0.0
    %1917 = vmatpush1.msra.mxu0 0.0
    %1918 = vmatprep.subr.mxu0 0.0
    %1919 = vmatpush1.msra.mxu0 0.0
    %1920 = vmatprep.subr.mxu0 0.0
    %1921 = vmatpush1.msra.mxu0 0.0
    %1922 = vmatprep.subr.mxu0 0.0
    %1923 = vmatpush1.msra.mxu0 0.0
    %1924 = vmatprep.subr.mxu0 0.0
    %1925 = vmatpush1.msra.mxu0 0.0
    %1926 = vmatprep.subr.mxu0 0.0
    %1927 = vmatpush1.msra.mxu0 0.0
    %1928 = vmatprep.subr.mxu0 0.0
    %1929 = vmatpush1.msra.mxu0 0.0
    %1930 = vmatprep.mubr.f32.mxu0 0.0
    %v1931 = vand.u32 %v1525, 4294901760
    %1932 = vmatmul.mubr.f32.gmra.mrb[0].mxu0 %v1931
    %v1933 = vpop.f32.mrb[0].mxu0
    %v1934 = vadd.f32 %v1851, %v1933
    %v1935 = vpop.f32.mrb[0].mxu0
    %1936 = vdwg.mxu0
    %1937 = vmatprep.subr.mxu0 0.0
    %v1938 = vand.u32 %v14, 4294901760
    %1939 = vmatpush1.msra.mxu0 %v1938
    %1940 = vmatprep.subr.mxu0 0.0
    %v1941 = vand.u32 %v15, 4294901760
    %1942 = vmatpush1.msra.mxu0 %v1941
    %1943 = vmatprep.subr.mxu0 0.0
    %v1944 = vand.u32 %v16, 4294901760
    %1945 = vmatpush1.msra.mxu0 %v1944
    %1946 = vmatprep.subr.mxu0 0.0
    %v1947 = vand.u32 %v17, 4294901760
    %1948 = vmatpush1.msra.mxu0 %v1947
    %1949 = vmatprep.subr.mxu0 0.0
    %1950 = vmatpush1.msra.mxu0 0.0
    %1951 = vmatprep.subr.mxu0 0.0
    %1952 = vmatpush1.msra.mxu0 0.0
    %1953 = vmatprep.subr.mxu0 0.0
    %1954 = vmatpush1.msra.mxu0 0.0
    %1955 = vmatprep.subr.mxu0 0.0
    %1956 = vmatpush1.msra.mxu0 0.0
    %1957 = vmatprep.subr.mxu0 0.0
    %1958 = vmatpush1.msra.mxu0 0.0
    %1959 = vmatprep.subr.mxu0 0.0
    %1960 = vmatpush1.msra.mxu0 0.0
    %1961 = vmatprep.subr.mxu0 0.0
    %1962 = vmatpush1.msra.mxu0 0.0
    %1963 = vmatprep.subr.mxu0 0.0
    %1964 = vmatpush1.msra.mxu0 0.0
    %1965 = vmatprep.subr.mxu0 0.0
    %1966 = vmatpush1.msra.mxu0 0.0
    %1967 = vmatprep.subr.mxu0 0.0
    %1968 = vmatpush1.msra.mxu0 0.0
    %1969 = vmatprep.subr.mxu0 0.0
    %1970 = vmatpush1.msra.mxu0 0.0
    %1971 = vmatprep.subr.mxu0 0.0
    %1972 = vmatpush1.msra.mxu0 0.0
    %1973 = vmatprep.subr.mxu0 0.0
    %1974 = vmatpush1.msra.mxu0 0.0
    %1975 = vmatprep.subr.mxu0 0.0
    %1976 = vmatpush1.msra.mxu0 0.0
    %1977 = vmatprep.subr.mxu0 0.0
    %1978 = vmatpush1.msra.mxu0 0.0
    %1979 = vmatprep.subr.mxu0 0.0
    %1980 = vmatpush1.msra.mxu0 0.0
    %1981 = vmatprep.subr.mxu0 0.0
    %1982 = vmatpush1.msra.mxu0 0.0
    %1983 = vmatprep.subr.mxu0 0.0
    %1984 = vmatpush1.msra.mxu0 0.0
    %1985 = vmatprep.subr.mxu0 0.0
    %1986 = vmatpush1.msra.mxu0 0.0
    %1987 = vmatprep.subr.mxu0 0.0
    %1988 = vmatpush1.msra.mxu0 0.0
    %1989 = vmatprep.subr.mxu0 0.0
    %1990 = vmatpush1.msra.mxu0 0.0
    %1991 = vmatprep.subr.mxu0 0.0
    %1992 = vmatpush1.msra.mxu0 0.0
    %1993 = vmatprep.subr.mxu0 0.0
    %1994 = vmatpush1.msra.mxu0 0.0
    %1995 = vmatprep.subr.mxu0 0.0
    %1996 = vmatpush1.msra.mxu0 0.0
    %1997 = vmatprep.subr.mxu0 0.0
    %1998 = vmatpush1.msra.mxu0 0.0
    %1999 = vmatprep.subr.mxu0 0.0
    %2000 = vmatpush1.msra.mxu0 0.0
    %2001 = vmatprep.subr.mxu0 0.0
    %2002 = vmatpush1.msra.mxu0 0.0
    %2003 = vmatprep.subr.mxu0 0.0
    %2004 = vmatpush1.msra.mxu0 0.0
    %2005 = vmatprep.mubr.f32.mxu0 0.0
    %v2006 = vand.u32 %v1525, 4294901760
    %2007 = vmatmul.mubr.f32.gmra.mrb[0].mxu0 %v2006
    %v2008 = vpop.f32.mrb[0].mxu0
    %v2009 = vadd.f32 %v1934, %v2008
    %v2010 = vpop.f32.mrb[0].mxu0
    %2011 = vdwg.mxu0
    %v2013 = vrot.slane %v2009, 4
    %v2015 = vadd.f32 %v530, %v2013
    %v2016 = vtanh.pop %v2015
    %v2018 = vrot.slane %v2016, 4
    %v2019 = vsel %vm539, %v2018, 0
    %2021 = vmatprep.subr.mxu0 0.0
    %v2022 = vand.u32 %v14, 4294901760
    %2023 = vmatpush1.msra.mxu0 %v2022
    %2024 = vmatprep.subr.mxu0 0.0
    %v2025 = vand.u32 %v15, 4294901760
    %2026 = vmatpush1.msra.mxu0 %v2025
    %2027 = vmatprep.subr.mxu0 0.0
    %v2028 = vand.u32 %v16, 4294901760
    %2029 = vmatpush1.msra.mxu0 %v2028
    %2030 = vmatprep.subr.mxu0 0.0
    %v2031 = vand.u32 %v17, 4294901760
    %2032 = vmatpush1.msra.mxu0 %v2031
    %2033 = vmatprep.subr.mxu0 0.0
    %2034 = vmatpush1.msra.mxu0 0.0
    %2035 = vmatprep.subr.mxu0 0.0
    %2036 = vmatpush1.msra.mxu0 0.0
    %2037 = vmatprep.subr.mxu0 0.0
    %2038 = vmatpush1.msra.mxu0 0.0
    %2039 = vmatprep.subr.mxu0 0.0
    %2040 = vmatpush1.msra.mxu0 0.0
    %2041 = vmatprep.subr.mxu0 0.0
    %2042 = vmatpush1.msra.mxu0 0.0
    %2043 = vmatprep.subr.mxu0 0.0
    %2044 = vmatpush1.msra.mxu0 0.0
    %2045 = vmatprep.subr.mxu0 0.0
    %2046 = vmatpush1.msra.mxu0 0.0
    %2047 = vmatprep.subr.mxu0 0.0
    %2048 = vmatpush1.msra.mxu0 0.0
    %2049 = vmatprep.subr.mxu0 0.0
    %2050 = vmatpush1.msra.mxu0 0.0
    %2051 = vmatprep.subr.mxu0 0.0
    %2052 = vmatpush1.msra.mxu0 0.0
    %2053 = vmatprep.subr.mxu0 0.0
    %2054 = vmatpush1.msra.mxu0 0.0
    %2055 = vmatprep.subr.mxu0 0.0
    %2056 = vmatpush1.msra.mxu0 0.0
    %2057 = vmatprep.subr.mxu0 0.0
    %2058 = vmatpush1.msra.mxu0 0.0
    %2059 = vmatprep.subr.mxu0 0.0
    %2060 = vmatpush1.msra.mxu0 0.0
    %2061 = vmatprep.subr.mxu0 0.0
    %2062 = vmatpush1.msra.mxu0 0.0
    %2063 = vmatprep.subr.mxu0 0.0
    %2064 = vmatpush1.msra.mxu0 0.0
    %2065 = vmatprep.subr.mxu0 0.0
    %2066 = vmatpush1.msra.mxu0 0.0
    %2067 = vmatprep.subr.mxu0 0.0
    %2068 = vmatpush1.msra.mxu0 0.0
    %2069 = vmatprep.subr.mxu0 0.0
    %2070 = vmatpush1.msra.mxu0 0.0
    %2071 = vmatprep.subr.mxu0 0.0
    %2072 = vmatpush1.msra.mxu0 0.0
    %2073 = vmatprep.subr.mxu0 0.0
    %2074 = vmatpush1.msra.mxu0 0.0
    %2075 = vmatprep.subr.mxu0 0.0
    %2076 = vmatpush1.msra.mxu0 0.0
    %2077 = vmatprep.subr.mxu0 0.0
    %2078 = vmatpush1.msra.mxu0 0.0
    %2079 = vmatprep.subr.mxu0 0.0
    %2080 = vmatpush1.msra.mxu0 0.0
    %2081 = vmatprep.subr.mxu0 0.0
    %2082 = vmatpush1.msra.mxu0 0.0
    %2083 = vmatprep.subr.mxu0 0.0
    %2084 = vmatpush1.msra.mxu0 0.0
    %2085 = vmatprep.subr.mxu0 0.0
    %2086 = vmatpush1.msra.mxu0 0.0
    %2087 = vmatprep.subr.mxu0 0.0
    %2088 = vmatpush1.msra.mxu0 0.0
    %2089 = vmatprep.mubr.f32.mxu0 0.0
    %v2090 = vand.u32 %v2019, 4294901760
    %v2091 = vsub.f32 %v2019, %v2090
    %v2092 = vand.u32 %v2091, 4294901760
    %v2093 = vsub.f32 %v2091, %v2092
    %v2094 = vand.u32 %v2093, 4294901760
    %2095 = vmatmul.mubr.f32.gmra.mrb[0].mxu0 %v2094
    %v2096 = vpop.f32.mrb[0].mxu0
    %v2097 = vadd.f32 0.0, %v2096
    %v2098 = vpop.f32.mrb[0].mxu0
    %2099 = vdwg.mxu0
    %2100 = vmatprep.subr.mxu0 0.0
    %v2101 = vand.u32 %v14, 4294901760
    %v2102 = vsub.f32 %v14, %v2101
    %v2103 = vand.u32 %v2102, 4294901760
    %v2104 = vsub.f32 %v2102, %v2103
    %v2105 = vand.u32 %v2104, 4294901760
    %2106 = vmatpush1.msra.mxu0 %v2105
    %2107 = vmatprep.subr.mxu0 0.0
    %v2108 = vand.u32 %v15, 4294901760
    %v2109 = vsub.f32 %v15, %v2108
    %v2110 = vand.u32 %v2109, 4294901760
    %v2111 = vsub.f32 %v2109, %v2110
    %v2112 = vand.u32 %v2111, 4294901760
    %2113 = vmatpush1.msra.mxu0 %v2112
    %2114 = vmatprep.subr.mxu0 0.0
    %v2115 = vand.u32 %v16, 4294901760
    %v2116 = vsub.f32 %v16, %v2115
    %v2117 = vand.u32 %v2116, 4294901760
    %v2118 = vsub.f32 %v2116, %v2117
    %v2119 = vand.u32 %v2118, 4294901760
    %2120 = vmatpush1.msra.mxu0 %v2119
    %2121 = vmatprep.subr.mxu0 0.0
    %v2122 = vand.u32 %v17, 4294901760
    %v2123 = vsub.f32 %v17, %v2122
    %v2124 = vand.u32 %v2123, 4294901760
    %v2125 = vsub.f32 %v2123, %v2124
    %v2126 = vand.u32 %v2125, 4294901760
    %2127 = vmatpush1.msra.mxu0 %v2126
    %2128 = vmatprep.subr.mxu0 0.0
    %2129 = vmatpush1.msra.mxu0 0.0
    %2130 = vmatprep.subr.mxu0 0.0
    %2131 = vmatpush1.msra.mxu0 0.0
    %2132 = vmatprep.subr.mxu0 0.0
    %2133 = vmatpush1.msra.mxu0 0.0
    %2134 = vmatprep.subr.mxu0 0.0
    %2135 = vmatpush1.msra.mxu0 0.0
    %2136 = vmatprep.subr.mxu0 0.0
    %2137 = vmatpush1.msra.mxu0 0.0
    %2138 = vmatprep.subr.mxu0 0.0
    %2139 = vmatpush1.msra.mxu0 0.0
    %2140 = vmatprep.subr.mxu0 0.0
    %2141 = vmatpush1.msra.mxu0 0.0
    %2142 = vmatprep.subr.mxu0 0.0
    %2143 = vmatpush1.msra.mxu0 0.0
    %2144 = vmatprep.subr.mxu0 0.0
    %2145 = vmatpush1.msra.mxu0 0.0
    %2146 = vmatprep.subr.mxu0 0.0
    %2147 = vmatpush1.msra.mxu0 0.0
    %2148 = vmatprep.subr.mxu0 0.0
    %2149 = vmatpush1.msra.mxu0 0.0
    %2150 = vmatprep.subr.mxu0 0.0
    %2151 = vmatpush1.msra.mxu0 0.0
    %2152 = vmatprep.subr.mxu0 0.0
    %2153 = vmatpush1.msra.mxu0 0.0
    %2154 = vmatprep.subr.mxu0 0.0
    %2155 = vmatpush1.msra.mxu0 0.0
    %2156 = vmatprep.subr.mxu0 0.0
    %2157 = vmatpush1.msra.mxu0 0.0
    %2158 = vmatprep.subr.mxu0 0.0
    %2159 = vmatpush1.msra.mxu0 0.0
    %2160 = vmatprep.subr.mxu0 0.0
    %2161 = vmatpush1.msra.mxu0 0.0
    %2162 = vmatprep.subr.mxu0 0.0
    %2163 = vmatpush1.msra.mxu0 0.0
    %2164 = vmatprep.subr.mxu0 0.0
    %2165 = vmatpush1.msra.mxu0 0.0
    %2166 = vmatprep.subr.mxu0 0.0
    %2167 = vmatpush1.msra.mxu0 0.0
    %2168 = vmatprep.subr.mxu0 0.0
    %2169 = vmatpush1.msra.mxu0 0.0
    %2170 = vmatprep.subr.mxu0 0.0
    %2171 = vmatpush1.msra.mxu0 0.0
    %2172 = vmatprep.subr.mxu0 0.0
    %2173 = vmatpush1.msra.mxu0 0.0
    %2174 = vmatprep.subr.mxu0 0.0
    %2175 = vmatpush1.msra.mxu0 0.0
    %2176 = vmatprep.subr.mxu0 0.0
    %2177 = vmatpush1.msra.mxu0 0.0
    %2178 = vmatprep.subr.mxu0 0.0
    %2179 = vmatpush1.msra.mxu0 0.0
    %2180 = vmatprep.subr.mxu0 0.0
    %2181 = vmatpush1.msra.mxu0 0.0
    %2182 = vmatprep.subr.mxu0 0.0
    %2183 = vmatpush1.msra.mxu0 0.0
    %2184 = vmatprep.mubr.f32.mxu0 0.0
    %v2185 = vand.u32 %v2019, 4294901760
    %2186 = vmatmul.mubr.f32.gmra.mrb[0].mxu0 %v2185
    %v2187 = vpop.f32.mrb[0].mxu0
    %v2188 = vadd.f32 %v2097, %v2187
    %v2189 = vpop.f32.mrb[0].mxu0
    %2190 = vdwg.mxu0
    %2191 = vmatprep.subr.mxu0 0.0
    %v2192 = vand.u32 %v14, 4294901760
    %v2193 = vsub.f32 %v14, %v2192
    %2194 = vmatpush1.msra.mxu0 %v2193
    %2195 = vmatprep.subr.mxu0 0.0
    %v2196 = vand.u32 %v15, 4294901760
    %v2197 = vsub.f32 %v15, %v2196
    %2198 = vmatpush1.msra.mxu0 %v2197
    %2199 = vmatprep.subr.mxu0 0.0
    %v2200 = vand.u32 %v16, 4294901760
    %v2201 = vsub.f32 %v16, %v2200
    %2202 = vmatpush1.msra.mxu0 %v2201
    %2203 = vmatprep.subr.mxu0 0.0
    %v2204 = vand.u32 %v17, 4294901760
    %v2205 = vsub.f32 %v17, %v2204
    %2206 = vmatpush1.msra.mxu0 %v2205
    %2207 = vmatprep.subr.mxu0 0.0
    %2208 = vmatpush1.msra.mxu0 0.0
    %2209 = vmatprep.subr.mxu0 0.0
    %2210 = vmatpush1.msra.mxu0 0.0
    %2211 = vmatprep.subr.mxu0 0.0
    %2212 = vmatpush1.msra.mxu0 0.0
    %2213 = vmatprep.subr.mxu0 0.0
    %2214 = vmatpush1.msra.mxu0 0.0
    %2215 = vmatprep.subr.mxu0 0.0
    %2216 = vmatpush1.msra.mxu0 0.0
    %2217 = vmatprep.subr.mxu0 0.0
    %2218 = vmatpush1.msra.mxu0 0.0
    %2219 = vmatprep.subr.mxu0 0.0
    %2220 = vmatpush1.msra.mxu0 0.0
    %2221 = vmatprep.subr.mxu0 0.0
    %2222 = vmatpush1.msra.mxu0 0.0
    %2223 = vmatprep.subr.mxu0 0.0
    %2224 = vmatpush1.msra.mxu0 0.0
    %2225 = vmatprep.subr.mxu0 0.0
    %2226 = vmatpush1.msra.mxu0 0.0
    %2227 = vmatprep.subr.mxu0 0.0
    %2228 = vmatpush1.msra.mxu0 0.0
    %2229 = vmatprep.subr.mxu0 0.0
    %2230 = vmatpush1.msra.mxu0 0.0
    %2231 = vmatprep.subr.mxu0 0.0
    %2232 = vmatpush1.msra.mxu0 0.0
    %2233 = vmatprep.subr.mxu0 0.0
    %2234 = vmatpush1.msra.mxu0 0.0
    %2235 = vmatprep.subr.mxu0 0.0
    %2236 = vmatpush1.msra.mxu0 0.0
    %2237 = vmatprep.subr.mxu0 0.0
    %2238 = vmatpush1.msra.mxu0 0.0
    %2239 = vmatprep.subr.mxu0 0.0
    %2240 = vmatpush1.msra.mxu0 0.0
    %2241 = vmatprep.subr.mxu0 0.0
    %2242 = vmatpush1.msra.mxu0 0.0
    %2243 = vmatprep.subr.mxu0 0.0
    %2244 = vmatpush1.msra.mxu0 0.0
    %2245 = vmatprep.subr.mxu0 0.0
    %2246 = vmatpush1.msra.mxu0 0.0
    %2247 = vmatprep.subr.mxu0 0.0
    %2248 = vmatpush1.msra.mxu0 0.0
    %2249 = vmatprep.subr.mxu0 0.0
    %2250 = vmatpush1.msra.mxu0 0.0
    %2251 = vmatprep.subr.mxu0 0.0
    %2252 = vmatpush1.msra.mxu0 0.0
    %2253 = vmatprep.subr.mxu0 0.0
    %2254 = vmatpush1.msra.mxu0 0.0
    %2255 = vmatprep.subr.mxu0 0.0
    %2256 = vmatpush1.msra.mxu0 0.0
    %2257 = vmatprep.subr.mxu0 0.0
    %2258 = vmatpush1.msra.mxu0 0.0
    %2259 = vmatprep.subr.mxu0 0.0
    %2260 = vmatpush1.msra.mxu0 0.0
    %2261 = vmatprep.subr.mxu0 0.0
    %2262 = vmatpush1.msra.mxu0 0.0
    %2263 = vmatprep.mubr.f32.mxu0 0.0
    %v2264 = vand.u32 %v2019, 4294901760
    %v2265 = vsub.f32 %v2019, %v2264
    %2266 = vmatmul.mubr.f32.gmra.mrb[0].mxu0 %v2265
    %v2267 = vpop.f32.mrb[0].mxu0
    %v2268 = vadd.f32 %v2188, %v2267
    %v2269 = vpop.f32.mrb[0].mxu0
    %2270 = vdwg.mxu0
    %2271 = vmatprep.subr.mxu0 0.0
    %v2272 = vand.u32 %v14, 4294901760
    %2273 = vmatpush1.msra.mxu0 %v2272
    %2274 = vmatprep.subr.mxu0 0.0
    %v2275 = vand.u32 %v15, 4294901760
    %2276 = vmatpush1.msra.mxu0 %v2275
    %2277 = vmatprep.subr.mxu0 0.0
    %v2278 = vand.u32 %v16, 4294901760
    %2279 = vmatpush1.msra.mxu0 %v2278
    %2280 = vmatprep.subr.mxu0 0.0
    %v2281 = vand.u32 %v17, 4294901760
    %2282 = vmatpush1.msra.mxu0 %v2281
    %2283 = vmatprep.subr.mxu0 0.0
    %2284 = vmatpush1.msra.mxu0 0.0
    %2285 = vmatprep.subr.mxu0 0.0
    %2286 = vmatpush1.msra.mxu0 0.0
    %2287 = vmatprep.subr.mxu0 0.0
    %2288 = vmatpush1.msra.mxu0 0.0
    %2289 = vmatprep.subr.mxu0 0.0
    %2290 = vmatpush1.msra.mxu0 0.0
    %2291 = vmatprep.subr.mxu0 0.0
    %2292 = vmatpush1.msra.mxu0 0.0
    %2293 = vmatprep.subr.mxu0 0.0
    %2294 = vmatpush1.msra.mxu0 0.0
    %2295 = vmatprep.subr.mxu0 0.0
    %2296 = vmatpush1.msra.mxu0 0.0
    %2297 = vmatprep.subr.mxu0 0.0
    %2298 = vmatpush1.msra.mxu0 0.0
    %2299 = vmatprep.subr.mxu0 0.0
    %2300 = vmatpush1.msra.mxu0 0.0
    %2301 = vmatprep.subr.mxu0 0.0
    %2302 = vmatpush1.msra.mxu0 0.0
    %2303 = vmatprep.subr.mxu0 0.0
    %2304 = vmatpush1.msra.mxu0 0.0
    %2305 = vmatprep.subr.mxu0 0.0
    %2306 = vmatpush1.msra.mxu0 0.0
    %2307 = vmatprep.subr.mxu0 0.0
    %2308 = vmatpush1.msra.mxu0 0.0
    %2309 = vmatprep.subr.mxu0 0.0
    %2310 = vmatpush1.msra.mxu0 0.0
    %2311 = vmatprep.subr.mxu0 0.0
    %2312 = vmatpush1.msra.mxu0 0.0
    %2313 = vmatprep.subr.mxu0 0.0
    %2314 = vmatpush1.msra.mxu0 0.0
    %2315 = vmatprep.subr.mxu0 0.0
    %2316 = vmatpush1.msra.mxu0 0.0
    %2317 = vmatprep.subr.mxu0 0.0
    %2318 = vmatpush1.msra.mxu0 0.0
    %2319 = vmatprep.subr.mxu0 0.0
    %2320 = vmatpush1.msra.mxu0 0.0
    %2321 = vmatprep.subr.mxu0 0.0
    %2322 = vmatpush1.msra.mxu0 0.0
    %2323 = vmatprep.subr.mxu0 0.0
    %2324 = vmatpush1.msra.mxu0 0.0
    %2325 = vmatprep.subr.mxu0 0.0
    %2326 = vmatpush1.msra.mxu0 0.0
    %2327 = vmatprep.subr.mxu0 0.0
    %2328 = vmatpush1.msra.mxu0 0.0
    %2329 = vmatprep.subr.mxu0 0.0
    %2330 = vmatpush1.msra.mxu0 0.0
    %2331 = vmatprep.subr.mxu0 0.0
    %2332 = vmatpush1.msra.mxu0 0.0
    %2333 = vmatprep.subr.mxu0 0.0
    %2334 = vmatpush1.msra.mxu0 0.0
    %2335 = vmatprep.subr.mxu0 0.0
    %2336 = vmatpush1.msra.mxu0 0.0
    %2337 = vmatprep.subr.mxu0 0.0
    %2338 = vmatpush1.msra.mxu0 0.0
    %2339 = vmatprep.mubr.f32.mxu0 0.0
    %v2340 = vand.u32 %v2019, 4294901760
    %v2341 = vsub.f32 %v2019, %v2340
    %v2342 = vand.u32 %v2341, 4294901760
    %2343 = vmatmul.mubr.f32.gmra.mrb[0].mxu0 %v2342
    %v2344 = vpop.f32.mrb[0].mxu0
    %v2345 = vadd.f32 %v2268, %v2344
    %v2346 = vpop.f32.mrb[0].mxu0
    %2347 = vdwg.mxu0
    %2348 = vmatprep.subr.mxu0 0.0
    %v2349 = vand.u32 %v14, 4294901760
    %v2350 = vsub.f32 %v14, %v2349
    %v2351 = vand.u32 %v2350, 4294901760
    %2352 = vmatpush1.msra.mxu0 %v2351
    %2353 = vmatprep.subr.mxu0 0.0
    %v2354 = vand.u32 %v15, 4294901760
    %v2355 = vsub.f32 %v15, %v2354
    %v2356 = vand.u32 %v2355, 4294901760
    %2357 = vmatpush1.msra.mxu0 %v2356
    %2358 = vmatprep.subr.mxu0 0.0
    %v2359 = vand.u32 %v16, 4294901760
    %v2360 = vsub.f32 %v16, %v2359
    %v2361 = vand.u32 %v2360, 4294901760
    %2362 = vmatpush1.msra.mxu0 %v2361
    %2363 = vmatprep.subr.mxu0 0.0
    %v2364 = vand.u32 %v17, 4294901760
    %v2365 = vsub.f32 %v17, %v2364
    %v2366 = vand.u32 %v2365, 4294901760
    %2367 = vmatpush1.msra.mxu0 %v2366
    %2368 = vmatprep.subr.mxu0 0.0
    %2369 = vmatpush1.msra.mxu0 0.0
    %2370 = vmatprep.subr.mxu0 0.0
    %2371 = vmatpush1.msra.mxu0 0.0
    %2372 = vmatprep.subr.mxu0 0.0
    %2373 = vmatpush1.msra.mxu0 0.0
    %2374 = vmatprep.subr.mxu0 0.0
    %2375 = vmatpush1.msra.mxu0 0.0
    %2376 = vmatprep.subr.mxu0 0.0
    %2377 = vmatpush1.msra.mxu0 0.0
    %2378 = vmatprep.subr.mxu0 0.0
    %2379 = vmatpush1.msra.mxu0 0.0
    %2380 = vmatprep.subr.mxu0 0.0
    %2381 = vmatpush1.msra.mxu0 0.0
    %2382 = vmatprep.subr.mxu0 0.0
    %2383 = vmatpush1.msra.mxu0 0.0
    %2384 = vmatprep.subr.mxu0 0.0
    %2385 = vmatpush1.msra.mxu0 0.0
    %2386 = vmatprep.subr.mxu0 0.0
    %2387 = vmatpush1.msra.mxu0 0.0
    %2388 = vmatprep.subr.mxu0 0.0
    %2389 = vmatpush1.msra.mxu0 0.0
    %2390 = vmatprep.subr.mxu0 0.0
    %2391 = vmatpush1.msra.mxu0 0.0
    %2392 = vmatprep.subr.mxu0 0.0
    %2393 = vmatpush1.msra.mxu0 0.0
    %2394 = vmatprep.subr.mxu0 0.0
    %2395 = vmatpush1.msra.mxu0 0.0
    %2396 = vmatprep.subr.mxu0 0.0
    %2397 = vmatpush1.msra.mxu0 0.0
    %2398 = vmatprep.subr.mxu0 0.0
    %2399 = vmatpush1.msra.mxu0 0.0
    %2400 = vmatprep.subr.mxu0 0.0
    %2401 = vmatpush1.msra.mxu0 0.0
    %2402 = vmatprep.subr.mxu0 0.0
    %2403 = vmatpush1.msra.mxu0 0.0
    %2404 = vmatprep.subr.mxu0 0.0
    %2405 = vmatpush1.msra.mxu0 0.0
    %2406 = vmatprep.subr.mxu0 0.0
    %2407 = vmatpush1.msra.mxu0 0.0
    %2408 = vmatprep.subr.mxu0 0.0
    %2409 = vmatpush1.msra.mxu0 0.0
    %2410 = vmatprep.subr.mxu0 0.0
    %2411 = vmatpush1.msra.mxu0 0.0
    %2412 = vmatprep.subr.mxu0 0.0
    %2413 = vmatpush1.msra.mxu0 0.0
    %2414 = vmatprep.subr.mxu0 0.0
    %2415 = vmatpush1.msra.mxu0 0.0
    %2416 = vmatprep.subr.mxu0 0.0
    %2417 = vmatpush1.msra.mxu0 0.0
    %2418 = vmatprep.subr.mxu0 0.0
    %2419 = vmatpush1.msra.mxu0 0.0
    %2420 = vmatprep.subr.mxu0 0.0
    %2421 = vmatpush1.msra.mxu0 0.0
    %2422 = vmatprep.subr.mxu0 0.0
    %2423 = vmatpush1.msra.mxu0 0.0
    %2424 = vmatprep.mubr.f32.mxu0 0.0
    %v2425 = vand.u32 %v2019, 4294901760
    %2426 = vmatmul.mubr.f32.gmra.mrb[0].mxu0 %v2425
    %v2427 = vpop.f32.mrb[0].mxu0
    %v2428 = vadd.f32 %v2345, %v2427
    %v2429 = vpop.f32.mrb[0].mxu0
    %2430 = vdwg.mxu0
    %2431 = vmatprep.subr.mxu0 0.0
    %v2432 = vand.u32 %v14, 4294901760
    %2433 = vmatpush1.msra.mxu0 %v2432
    %2434 = vmatprep.subr.mxu0 0.0
    %v2435 = vand.u32 %v15, 4294901760
    %2436 = vmatpush1.msra.mxu0 %v2435
    %2437 = vmatprep.subr.mxu0 0.0
    %v2438 = vand.u32 %v16, 4294901760
    %2439 = vmatpush1.msra.mxu0 %v2438
    %2440 = vmatprep.subr.mxu0 0.0
    %v2441 = vand.u32 %v17, 4294901760
    %2442 = vmatpush1.msra.mxu0 %v2441
    %2443 = vmatprep.subr.mxu0 0.0
    %2444 = vmatpush1.msra.mxu0 0.0
    %2445 = vmatprep.subr.mxu0 0.0
    %2446 = vmatpush1.msra.mxu0 0.0
    %2447 = vmatprep.subr.mxu0 0.0
    %2448 = vmatpush1.msra.mxu0 0.0
    %2449 = vmatprep.subr.mxu0 0.0
    %2450 = vmatpush1.msra.mxu0 0.0
    %2451 = vmatprep.subr.mxu0 0.0
    %2452 = vmatpush1.msra.mxu0 0.0
    %2453 = vmatprep.subr.mxu0 0.0
    %2454 = vmatpush1.msra.mxu0 0.0
    %2455 = vmatprep.subr.mxu0 0.0
    %2456 = vmatpush1.msra.mxu0 0.0
    %2457 = vmatprep.subr.mxu0 0.0
    %2458 = vmatpush1.msra.mxu0 0.0
    %2459 = vmatprep.subr.mxu0 0.0
    %2460 = vmatpush1.msra.mxu0 0.0
    %2461 = vmatprep.subr.mxu0 0.0
    %2462 = vmatpush1.msra.mxu0 0.0
    %2463 = vmatprep.subr.mxu0 0.0
    %2464 = vmatpush1.msra.mxu0 0.0
    %2465 = vmatprep.subr.mxu0 0.0
    %2466 = vmatpush1.msra.mxu0 0.0
    %2467 = vmatprep.subr.mxu0 0.0
    %2468 = vmatpush1.msra.mxu0 0.0
    %2469 = vmatprep.subr.mxu0 0.0
    %2470 = vmatpush1.msra.mxu0 0.0
    %2471 = vmatprep.subr.mxu0 0.0
    %2472 = vmatpush1.msra.mxu0 0.0
    %2473 = vmatprep.subr.mxu0 0.0
    %2474 = vmatpush1.msra.mxu0 0.0
    %2475 = vmatprep.subr.mxu0 0.0
    %2476 = vmatpush1.msra.mxu0 0.0
    %2477 = vmatprep.subr.mxu0 0.0
    %2478 = vmatpush1.msra.mxu0 0.0
    %2479 = vmatprep.subr.mxu0 0.0
    %2480 = vmatpush1.msra.mxu0 0.0
    %2481 = vmatprep.subr.mxu0 0.0
    %2482 = vmatpush1.msra.mxu0 0.0
    %2483 = vmatprep.subr.mxu0 0.0
    %2484 = vmatpush1.msra.mxu0 0.0
    %2485 = vmatprep.subr.mxu0 0.0
    %2486 = vmatpush1.msra.mxu0 0.0
    %2487 = vmatprep.subr.mxu0 0.0
    %2488 = vmatpush1.msra.mxu0 0.0
    %2489 = vmatprep.subr.mxu0 0.0
    %2490 = vmatpush1.msra.mxu0 0.0
    %2491 = vmatprep.subr.mxu0 0.0
    %2492 = vmatpush1.msra.mxu0 0.0
    %2493 = vmatprep.subr.mxu0 0.0
    %2494 = vmatpush1.msra.mxu0 0.0
    %2495 = vmatprep.subr.mxu0 0.0
    %2496 = vmatpush1.msra.mxu0 0.0
    %2497 = vmatprep.subr.mxu0 0.0
    %2498 = vmatpush1.msra.mxu0 0.0
    %2499 = vmatprep.mubr.f32.mxu0 0.0
    %v2500 = vand.u32 %v2019, 4294901760
    %2501 = vmatmul.mubr.f32.gmra.mrb[0].mxu0 %v2500
    %v2502 = vpop.f32.mrb[0].mxu0
    %v2503 = vadd.f32 %v2428, %v2502
    %v2504 = vpop.f32.mrb[0].mxu0
    %2505 = vdwg.mxu0
    %v2507 = vrot.slane %v2503, 2
    %v2509 = vadd.f32 %v530, %v2507
    %v2510 = vtanh.pop %v2509
    %v2512 = vrot.slane %v2510, 6
    %v2513 = vsel %vm539, %v2512, 0
    %2515 = vmatprep.subr.mxu0 0.0
    %v2516 = vand.u32 %v14, 4294901760
    %2517 = vmatpush1.msra.mxu0 %v2516
    %2518 = vmatprep.subr.mxu0 0.0
    %v2519 = vand.u32 %v15, 4294901760
    %2520 = vmatpush1.msra.mxu0 %v2519
    %2521 = vmatprep.subr.mxu0 0.0
    %v2522 = vand.u32 %v16, 4294901760
    %2523 = vmatpush1.msra.mxu0 %v2522
    %2524 = vmatprep.subr.mxu0 0.0
    %v2525 = vand.u32 %v17, 4294901760
    %2526 = vmatpush1.msra.mxu0 %v2525
    %2527 = vmatprep.subr.mxu0 0.0
    %2528 = vmatpush1.msra.mxu0 0.0
    %2529 = vmatprep.subr.mxu0 0.0
    %2530 = vmatpush1.msra.mxu0 0.0
    %2531 = vmatprep.subr.mxu0 0.0
    %2532 = vmatpush1.msra.mxu0 0.0
    %2533 = vmatprep.subr.mxu0 0.0
    %2534 = vmatpush1.msra.mxu0 0.0
    %2535 = vmatprep.subr.mxu0 0.0
    %2536 = vmatpush1.msra.mxu0 0.0
    %2537 = vmatprep.subr.mxu0 0.0
    %2538 = vmatpush1.msra.mxu0 0.0
    %2539 = vmatprep.subr.mxu0 0.0
    %2540 = vmatpush1.msra.mxu0 0.0
    %2541 = vmatprep.subr.mxu0 0.0
    %2542 = vmatpush1.msra.mxu0 0.0
    %2543 = vmatprep.subr.mxu0 0.0
    %2544 = vmatpush1.msra.mxu0 0.0
    %2545 = vmatprep.subr.mxu0 0.0
    %2546 = vmatpush1.msra.mxu0 0.0
    %2547 = vmatprep.subr.mxu0 0.0
    %2548 = vmatpush1.msra.mxu0 0.0
    %2549 = vmatprep.subr.mxu0 0.0
    %2550 = vmatpush1.msra.mxu0 0.0
    %2551 = vmatprep.subr.mxu0 0.0
    %2552 = vmatpush1.msra.mxu0 0.0
    %2553 = vmatprep.subr.mxu0 0.0
    %2554 = vmatpush1.msra.mxu0 0.0
    %2555 = vmatprep.subr.mxu0 0.0
    %2556 = vmatpush1.msra.mxu0 0.0
    %2557 = vmatprep.subr.mxu0 0.0
    %2558 = vmatpush1.msra.mxu0 0.0
    %2559 = vmatprep.subr.mxu0 0.0
    %2560 = vmatpush1.msra.mxu0 0.0
    %2561 = vmatprep.subr.mxu0 0.0
    %2562 = vmatpush1.msra.mxu0 0.0
    %2563 = vmatprep.subr.mxu0 0.0
    %2564 = vmatpush1.msra.mxu0 0.0
    %2565 = vmatprep.subr.mxu0 0.0
    %2566 = vmatpush1.msra.mxu0 0.0
    %2567 = vmatprep.subr.mxu0 0.0
    %2568 = vmatpush1.msra.mxu0 0.0
    %2569 = vmatprep.subr.mxu0 0.0
    %2570 = vmatpush1.msra.mxu0 0.0
    %2571 = vmatprep.subr.mxu0 0.0
    %2572 = vmatpush1.msra.mxu0 0.0
    %2573 = vmatprep.subr.mxu0 0.0
    %2574 = vmatpush1.msra.mxu0 0.0
    %2575 = vmatprep.subr.mxu0 0.0
    %2576 = vmatpush1.msra.mxu0 0.0
    %2577 = vmatprep.subr.mxu0 0.0
    %2578 = vmatpush1.msra.mxu0 0.0
    %2579 = vmatprep.subr.mxu0 0.0
    %2580 = vmatpush1.msra.mxu0 0.0
    %2581 = vmatprep.subr.mxu0 0.0
    %2582 = vmatpush1.msra.mxu0 0.0
    %2583 = vmatprep.mubr.f32.mxu0 0.0
    %v2584 = vand.u32 %v2513, 4294901760
    %v2585 = vsub.f32 %v2513, %v2584
    %v2586 = vand.u32 %v2585, 4294901760
    %v2587 = vsub.f32 %v2585, %v2586
    %v2588 = vand.u32 %v2587, 4294901760
    %2589 = vmatmul.mubr.f32.gmra.mrb[0].mxu0 %v2588
    %v2590 = vpop.f32.mrb[0].mxu0
    %v2591 = vadd.f32 0.0, %v2590
    %v2592 = vpop.f32.mrb[0].mxu0
    %2593 = vdwg.mxu0
    %2594 = vmatprep.subr.mxu0 0.0
    %v2595 = vand.u32 %v14, 4294901760
    %v2596 = vsub.f32 %v14, %v2595
    %v2597 = vand.u32 %v2596, 4294901760
    %v2598 = vsub.f32 %v2596, %v2597
    %v2599 = vand.u32 %v2598, 4294901760
    %2600 = vmatpush1.msra.mxu0 %v2599
    %2601 = vmatprep.subr.mxu0 0.0
    %v2602 = vand.u32 %v15, 4294901760
    %v2603 = vsub.f32 %v15, %v2602
    %v2604 = vand.u32 %v2603, 4294901760
    %v2605 = vsub.f32 %v2603, %v2604
    %v2606 = vand.u32 %v2605, 4294901760
    %2607 = vmatpush1.msra.mxu0 %v2606
    %2608 = vmatprep.subr.mxu0 0.0
    %v2609 = vand.u32 %v16, 4294901760
    %v2610 = vsub.f32 %v16, %v2609
    %v2611 = vand.u32 %v2610, 4294901760
    %v2612 = vsub.f32 %v2610, %v2611
    %v2613 = vand.u32 %v2612, 4294901760
    %2614 = vmatpush1.msra.mxu0 %v2613
    %2615 = vmatprep.subr.mxu0 0.0
    %v2616 = vand.u32 %v17, 4294901760
    %v2617 = vsub.f32 %v17, %v2616
    %v2618 = vand.u32 %v2617, 4294901760
    %v2619 = vsub.f32 %v2617, %v2618
    %v2620 = vand.u32 %v2619, 4294901760
    %2621 = vmatpush1.msra.mxu0 %v2620
    %2622 = vmatprep.subr.mxu0 0.0
    %2623 = vmatpush1.msra.mxu0 0.0
    %2624 = vmatprep.subr.mxu0 0.0
    %2625 = vmatpush1.msra.mxu0 0.0
    %2626 = vmatprep.subr.mxu0 0.0
    %2627 = vmatpush1.msra.mxu0 0.0
    %2628 = vmatprep.subr.mxu0 0.0
    %2629 = vmatpush1.msra.mxu0 0.0
    %2630 = vmatprep.subr.mxu0 0.0
    %2631 = vmatpush1.msra.mxu0 0.0
    %2632 = vmatprep.subr.mxu0 0.0
    %2633 = vmatpush1.msra.mxu0 0.0
    %2634 = vmatprep.subr.mxu0 0.0
    %2635 = vmatpush1.msra.mxu0 0.0
    %2636 = vmatprep.subr.mxu0 0.0
    %2637 = vmatpush1.msra.mxu0 0.0
    %2638 = vmatprep.subr.mxu0 0.0
    %2639 = vmatpush1.msra.mxu0 0.0
    %2640 = vmatprep.subr.mxu0 0.0
    %2641 = vmatpush1.msra.mxu0 0.0
    %2642 = vmatprep.subr.mxu0 0.0
    %2643 = vmatpush1.msra.mxu0 0.0
    %2644 = vmatprep.subr.mxu0 0.0
    %2645 = vmatpush1.msra.mxu0 0.0
    %2646 = vmatprep.subr.mxu0 0.0
    %2647 = vmatpush1.msra.mxu0 0.0
    %2648 = vmatprep.subr.mxu0 0.0
    %2649 = vmatpush1.msra.mxu0 0.0
    %2650 = vmatprep.subr.mxu0 0.0
    %2651 = vmatpush1.msra.mxu0 0.0
    %2652 = vmatprep.subr.mxu0 0.0
    %2653 = vmatpush1.msra.mxu0 0.0
    %2654 = vmatprep.subr.mxu0 0.0
    %2655 = vmatpush1.msra.mxu0 0.0
    %2656 = vmatprep.subr.mxu0 0.0
    %2657 = vmatpush1.msra.mxu0 0.0
    %2658 = vmatprep.subr.mxu0 0.0
    %2659 = vmatpush1.msra.mxu0 0.0
    %2660 = vmatprep.subr.mxu0 0.0
    %2661 = vmatpush1.msra.mxu0 0.0
    %2662 = vmatprep.subr.mxu0 0.0
    %2663 = vmatpush1.msra.mxu0 0.0
    %2664 = vmatprep.subr.mxu0 0.0
    %2665 = vmatpush1.msra.mxu0 0.0
    %2666 = vmatprep.subr.mxu0 0.0
    %2667 = vmatpush1.msra.mxu0 0.0
    %2668 = vmatprep.subr.mxu0 0.0
    %2669 = vmatpush1.msra.mxu0 0.0
    %2670 = vmatprep.subr.mxu0 0.0
    %2671 = vmatpush1.msra.mxu0 0.0
    %2672 = vmatprep.subr.mxu0 0.0
    %2673 = vmatpush1.msra.mxu0 0.0
    %2674 = vmatprep.subr.mxu0 0.0
    %2675 = vmatpush1.msra.mxu0 0.0
    %2676 = vmatprep.subr.mxu0 0.0
    %2677 = vmatpush1.msra.mxu0 0.0
    %2678 = vmatprep.mubr.f32.mxu0 0.0
    %v2679 = vand.u32 %v2513, 4294901760
    %2680 = vmatmul.mubr.f32.gmra.mrb[0].mxu0 %v2679
    %v2681 = vpop.f32.mrb[0].mxu0
    %v2682 = vadd.f32 %v2591, %v2681
    %v2683 = vpop.f32.mrb[0].mxu0
    %2684 = vdwg.mxu0
    %2685 = vmatprep.subr.mxu0 0.0
    %v2686 = vand.u32 %v14, 4294901760
    %v2687 = vsub.f32 %v14, %v2686
    %2688 = vmatpush1.msra.mxu0 %v2687
    %2689 = vmatprep.subr.mxu0 0.0
    %v2690 = vand.u32 %v15, 4294901760
    %v2691 = vsub.f32 %v15, %v2690
    %2692 = vmatpush1.msra.mxu0 %v2691
    %2693 = vmatprep.subr.mxu0 0.0
    %v2694 = vand.u32 %v16, 4294901760
    %v2695 = vsub.f32 %v16, %v2694
    %2696 = vmatpush1.msra.mxu0 %v2695
    %2697 = vmatprep.subr.mxu0 0.0
    %v2698 = vand.u32 %v17, 4294901760
    %v2699 = vsub.f32 %v17, %v2698
    %2700 = vmatpush1.msra.mxu0 %v2699
    %2701 = vmatprep.subr.mxu0 0.0
    %2702 = vmatpush1.msra.mxu0 0.0
    %2703 = vmatprep.subr.mxu0 0.0
    %2704 = vmatpush1.msra.mxu0 0.0
    %2705 = vmatprep.subr.mxu0 0.0
    %2706 = vmatpush1.msra.mxu0 0.0
    %2707 = vmatprep.subr.mxu0 0.0
    %2708 = vmatpush1.msra.mxu0 0.0
    %2709 = vmatprep.subr.mxu0 0.0
    %2710 = vmatpush1.msra.mxu0 0.0
    %2711 = vmatprep.subr.mxu0 0.0
    %2712 = vmatpush1.msra.mxu0 0.0
    %2713 = vmatprep.subr.mxu0 0.0
    %2714 = vmatpush1.msra.mxu0 0.0
    %2715 = vmatprep.subr.mxu0 0.0
    %2716 = vmatpush1.msra.mxu0 0.0
    %2717 = vmatprep.subr.mxu0 0.0
    %2718 = vmatpush1.msra.mxu0 0.0
    %2719 = vmatprep.subr.mxu0 0.0
    %2720 = vmatpush1.msra.mxu0 0.0
    %2721 = vmatprep.subr.mxu0 0.0
    %2722 = vmatpush1.msra.mxu0 0.0
    %2723 = vmatprep.subr.mxu0 0.0
    %2724 = vmatpush1.msra.mxu0 0.0
    %2725 = vmatprep.subr.mxu0 0.0
    %2726 = vmatpush1.msra.mxu0 0.0
    %2727 = vmatprep.subr.mxu0 0.0
    %2728 = vmatpush1.msra.mxu0 0.0
    %2729 = vmatprep.subr.mxu0 0.0
    %2730 = vmatpush1.msra.mxu0 0.0
    %2731 = vmatprep.subr.mxu0 0.0
    %2732 = vmatpush1.msra.mxu0 0.0
    %2733 = vmatprep.subr.mxu0 0.0
    %2734 = vmatpush1.msra.mxu0 0.0
    %2735 = vmatprep.subr.mxu0 0.0
    %2736 = vmatpush1.msra.mxu0 0.0
    %2737 = vmatprep.subr.mxu0 0.0
    %2738 = vmatpush1.msra.mxu0 0.0
    %2739 = vmatprep.subr.mxu0 0.0
    %2740 = vmatpush1.msra.mxu0 0.0
    %2741 = vmatprep.subr.mxu0 0.0
    %2742 = vmatpush1.msra.mxu0 0.0
    %2743 = vmatprep.subr.mxu0 0.0
    %2744 = vmatpush1.msra.mxu0 0.0
    %2745 = vmatprep.subr.mxu0 0.0
    %2746 = vmatpush1.msra.mxu0 0.0
    %2747 = vmatprep.subr.mxu0 0.0
    %2748 = vmatpush1.msra.mxu0 0.0
    %2749 = vmatprep.subr.mxu0 0.0
    %2750 = vmatpush1.msra.mxu0 0.0
    %2751 = vmatprep.subr.mxu0 0.0
    %2752 = vmatpush1.msra.mxu0 0.0
    %2753 = vmatprep.subr.mxu0 0.0
    %2754 = vmatpush1.msra.mxu0 0.0
    %2755 = vmatprep.subr.mxu0 0.0
    %2756 = vmatpush1.msra.mxu0 0.0
    %2757 = vmatprep.mubr.f32.mxu0 0.0
    %v2758 = vand.u32 %v2513, 4294901760
    %v2759 = vsub.f32 %v2513, %v2758
    %2760 = vmatmul.mubr.f32.gmra.mrb[0].mxu0 %v2759
    %v2761 = vpop.f32.mrb[0].mxu0
    %v2762 = vadd.f32 %v2682, %v2761
    %v2763 = vpop.f32.mrb[0].mxu0
    %2764 = vdwg.mxu0
    %2765 = vmatprep.subr.mxu0 0.0
    %v2766 = vand.u32 %v14, 4294901760
    %2767 = vmatpush1.msra.mxu0 %v2766
    %2768 = vmatprep.subr.mxu0 0.0
    %v2769 = vand.u32 %v15, 4294901760
    %2770 = vmatpush1.msra.mxu0 %v2769
    %2771 = vmatprep.subr.mxu0 0.0
    %v2772 = vand.u32 %v16, 4294901760
    %2773 = vmatpush1.msra.mxu0 %v2772
    %2774 = vmatprep.subr.mxu0 0.0
    %v2775 = vand.u32 %v17, 4294901760
    %2776 = vmatpush1.msra.mxu0 %v2775
    %2777 = vmatprep.subr.mxu0 0.0
    %2778 = vmatpush1.msra.mxu0 0.0
    %2779 = vmatprep.subr.mxu0 0.0
    %2780 = vmatpush1.msra.mxu0 0.0
    %2781 = vmatprep.subr.mxu0 0.0
    %2782 = vmatpush1.msra.mxu0 0.0
    %2783 = vmatprep.subr.mxu0 0.0
    %2784 = vmatpush1.msra.mxu0 0.0
    %2785 = vmatprep.subr.mxu0 0.0
    %2786 = vmatpush1.msra.mxu0 0.0
    %2787 = vmatprep.subr.mxu0 0.0
    %2788 = vmatpush1.msra.mxu0 0.0
    %2789 = vmatprep.subr.mxu0 0.0
    %2790 = vmatpush1.msra.mxu0 0.0
    %2791 = vmatprep.subr.mxu0 0.0
    %2792 = vmatpush1.msra.mxu0 0.0
    %2793 = vmatprep.subr.mxu0 0.0
    %2794 = vmatpush1.msra.mxu0 0.0
    %2795 = vmatprep.subr.mxu0 0.0
    %2796 = vmatpush1.msra.mxu0 0.0
    %2797 = vmatprep.subr.mxu0 0.0
    %2798 = vmatpush1.msra.mxu0 0.0
    %2799 = vmatprep.subr.mxu0 0.0
    %2800 = vmatpush1.msra.mxu0 0.0
    %2801 = vmatprep.subr.mxu0 0.0
    %2802 = vmatpush1.msra.mxu0 0.0
    %2803 = vmatprep.subr.mxu0 0.0
    %2804 = vmatpush1.msra.mxu0 0.0
    %2805 = vmatprep.subr.mxu0 0.0
    %2806 = vmatpush1.msra.mxu0 0.0
    %2807 = vmatprep.subr.mxu0 0.0
    %2808 = vmatpush1.msra.mxu0 0.0
    %2809 = vmatprep.subr.mxu0 0.0
    %2810 = vmatpush1.msra.mxu0 0.0
    %2811 = vmatprep.subr.mxu0 0.0
    %2812 = vmatpush1.msra.mxu0 0.0
    %2813 = vmatprep.subr.mxu0 0.0
    %2814 = vmatpush1.msra.mxu0 0.0
    %2815 = vmatprep.subr.mxu0 0.0
    %2816 = vmatpush1.msra.mxu0 0.0
    %2817 = vmatprep.subr.mxu0 0.0
    %2818 = vmatpush1.msra.mxu0 0.0
    %2819 = vmatprep.subr.mxu0 0.0
    %2820 = vmatpush1.msra.mxu0 0.0
    %2821 = vmatprep.subr.mxu0 0.0
    %2822 = vmatpush1.msra.mxu0 0.0
    %2823 = vmatprep.subr.mxu0 0.0
    %2824 = vmatpush1.msra.mxu0 0.0
    %2825 = vmatprep.subr.mxu0 0.0
    %2826 = vmatpush1.msra.mxu0 0.0
    %2827 = vmatprep.subr.mxu0 0.0
    %2828 = vmatpush1.msra.mxu0 0.0
    %2829 = vmatprep.subr.mxu0 0.0
    %2830 = vmatpush1.msra.mxu0 0.0
    %2831 = vmatprep.subr.mxu0 0.0
    %2832 = vmatpush1.msra.mxu0 0.0
    %2833 = vmatprep.mubr.f32.mxu0 0.0
    %v2834 = vand.u32 %v2513, 4294901760
    %v2835 = vsub.f32 %v2513, %v2834
    %v2836 = vand.u32 %v2835, 4294901760
    %2837 = vmatmul.mubr.f32.gmra.mrb[0].mxu0 %v2836
    %v2838 = vpop.f32.mrb[0].mxu0
    %v2839 = vadd.f32 %v2762, %v2838
    %v2840 = vpop.f32.mrb[0].mxu0
    %2841 = vdwg.mxu0
    %2842 = vmatprep.subr.mxu0 0.0
    %v2843 = vand.u32 %v14, 4294901760
    %v2844 = vsub.f32 %v14, %v2843
    %v2845 = vand.u32 %v2844, 4294901760
    %2846 = vmatpush1.msra.mxu0 %v2845
    %2847 = vmatprep.subr.mxu0 0.0
    %v2848 = vand.u32 %v15, 4294901760
    %v2849 = vsub.f32 %v15, %v2848
    %v2850 = vand.u32 %v2849, 4294901760
    %2851 = vmatpush1.msra.mxu0 %v2850
    %2852 = vmatprep.subr.mxu0 0.0
    %v2853 = vand.u32 %v16, 4294901760
    %v2854 = vsub.f32 %v16, %v2853
    %v2855 = vand.u32 %v2854, 4294901760
    %2856 = vmatpush1.msra.mxu0 %v2855
    %2857 = vmatprep.subr.mxu0 0.0
    %v2858 = vand.u32 %v17, 4294901760
    %v2859 = vsub.f32 %v17, %v2858
    %v2860 = vand.u32 %v2859, 4294901760
    %2861 = vmatpush1.msra.mxu0 %v2860
    %2862 = vmatprep.subr.mxu0 0.0
    %2863 = vmatpush1.msra.mxu0 0.0
    %2864 = vmatprep.subr.mxu0 0.0
    %2865 = vmatpush1.msra.mxu0 0.0
    %2866 = vmatprep.subr.mxu0 0.0
    %2867 = vmatpush1.msra.mxu0 0.0
    %2868 = vmatprep.subr.mxu0 0.0
    %2869 = vmatpush1.msra.mxu0 0.0
    %2870 = vmatprep.subr.mxu0 0.0
    %2871 = vmatpush1.msra.mxu0 0.0
    %2872 = vmatprep.subr.mxu0 0.0
    %2873 = vmatpush1.msra.mxu0 0.0
    %2874 = vmatprep.subr.mxu0 0.0
    %2875 = vmatpush1.msra.mxu0 0.0
    %2876 = vmatprep.subr.mxu0 0.0
    %2877 = vmatpush1.msra.mxu0 0.0
    %2878 = vmatprep.subr.mxu0 0.0
    %2879 = vmatpush1.msra.mxu0 0.0
    %2880 = vmatprep.subr.mxu0 0.0
    %2881 = vmatpush1.msra.mxu0 0.0
    %2882 = vmatprep.subr.mxu0 0.0
    %2883 = vmatpush1.msra.mxu0 0.0
    %2884 = vmatprep.subr.mxu0 0.0
    %2885 = vmatpush1.msra.mxu0 0.0
    %2886 = vmatprep.subr.mxu0 0.0
    %2887 = vmatpush1.msra.mxu0 0.0
    %2888 = vmatprep.subr.mxu0 0.0
    %2889 = vmatpush1.msra.mxu0 0.0
    %2890 = vmatprep.subr.mxu0 0.0
    %2891 = vmatpush1.msra.mxu0 0.0
    %2892 = vmatprep.subr.mxu0 0.0
    %2893 = vmatpush1.msra.mxu0 0.0
    %2894 = vmatprep.subr.mxu0 0.0
    %2895 = vmatpush1.msra.mxu0 0.0
    %2896 = vmatprep.subr.mxu0 0.0
    %2897 = vmatpush1.msra.mxu0 0.0
    %2898 = vmatprep.subr.mxu0 0.0
    %2899 = vmatpush1.msra.mxu0 0.0
    %2900 = vmatprep.subr.mxu0 0.0
    %2901 = vmatpush1.msra.mxu0 0.0
    %2902 = vmatprep.subr.mxu0 0.0
    %2903 = vmatpush1.msra.mxu0 0.0
    %2904 = vmatprep.subr.mxu0 0.0
    %2905 = vmatpush1.msra.mxu0 0.0
    %2906 = vmatprep.subr.mxu0 0.0
    %2907 = vmatpush1.msra.mxu0 0.0
    %2908 = vmatprep.subr.mxu0 0.0
    %2909 = vmatpush1.msra.mxu0 0.0
    %2910 = vmatprep.subr.mxu0 0.0
    %2911 = vmatpush1.msra.mxu0 0.0
    %2912 = vmatprep.subr.mxu0 0.0
    %2913 = vmatpush1.msra.mxu0 0.0
    %2914 = vmatprep.subr.mxu0 0.0
    %2915 = vmatpush1.msra.mxu0 0.0
    %2916 = vmatprep.subr.mxu0 0.0
    %2917 = vmatpush1.msra.mxu0 0.0
    %2918 = vmatprep.mubr.f32.mxu0 0.0
    %v2919 = vand.u32 %v2513, 4294901760
    %2920 = vmatmul.mubr.f32.gmra.mrb[0].mxu0 %v2919
    %v2921 = vpop.f32.mrb[0].mxu0
    %v2922 = vadd.f32 %v2839, %v2921
    %v2923 = vpop.f32.mrb[0].mxu0
    %2924 = vdwg.mxu0
    %2925 = vmatprep.subr.mxu0 0.0
    %v2926 = vand.u32 %v14, 4294901760
    %2927 = vmatpush1.msra.mxu0 %v2926
    %2928 = vmatprep.subr.mxu0 0.0
    %v2929 = vand.u32 %v15, 4294901760
    %2930 = vmatpush1.msra.mxu0 %v2929
    %2931 = vmatprep.subr.mxu0 0.0
    %v2932 = vand.u32 %v16, 4294901760
    %2933 = vmatpush1.msra.mxu0 %v2932
    %2934 = vmatprep.subr.mxu0 0.0
    %v2935 = vand.u32 %v17, 4294901760
    %2936 = vmatpush1.msra.mxu0 %v2935
    %2937 = vmatprep.subr.mxu0 0.0
    %2938 = vmatpush1.msra.mxu0 0.0
    %2939 = vmatprep.subr.mxu0 0.0
    %2940 = vmatpush1.msra.mxu0 0.0
    %2941 = vmatprep.subr.mxu0 0.0
    %2942 = vmatpush1.msra.mxu0 0.0
    %2943 = vmatprep.subr.mxu0 0.0
    %2944 = vmatpush1.msra.mxu0 0.0
    %2945 = vmatprep.subr.mxu0 0.0
    %2946 = vmatpush1.msra.mxu0 0.0
    %2947 = vmatprep.subr.mxu0 0.0
    %2948 = vmatpush1.msra.mxu0 0.0
    %2949 = vmatprep.subr.mxu0 0.0
    %2950 = vmatpush1.msra.mxu0 0.0
    %2951 = vmatprep.subr.mxu0 0.0
    %2952 = vmatpush1.msra.mxu0 0.0
    %2953 = vmatprep.subr.mxu0 0.0
    %2954 = vmatpush1.msra.mxu0 0.0
    %2955 = vmatprep.subr.mxu0 0.0
    %2956 = vmatpush1.msra.mxu0 0.0
    %2957 = vmatprep.subr.mxu0 0.0
    %2958 = vmatpush1.msra.mxu0 0.0
    %2959 = vmatprep.subr.mxu0 0.0
    %2960 = vmatpush1.msra.mxu0 0.0
    %2961 = vmatprep.subr.mxu0 0.0
    %2962 = vmatpush1.msra.mxu0 0.0
    %2963 = vmatprep.subr.mxu0 0.0
    %2964 = vmatpush1.msra.mxu0 0.0
    %2965 = vmatprep.subr.mxu0 0.0
    %2966 = vmatpush1.msra.mxu0 0.0
    %2967 = vmatprep.subr.mxu0 0.0
    %2968 = vmatpush1.msra.mxu0 0.0
    %2969 = vmatprep.subr.mxu0 0.0
    %2970 = vmatpush1.msra.mxu0 0.0
    %2971 = vmatprep.subr.mxu0 0.0
    %2972 = vmatpush1.msra.mxu0 0.0
    %2973 = vmatprep.subr.mxu0 0.0
    %2974 = vmatpush1.msra.mxu0 0.0
    %2975 = vmatprep.subr.mxu0 0.0
    %2976 = vmatpush1.msra.mxu0 0.0
    %2977 = vmatprep.subr.mxu0 0.0
    %2978 = vmatpush1.msra.mxu0 0.0
    %2979 = vmatprep.subr.mxu0 0.0
    %2980 = vmatpush1.msra.mxu0 0.0
    %2981 = vmatprep.subr.mxu0 0.0
    %2982 = vmatpush1.msra.mxu0 0.0
    %2983 = vmatprep.subr.mxu0 0.0
    %2984 = vmatpush1.msra.mxu0 0.0
    %2985 = vmatprep.subr.mxu0 0.0
    %2986 = vmatpush1.msra.mxu0 0.0
    %2987 = vmatprep.subr.mxu0 0.0
    %2988 = vmatpush1.msra.mxu0 0.0
    %2989 = vmatprep.subr.mxu0 0.0
    %2990 = vmatpush1.msra.mxu0 0.0
    %2991 = vmatprep.subr.mxu0 0.0
    %2992 = vmatpush1.msra.mxu0 0.0
    %2993 = vmatprep.mubr.f32.mxu0 0.0
    %v2994 = vand.u32 %v2513, 4294901760
    %2995 = vmatmul.mubr.f32.gmra.mrb[0].mxu0 %v2994
    %v2996 = vpop.f32.mrb[0].mxu0
    %v2997 = vadd.f32 %v2922, %v2996
    %v2998 = vpop.f32.mrb[0].mxu0
    %2999 = vdwg.mxu0
    %v3000 = vadd.f32 %v536, %v2997
    %v3001 = vtanh.pop %v3000
    %v3003 = vsel %vm539, %v3001, 0
    %3005 = vmatprep.subr.mxu0 0.0
    %v3006 = vand.u32 %v14, 4294901760
    %3007 = vmatpush1.msra.mxu0 %v3006
    %3008 = vmatprep.subr.mxu0 0.0
    %v3009 = vand.u32 %v15, 4294901760
    %3010 = vmatpush1.msra.mxu0 %v3009
    %3011 = vmatprep.subr.mxu0 0.0
    %v3012 = vand.u32 %v16, 4294901760
    %3013 = vmatpush1.msra.mxu0 %v3012
    %3014 = vmatprep.subr.mxu0 0.0
    %v3015 = vand.u32 %v17, 4294901760
    %3016 = vmatpush1.msra.mxu0 %v3015
    %3017 = vmatprep.subr.mxu0 0.0
    %3018 = vmatpush1.msra.mxu0 0.0
    %3019 = vmatprep.subr.mxu0 0.0
    %3020 = vmatpush1.msra.mxu0 0.0
    %3021 = vmatprep.subr.mxu0 0.0
    %3022 = vmatpush1.msra.mxu0 0.0
    %3023 = vmatprep.subr.mxu0 0.0
    %3024 = vmatpush1.msra.mxu0 0.0
    %3025 = vmatprep.subr.mxu0 0.0
    %3026 = vmatpush1.msra.mxu0 0.0
    %3027 = vmatprep.subr.mxu0 0.0
    %3028 = vmatpush1.msra.mxu0 0.0
    %3029 = vmatprep.subr.mxu0 0.0
    %3030 = vmatpush1.msra.mxu0 0.0
    %3031 = vmatprep.subr.mxu0 0.0
    %3032 = vmatpush1.msra.mxu0 0.0
    %3033 = vmatprep.subr.mxu0 0.0
    %3034 = vmatpush1.msra.mxu0 0.0
    %3035 = vmatprep.subr.mxu0 0.0
    %3036 = vmatpush1.msra.mxu0 0.0
    %3037 = vmatprep.subr.mxu0 0.0
    %3038 = vmatpush1.msra.mxu0 0.0
    %3039 = vmatprep.subr.mxu0 0.0
    %3040 = vmatpush1.msra.mxu0 0.0
    %3041 = vmatprep.subr.mxu0 0.0
    %3042 = vmatpush1.msra.mxu0 0.0
    %3043 = vmatprep.subr.mxu0 0.0
    %3044 = vmatpush1.msra.mxu0 0.0
    %3045 = vmatprep.subr.mxu0 0.0
    %3046 = vmatpush1.msra.mxu0 0.0
    %3047 = vmatprep.subr.mxu0 0.0
    %3048 = vmatpush1.msra.mxu0 0.0
    %3049 = vmatprep.subr.mxu0 0.0
    %3050 = vmatpush1.msra.mxu0 0.0
    %3051 = vmatprep.subr.mxu0 0.0
    %3052 = vmatpush1.msra.mxu0 0.0
    %3053 = vmatprep.subr.mxu0 0.0
    %3054 = vmatpush1.msra.mxu0 0.0
    %3055 = vmatprep.subr.mxu0 0.0
    %3056 = vmatpush1.msra.mxu0 0.0
    %3057 = vmatprep.subr.mxu0 0.0
    %3058 = vmatpush1.msra.mxu0 0.0
    %3059 = vmatprep.subr.mxu0 0.0
    %3060 = vmatpush1.msra.mxu0 0.0
    %3061 = vmatprep.subr.mxu0 0.0
    %3062 = vmatpush1.msra.mxu0 0.0
    %3063 = vmatprep.subr.mxu0 0.0
    %3064 = vmatpush1.msra.mxu0 0.0
    %3065 = vmatprep.subr.mxu0 0.0
    %3066 = vmatpush1.msra.mxu0 0.0
    %3067 = vmatprep.subr.mxu0 0.0
    %3068 = vmatpush1.msra.mxu0 0.0
    %3069 = vmatprep.subr.mxu0 0.0
    %3070 = vmatpush1.msra.mxu0 0.0
    %3071 = vmatprep.subr.mxu0 0.0
    %3072 = vmatpush1.msra.mxu0 0.0
    %3073 = vmatprep.mubr.f32.mxu0 0.0
    %v3074 = vand.u32 %v3003, 4294901760
    %v3075 = vsub.f32 %v3003, %v3074
    %v3076 = vand.u32 %v3075, 4294901760
    %v3077 = vsub.f32 %v3075, %v3076
    %v3078 = vand.u32 %v3077, 4294901760
    %3079 = vmatmul.mubr.f32.gmra.mrb[0].mxu0 %v3078
    %v3080 = vpop.f32.mrb[0].mxu0
    %v3081 = vadd.f32 0.0, %v3080
    %v3082 = vpop.f32.mrb[0].mxu0
    %3083 = vdwg.mxu0
    %3084 = vmatprep.subr.mxu0 0.0
    %v3085 = vand.u32 %v14, 4294901760
    %v3086 = vsub.f32 %v14, %v3085
    %v3087 = vand.u32 %v3086, 4294901760
    %v3088 = vsub.f32 %v3086, %v3087
    %v3089 = vand.u32 %v3088, 4294901760
    %3090 = vmatpush1.msra.mxu0 %v3089
    %3091 = vmatprep.subr.mxu0 0.0
    %v3092 = vand.u32 %v15, 4294901760
    %v3093 = vsub.f32 %v15, %v3092
    %v3094 = vand.u32 %v3093, 4294901760
    %v3095 = vsub.f32 %v3093, %v3094
    %v3096 = vand.u32 %v3095, 4294901760
    %3097 = vmatpush1.msra.mxu0 %v3096
    %3098 = vmatprep.subr.mxu0 0.0
    %v3099 = vand.u32 %v16, 4294901760
    %v3100 = vsub.f32 %v16, %v3099
    %v3101 = vand.u32 %v3100, 4294901760
    %v3102 = vsub.f32 %v3100, %v3101
    %v3103 = vand.u32 %v3102, 4294901760
    %3104 = vmatpush1.msra.mxu0 %v3103
    %3105 = vmatprep.subr.mxu0 0.0
    %v3106 = vand.u32 %v17, 4294901760
    %v3107 = vsub.f32 %v17, %v3106
    %v3108 = vand.u32 %v3107, 4294901760
    %v3109 = vsub.f32 %v3107, %v3108
    %v3110 = vand.u32 %v3109, 4294901760
    %3111 = vmatpush1.msra.mxu0 %v3110
    %3112 = vmatprep.subr.mxu0 0.0
    %3113 = vmatpush1.msra.mxu0 0.0
    %3114 = vmatprep.subr.mxu0 0.0
    %3115 = vmatpush1.msra.mxu0 0.0
    %3116 = vmatprep.subr.mxu0 0.0
    %3117 = vmatpush1.msra.mxu0 0.0
    %3118 = vmatprep.subr.mxu0 0.0
    %3119 = vmatpush1.msra.mxu0 0.0
    %3120 = vmatprep.subr.mxu0 0.0
    %3121 = vmatpush1.msra.mxu0 0.0
    %3122 = vmatprep.subr.mxu0 0.0
    %3123 = vmatpush1.msra.mxu0 0.0
    %3124 = vmatprep.subr.mxu0 0.0
    %3125 = vmatpush1.msra.mxu0 0.0
    %3126 = vmatprep.subr.mxu0 0.0
    %3127 = vmatpush1.msra.mxu0 0.0
    %3128 = vmatprep.subr.mxu0 0.0
    %3129 = vmatpush1.msra.mxu0 0.0
    %3130 = vmatprep.subr.mxu0 0.0
    %3131 = vmatpush1.msra.mxu0 0.0
    %3132 = vmatprep.subr.mxu0 0.0
    %3133 = vmatpush1.msra.mxu0 0.0
    %3134 = vmatprep.subr.mxu0 0.0
    %3135 = vmatpush1.msra.mxu0 0.0
    %3136 = vmatprep.subr.mxu0 0.0
    %3137 = vmatpush1.msra.mxu0 0.0
    %3138 = vmatprep.subr.mxu0 0.0
    %3139 = vmatpush1.msra.mxu0 0.0
    %3140 = vmatprep.subr.mxu0 0.0
    %3141 = vmatpush1.msra.mxu0 0.0
    %3142 = vmatprep.subr.mxu0 0.0
    %3143 = vmatpush1.msra.mxu0 0.0
    %3144 = vmatprep.subr.mxu0 0.0
    %3145 = vmatpush1.msra.mxu0 0.0
    %3146 = vmatprep.subr.mxu0 0.0
    %3147 = vmatpush1.msra.mxu0 0.0
    %3148 = vmatprep.subr.mxu0 0.0
    %3149 = vmatpush1.msra.mxu0 0.0
    %3150 = vmatprep.subr.mxu0 0.0
    %3151 = vmatpush1.msra.mxu0 0.0
    %3152 = vmatprep.subr.mxu0 0.0
    %3153 = vmatpush1.msra.mxu0 0.0
    %3154 = vmatprep.subr.mxu0 0.0
    %3155 = vmatpush1.msra.mxu0 0.0
    %3156 = vmatprep.subr.mxu0 0.0
    %3157 = vmatpush1.msra.mxu0 0.0
    %3158 = vmatprep.subr.mxu0 0.0
    %3159 = vmatpush1.msra.mxu0 0.0
    %3160 = vmatprep.subr.mxu0 0.0
    %3161 = vmatpush1.msra.mxu0 0.0
    %3162 = vmatprep.subr.mxu0 0.0
    %3163 = vmatpush1.msra.mxu0 0.0
    %3164 = vmatprep.subr.mxu0 0.0
    %3165 = vmatpush1.msra.mxu0 0.0
    %3166 = vmatprep.subr.mxu0 0.0
    %3167 = vmatpush1.msra.mxu0 0.0
    %3168 = vmatprep.mubr.f32.mxu0 0.0
    %v3169 = vand.u32 %v3003, 4294901760
    %3170 = vmatmul.mubr.f32.gmra.mrb[0].mxu0 %v3169
    %v3171 = vpop.f32.mrb[0].mxu0
    %v3172 = vadd.f32 %v3081, %v3171
    %v3173 = vpop.f32.mrb[0].mxu0
    %3174 = vdwg.mxu0
    %3175 = vmatprep.subr.mxu0 0.0
    %v3176 = vand.u32 %v14, 4294901760
    %v3177 = vsub.f32 %v14, %v3176
    %3178 = vmatpush1.msra.mxu0 %v3177
    %3179 = vmatprep.subr.mxu0 0.0
    %v3180 = vand.u32 %v15, 4294901760
    %v3181 = vsub.f32 %v15, %v3180
    %3182 = vmatpush1.msra.mxu0 %v3181
    %3183 = vmatprep.subr.mxu0 0.0
    %v3184 = vand.u32 %v16, 4294901760
    %v3185 = vsub.f32 %v16, %v3184
    %3186 = vmatpush1.msra.mxu0 %v3185
    %3187 = vmatprep.subr.mxu0 0.0
    %v3188 = vand.u32 %v17, 4294901760
    %v3189 = vsub.f32 %v17, %v3188
    %3190 = vmatpush1.msra.mxu0 %v3189
    %3191 = vmatprep.subr.mxu0 0.0
    %3192 = vmatpush1.msra.mxu0 0.0
    %3193 = vmatprep.subr.mxu0 0.0
    %3194 = vmatpush1.msra.mxu0 0.0
    %3195 = vmatprep.subr.mxu0 0.0
    %3196 = vmatpush1.msra.mxu0 0.0
    %3197 = vmatprep.subr.mxu0 0.0
    %3198 = vmatpush1.msra.mxu0 0.0
    %3199 = vmatprep.subr.mxu0 0.0
    %3200 = vmatpush1.msra.mxu0 0.0
    %3201 = vmatprep.subr.mxu0 0.0
    %3202 = vmatpush1.msra.mxu0 0.0
    %3203 = vmatprep.subr.mxu0 0.0
    %3204 = vmatpush1.msra.mxu0 0.0
    %3205 = vmatprep.subr.mxu0 0.0
    %3206 = vmatpush1.msra.mxu0 0.0
    %3207 = vmatprep.subr.mxu0 0.0
    %3208 = vmatpush1.msra.mxu0 0.0
    %3209 = vmatprep.subr.mxu0 0.0
    %3210 = vmatpush1.msra.mxu0 0.0
    %3211 = vmatprep.subr.mxu0 0.0
    %3212 = vmatpush1.msra.mxu0 0.0
    %3213 = vmatprep.subr.mxu0 0.0
    %3214 = vmatpush1.msra.mxu0 0.0
    %3215 = vmatprep.subr.mxu0 0.0
    %3216 = vmatpush1.msra.mxu0 0.0
    %3217 = vmatprep.subr.mxu0 0.0
    %3218 = vmatpush1.msra.mxu0 0.0
    %3219 = vmatprep.subr.mxu0 0.0
    %3220 = vmatpush1.msra.mxu0 0.0
    %3221 = vmatprep.subr.mxu0 0.0
    %3222 = vmatpush1.msra.mxu0 0.0
    %3223 = vmatprep.subr.mxu0 0.0
    %3224 = vmatpush1.msra.mxu0 0.0
    %3225 = vmatprep.subr.mxu0 0.0
    %3226 = vmatpush1.msra.mxu0 0.0
    %3227 = vmatprep.subr.mxu0 0.0
    %3228 = vmatpush1.msra.mxu0 0.0
    %3229 = vmatprep.subr.mxu0 0.0
    %3230 = vmatpush1.msra.mxu0 0.0
    %3231 = vmatprep.subr.mxu0 0.0
    %3232 = vmatpush1.msra.mxu0 0.0
    %3233 = vmatprep.subr.mxu0 0.0
    %3234 = vmatpush1.msra.mxu0 0.0
    %3235 = vmatprep.subr.mxu0 0.0
    %3236 = vmatpush1.msra.mxu0 0.0
    %3237 = vmatprep.subr.mxu0 0.0
    %3238 = vmatpush1.msra.mxu0 0.0
    %3239 = vmatprep.subr.mxu0 0.0
    %3240 = vmatpush1.msra.mxu0 0.0
    %3241 = vmatprep.subr.mxu0 0.0
    %3242 = vmatpush1.msra.mxu0 0.0
    %3243 = vmatprep.subr.mxu0 0.0
    %3244 = vmatpush1.msra.mxu0 0.0
    %3245 = vmatprep.subr.mxu0 0.0
    %3246 = vmatpush1.msra.mxu0 0.0
    %3247 = vmatprep.mubr.f32.mxu0 0.0
    %v3248 = vand.u32 %v3003, 4294901760
    %v3249 = vsub.f32 %v3003, %v3248
    %3250 = vmatmul.mubr.f32.gmra.mrb[0].mxu0 %v3249
    %v3251 = vpop.f32.mrb[0].mxu0
    %v3252 = vadd.f32 %v3172, %v3251
    %v3253 = vpop.f32.mrb[0].mxu0
    %3254 = vdwg.mxu0
    %3255 = vmatprep.subr.mxu0 0.0
    %v3256 = vand.u32 %v14, 4294901760
    %3257 = vmatpush1.msra.mxu0 %v3256
    %3258 = vmatprep.subr.mxu0 0.0
    %v3259 = vand.u32 %v15, 4294901760
    %3260 = vmatpush1.msra.mxu0 %v3259
    %3261 = vmatprep.subr.mxu0 0.0
    %v3262 = vand.u32 %v16, 4294901760
    %3263 = vmatpush1.msra.mxu0 %v3262
    %3264 = vmatprep.subr.mxu0 0.0
    %v3265 = vand.u32 %v17, 4294901760
    %3266 = vmatpush1.msra.mxu0 %v3265
    %3267 = vmatprep.subr.mxu0 0.0
    %3268 = vmatpush1.msra.mxu0 0.0
    %3269 = vmatprep.subr.mxu0 0.0
    %3270 = vmatpush1.msra.mxu0 0.0
    %3271 = vmatprep.subr.mxu0 0.0
    %3272 = vmatpush1.msra.mxu0 0.0
    %3273 = vmatprep.subr.mxu0 0.0
    %3274 = vmatpush1.msra.mxu0 0.0
    %3275 = vmatprep.subr.mxu0 0.0
    %3276 = vmatpush1.msra.mxu0 0.0
    %3277 = vmatprep.subr.mxu0 0.0
    %3278 = vmatpush1.msra.mxu0 0.0
    %3279 = vmatprep.subr.mxu0 0.0
    %3280 = vmatpush1.msra.mxu0 0.0
    %3281 = vmatprep.subr.mxu0 0.0
    %3282 = vmatpush1.msra.mxu0 0.0
    %3283 = vmatprep.subr.mxu0 0.0
    %3284 = vmatpush1.msra.mxu0 0.0
    %3285 = vmatprep.subr.mxu0 0.0
    %3286 = vmatpush1.msra.mxu0 0.0
    %3287 = vmatprep.subr.mxu0 0.0
    %3288 = vmatpush1.msra.mxu0 0.0
    %3289 = vmatprep.subr.mxu0 0.0
    %3290 = vmatpush1.msra.mxu0 0.0
    %3291 = vmatprep.subr.mxu0 0.0
    %3292 = vmatpush1.msra.mxu0 0.0
    %3293 = vmatprep.subr.mxu0 0.0
    %3294 = vmatpush1.msra.mxu0 0.0
    %3295 = vmatprep.subr.mxu0 0.0
    %3296 = vmatpush1.msra.mxu0 0.0
    %3297 = vmatprep.subr.mxu0 0.0
    %3298 = vmatpush1.msra.mxu0 0.0
    %3299 = vmatprep.subr.mxu0 0.0
    %3300 = vmatpush1.msra.mxu0 0.0
    %3301 = vmatprep.subr.mxu0 0.0
    %3302 = vmatpush1.msra.mxu0 0.0
    %3303 = vmatprep.subr.mxu0 0.0
    %3304 = vmatpush1.msra.mxu0 0.0
    %3305 = vmatprep.subr.mxu0 0.0
    %3306 = vmatpush1.msra.mxu0 0.0
    %3307 = vmatprep.subr.mxu0 0.0
    %3308 = vmatpush1.msra.mxu0 0.0
    %3309 = vmatprep.subr.mxu0 0.0
    %3310 = vmatpush1.msra.mxu0 0.0
    %3311 = vmatprep.subr.mxu0 0.0
    %3312 = vmatpush1.msra.mxu0 0.0
    %3313 = vmatprep.subr.mxu0 0.0
    %3314 = vmatpush1.msra.mxu0 0.0
    %3315 = vmatprep.subr.mxu0 0.0
    %3316 = vmatpush1.msra.mxu0 0.0
    %3317 = vmatprep.subr.mxu0 0.0
    %3318 = vmatpush1.msra.mxu0 0.0
    %3319 = vmatprep.subr.mxu0 0.0
    %3320 = vmatpush1.msra.mxu0 0.0
    %3321 = vmatprep.subr.mxu0 0.0
    %3322 = vmatpush1.msra.mxu0 0.0
    %3323 = vmatprep.mubr.f32.mxu0 0.0
    %v3324 = vand.u32 %v3003, 4294901760
    %v3325 = vsub.f32 %v3003, %v3324
    %v3326 = vand.u32 %v3325, 4294901760
    %3327 = vmatmul.mubr.f32.gmra.mrb[0].mxu0 %v3326
    %v3328 = vpop.f32.mrb[0].mxu0
    %v3329 = vadd.f32 %v3252, %v3328
    %v3330 = vpop.f32.mrb[0].mxu0
    %3331 = vdwg.mxu0
    %3332 = vmatprep.subr.mxu0 0.0
    %v3333 = vand.u32 %v14, 4294901760
    %v3334 = vsub.f32 %v14, %v3333
    %v3335 = vand.u32 %v3334, 4294901760
    %3336 = vmatpush1.msra.mxu0 %v3335
    %3337 = vmatprep.subr.mxu0 0.0
    %v3338 = vand.u32 %v15, 4294901760
    %v3339 = vsub.f32 %v15, %v3338
    %v3340 = vand.u32 %v3339, 4294901760
    %3341 = vmatpush1.msra.mxu0 %v3340
    %3342 = vmatprep.subr.mxu0 0.0
    %v3343 = vand.u32 %v16, 4294901760
    %v3344 = vsub.f32 %v16, %v3343
    %v3345 = vand.u32 %v3344, 4294901760
    %3346 = vmatpush1.msra.mxu0 %v3345
    %3347 = vmatprep.subr.mxu0 0.0
    %v3348 = vand.u32 %v17, 4294901760
    %v3349 = vsub.f32 %v17, %v3348
    %v3350 = vand.u32 %v3349, 4294901760
    %3351 = vmatpush1.msra.mxu0 %v3350
    %3352 = vmatprep.subr.mxu0 0.0
    %3353 = vmatpush1.msra.mxu0 0.0
    %3354 = vmatprep.subr.mxu0 0.0
    %3355 = vmatpush1.msra.mxu0 0.0
    %3356 = vmatprep.subr.mxu0 0.0
    %3357 = vmatpush1.msra.mxu0 0.0
    %3358 = vmatprep.subr.mxu0 0.0
    %3359 = vmatpush1.msra.mxu0 0.0
    %3360 = vmatprep.subr.mxu0 0.0
    %3361 = vmatpush1.msra.mxu0 0.0
    %3362 = vmatprep.subr.mxu0 0.0
    %3363 = vmatpush1.msra.mxu0 0.0
    %3364 = vmatprep.subr.mxu0 0.0
    %3365 = vmatpush1.msra.mxu0 0.0
    %3366 = vmatprep.subr.mxu0 0.0
    %3367 = vmatpush1.msra.mxu0 0.0
    %3368 = vmatprep.subr.mxu0 0.0
    %3369 = vmatpush1.msra.mxu0 0.0
    %3370 = vmatprep.subr.mxu0 0.0
    %3371 = vmatpush1.msra.mxu0 0.0
    %3372 = vmatprep.subr.mxu0 0.0
    %3373 = vmatpush1.msra.mxu0 0.0
    %3374 = vmatprep.subr.mxu0 0.0
    %3375 = vmatpush1.msra.mxu0 0.0
    %3376 = vmatprep.subr.mxu0 0.0
    %3377 = vmatpush1.msra.mxu0 0.0
    %3378 = vmatprep.subr.mxu0 0.0
    %3379 = vmatpush1.msra.mxu0 0.0
    %3380 = vmatprep.subr.mxu0 0.0
    %3381 = vmatpush1.msra.mxu0 0.0
    %3382 = vmatprep.subr.mxu0 0.0
    %3383 = vmatpush1.msra.mxu0 0.0
    %3384 = vmatprep.subr.mxu0 0.0
    %3385 = vmatpush1.msra.mxu0 0.0
    %3386 = vmatprep.subr.mxu0 0.0
    %3387 = vmatpush1.msra.mxu0 0.0
    %3388 = vmatprep.subr.mxu0 0.0
    %3389 = vmatpush1.msra.mxu0 0.0
    %3390 = vmatprep.subr.mxu0 0.0
    %3391 = vmatpush1.msra.mxu0 0.0
    %3392 = vmatprep.subr.mxu0 0.0
    %3393 = vmatpush1.msra.mxu0 0.0
    %3394 = vmatprep.subr.mxu0 0.0
    %3395 = vmatpush1.msra.mxu0 0.0
    %3396 = vmatprep.subr.mxu0 0.0
    %3397 = vmatpush1.msra.mxu0 0.0
    %3398 = vmatprep.subr.mxu0 0.0
    %3399 = vmatpush1.msra.mxu0 0.0
    %3400 = vmatprep.subr.mxu0 0.0
    %3401 = vmatpush1.msra.mxu0 0.0
    %3402 = vmatprep.subr.mxu0 0.0
    %3403 = vmatpush1.msra.mxu0 0.0
    %3404 = vmatprep.subr.mxu0 0.0
    %3405 = vmatpush1.msra.mxu0 0.0
    %3406 = vmatprep.subr.mxu0 0.0
    %3407 = vmatpush1.msra.mxu0 0.0
    %3408 = vmatprep.mubr.f32.mxu0 0.0
    %v3409 = vand.u32 %v3003, 4294901760
    %3410 = vmatmul.mubr.f32.gmra.mrb[0].mxu0 %v3409
    %v3411 = vpop.f32.mrb[0].mxu0
    %v3412 = vadd.f32 %v3329, %v3411
    %v3413 = vpop.f32.mrb[0].mxu0
    %3414 = vdwg.mxu0
    %3415 = vmatprep.subr.mxu0 0.0
    %v3416 = vand.u32 %v14, 4294901760
    %3417 = vmatpush1.msra.mxu0 %v3416
    %3418 = vmatprep.subr.mxu0 0.0
    %v3419 = vand.u32 %v15, 4294901760
    %3420 = vmatpush1.msra.mxu0 %v3419
    %3421 = vmatprep.subr.mxu0 0.0
    %v3422 = vand.u32 %v16, 4294901760
    %3423 = vmatpush1.msra.mxu0 %v3422
    %3424 = vmatprep.subr.mxu0 0.0
    %v3425 = vand.u32 %v17, 4294901760
    %3426 = vmatpush1.msra.mxu0 %v3425
    %3427 = vmatprep.subr.mxu0 0.0
    %3428 = vmatpush1.msra.mxu0 0.0
    %3429 = vmatprep.subr.mxu0 0.0
    %3430 = vmatpush1.msra.mxu0 0.0
    %3431 = vmatprep.subr.mxu0 0.0
    %3432 = vmatpush1.msra.mxu0 0.0
    %3433 = vmatprep.subr.mxu0 0.0
    %3434 = vmatpush1.msra.mxu0 0.0
    %3435 = vmatprep.subr.mxu0 0.0
    %3436 = vmatpush1.msra.mxu0 0.0
    %3437 = vmatprep.subr.mxu0 0.0
    %3438 = vmatpush1.msra.mxu0 0.0
    %3439 = vmatprep.subr.mxu0 0.0
    %3440 = vmatpush1.msra.mxu0 0.0
    %3441 = vmatprep.subr.mxu0 0.0
    %3442 = vmatpush1.msra.mxu0 0.0
    %3443 = vmatprep.subr.mxu0 0.0
    %3444 = vmatpush1.msra.mxu0 0.0
    %3445 = vmatprep.subr.mxu0 0.0
    %3446 = vmatpush1.msra.mxu0 0.0
    %3447 = vmatprep.subr.mxu0 0.0
    %3448 = vmatpush1.msra.mxu0 0.0
    %3449 = vmatprep.subr.mxu0 0.0
    %3450 = vmatpush1.msra.mxu0 0.0
    %3451 = vmatprep.subr.mxu0 0.0
    %3452 = vmatpush1.msra.mxu0 0.0
    %3453 = vmatprep.subr.mxu0 0.0
    %3454 = vmatpush1.msra.mxu0 0.0
    %3455 = vmatprep.subr.mxu0 0.0
    %3456 = vmatpush1.msra.mxu0 0.0
    %3457 = vmatprep.subr.mxu0 0.0
    %3458 = vmatpush1.msra.mxu0 0.0
    %3459 = vmatprep.subr.mxu0 0.0
    %3460 = vmatpush1.msra.mxu0 0.0
    %3461 = vmatprep.subr.mxu0 0.0
    %3462 = vmatpush1.msra.mxu0 0.0
    %3463 = vmatprep.subr.mxu0 0.0
    %3464 = vmatpush1.msra.mxu0 0.0
    %3465 = vmatprep.subr.mxu0 0.0
    %3466 = vmatpush1.msra.mxu0 0.0
    %3467 = vmatprep.subr.mxu0 0.0
    %3468 = vmatpush1.msra.mxu0 0.0
    %3469 = vmatprep.subr.mxu0 0.0
    %3470 = vmatpush1.msra.mxu0 0.0
    %3471 = vmatprep.subr.mxu0 0.0
    %3472 = vmatpush1.msra.mxu0 0.0
    %3473 = vmatprep.subr.mxu0 0.0
    %3474 = vmatpush1.msra.mxu0 0.0
    %3475 = vmatprep.subr.mxu0 0.0
    %3476 = vmatpush1.msra.mxu0 0.0
    %3477 = vmatprep.subr.mxu0 0.0
    %3478 = vmatpush1.msra.mxu0 0.0
    %3479 = vmatprep.subr.mxu0 0.0
    %3480 = vmatpush1.msra.mxu0 0.0
    %3481 = vmatprep.subr.mxu0 0.0
    %3482 = vmatpush1.msra.mxu0 0.0
    %3483 = vmatprep.mubr.f32.mxu0 0.0
    %v3484 = vand.u32 %v3003, 4294901760
    %3485 = vmatmul.mubr.f32.gmra.mrb[0].mxu0 %v3484
    %v3486 = vpop.f32.mrb[0].mxu0
    %v3487 = vadd.f32 %v3412, %v3486
    %v3488 = vpop.f32.mrb[0].mxu0
    %3489 = vdwg.mxu0
    %v3491 = vrot.slane %v3487, 6
    %v3493 = vadd.f32 %v536, %v3491
    %v3494 = vtanh.pop %v3493
    %v3496 = vrot.slane %v3494, 2
    %v3497 = vsel %vm539, %v3496, 0
    %3499 = vmatprep.subr.mxu0 0.0
    %v3500 = vand.u32 %v14, 4294901760
    %3501 = vmatpush1.msra.mxu0 %v3500
    %3502 = vmatprep.subr.mxu0 0.0
    %v3503 = vand.u32 %v15, 4294901760
    %3504 = vmatpush1.msra.mxu0 %v3503
    %3505 = vmatprep.subr.mxu0 0.0
    %v3506 = vand.u32 %v16, 4294901760
    %3507 = vmatpush1.msra.mxu0 %v3506
    %3508 = vmatprep.subr.mxu0 0.0
    %v3509 = vand.u32 %v17, 4294901760
    %3510 = vmatpush1.msra.mxu0 %v3509
    %3511 = vmatprep.subr.mxu0 0.0
    %3512 = vmatpush1.msra.mxu0 0.0
    %3513 = vmatprep.subr.mxu0 0.0
    %3514 = vmatpush1.msra.mxu0 0.0
    %3515 = vmatprep.subr.mxu0 0.0
    %3516 = vmatpush1.msra.mxu0 0.0
    %3517 = vmatprep.subr.mxu0 0.0
    %3518 = vmatpush1.msra.mxu0 0.0
    %3519 = vmatprep.subr.mxu0 0.0
    %3520 = vmatpush1.msra.mxu0 0.0
    %3521 = vmatprep.subr.mxu0 0.0
    %3522 = vmatpush1.msra.mxu0 0.0
    %3523 = vmatprep.subr.mxu0 0.0
    %3524 = vmatpush1.msra.mxu0 0.0
    %3525 = vmatprep.subr.mxu0 0.0
    %3526 = vmatpush1.msra.mxu0 0.0
    %3527 = vmatprep.subr.mxu0 0.0
    %3528 = vmatpush1.msra.mxu0 0.0
    %3529 = vmatprep.subr.mxu0 0.0
    %3530 = vmatpush1.msra.mxu0 0.0
    %3531 = vmatprep.subr.mxu0 0.0
    %3532 = vmatpush1.msra.mxu0 0.0
    %3533 = vmatprep.subr.mxu0 0.0
    %3534 = vmatpush1.msra.mxu0 0.0
    %3535 = vmatprep.subr.mxu0 0.0
    %3536 = vmatpush1.msra.mxu0 0.0
    %3537 = vmatprep.subr.mxu0 0.0
    %3538 = vmatpush1.msra.mxu0 0.0
    %3539 = vmatprep.subr.mxu0 0.0
    %3540 = vmatpush1.msra.mxu0 0.0
    %3541 = vmatprep.subr.mxu0 0.0
    %3542 = vmatpush1.msra.mxu0 0.0
    %3543 = vmatprep.subr.mxu0 0.0
    %3544 = vmatpush1.msra.mxu0 0.0
    %3545 = vmatprep.subr.mxu0 0.0
    %3546 = vmatpush1.msra.mxu0 0.0
    %3547 = vmatprep.subr.mxu0 0.0
    %3548 = vmatpush1.msra.mxu0 0.0
    %3549 = vmatprep.subr.mxu0 0.0
    %3550 = vmatpush1.msra.mxu0 0.0
    %3551 = vmatprep.subr.mxu0 0.0
    %3552 = vmatpush1.msra.mxu0 0.0
    %3553 = vmatprep.subr.mxu0 0.0
    %3554 = vmatpush1.msra.mxu0 0.0
    %3555 = vmatprep.subr.mxu0 0.0
    %3556 = vmatpush1.msra.mxu0 0.0
    %3557 = vmatprep.subr.mxu0 0.0
    %3558 = vmatpush1.msra.mxu0 0.0
    %3559 = vmatprep.subr.mxu0 0.0
    %3560 = vmatpush1.msra.mxu0 0.0
    %3561 = vmatprep.subr.mxu0 0.0
    %3562 = vmatpush1.msra.mxu0 0.0
    %3563 = vmatprep.subr.mxu0 0.0
    %3564 = vmatpush1.msra.mxu0 0.0
    %3565 = vmatprep.subr.mxu0 0.0
    %3566 = vmatpush1.msra.mxu0 0.0
    %3567 = vmatprep.mubr.f32.mxu0 0.0
    %v3568 = vand.u32 %v3497, 4294901760
    %v3569 = vsub.f32 %v3497, %v3568
    %v3570 = vand.u32 %v3569, 4294901760
    %v3571 = vsub.f32 %v3569, %v3570
    %v3572 = vand.u32 %v3571, 4294901760
    %3573 = vmatmul.mubr.f32.gmra.mrb[0].mxu0 %v3572
    %v3574 = vpop.f32.mrb[0].mxu0
    %v3575 = vadd.f32 0.0, %v3574
    %v3576 = vpop.f32.mrb[0].mxu0
    %3577 = vdwg.mxu0
    %3578 = vmatprep.subr.mxu0 0.0
    %v3579 = vand.u32 %v14, 4294901760
    %v3580 = vsub.f32 %v14, %v3579
    %v3581 = vand.u32 %v3580, 4294901760
    %v3582 = vsub.f32 %v3580, %v3581
    %v3583 = vand.u32 %v3582, 4294901760
    %3584 = vmatpush1.msra.mxu0 %v3583
    %3585 = vmatprep.subr.mxu0 0.0
    %v3586 = vand.u32 %v15, 4294901760
    %v3587 = vsub.f32 %v15, %v3586
    %v3588 = vand.u32 %v3587, 4294901760
    %v3589 = vsub.f32 %v3587, %v3588
    %v3590 = vand.u32 %v3589, 4294901760
    %3591 = vmatpush1.msra.mxu0 %v3590
    %3592 = vmatprep.subr.mxu0 0.0
    %v3593 = vand.u32 %v16, 4294901760
    %v3594 = vsub.f32 %v16, %v3593
    %v3595 = vand.u32 %v3594, 4294901760
    %v3596 = vsub.f32 %v3594, %v3595
    %v3597 = vand.u32 %v3596, 4294901760
    %3598 = vmatpush1.msra.mxu0 %v3597
    %3599 = vmatprep.subr.mxu0 0.0
    %v3600 = vand.u32 %v17, 4294901760
    %v3601 = vsub.f32 %v17, %v3600
    %v3602 = vand.u32 %v3601, 4294901760
    %v3603 = vsub.f32 %v3601, %v3602
    %v3604 = vand.u32 %v3603, 4294901760
    %3605 = vmatpush1.msra.mxu0 %v3604
    %3606 = vmatprep.subr.mxu0 0.0
    %3607 = vmatpush1.msra.mxu0 0.0
    %3608 = vmatprep.subr.mxu0 0.0
    %3609 = vmatpush1.msra.mxu0 0.0
    %3610 = vmatprep.subr.mxu0 0.0
    %3611 = vmatpush1.msra.mxu0 0.0
    %3612 = vmatprep.subr.mxu0 0.0
    %3613 = vmatpush1.msra.mxu0 0.0
    %3614 = vmatprep.subr.mxu0 0.0
    %3615 = vmatpush1.msra.mxu0 0.0
    %3616 = vmatprep.subr.mxu0 0.0
    %3617 = vmatpush1.msra.mxu0 0.0
    %3618 = vmatprep.subr.mxu0 0.0
    %3619 = vmatpush1.msra.mxu0 0.0
    %3620 = vmatprep.subr.mxu0 0.0
    %3621 = vmatpush1.msra.mxu0 0.0
    %3622 = vmatprep.subr.mxu0 0.0
    %3623 = vmatpush1.msra.mxu0 0.0
    %3624 = vmatprep.subr.mxu0 0.0
    %3625 = vmatpush1.msra.mxu0 0.0
    %3626 = vmatprep.subr.mxu0 0.0
    %3627 = vmatpush1.msra.mxu0 0.0
    %3628 = vmatprep.subr.mxu0 0.0
    %3629 = vmatpush1.msra.mxu0 0.0
    %3630 = vmatprep.subr.mxu0 0.0
    %3631 = vmatpush1.msra.mxu0 0.0
    %3632 = vmatprep.subr.mxu0 0.0
    %3633 = vmatpush1.msra.mxu0 0.0
    %3634 = vmatprep.subr.mxu0 0.0
    %3635 = vmatpush1.msra.mxu0 0.0
    %3636 = vmatprep.subr.mxu0 0.0
    %3637 = vmatpush1.msra.mxu0 0.0
    %3638 = vmatprep.subr.mxu0 0.0
    %3639 = vmatpush1.msra.mxu0 0.0
    %3640 = vmatprep.subr.mxu0 0.0
    %3641 = vmatpush1.msra.mxu0 0.0
    %3642 = vmatprep.subr.mxu0 0.0
    %3643 = vmatpush1.msra.mxu0 0.0
    %3644 = vmatprep.subr.mxu0 0.0
    %3645 = vmatpush1.msra.mxu0 0.0
    %3646 = vmatprep.subr.mxu0 0.0
    %3647 = vmatpush1.msra.mxu0 0.0
    %3648 = vmatprep.subr.mxu0 0.0
    %3649 = vmatpush1.msra.mxu0 0.0
    %3650 = vmatprep.subr.mxu0 0.0
    %3651 = vmatpush1.msra.mxu0 0.0
    %3652 = vmatprep.subr.mxu0 0.0
    %3653 = vmatpush1.msra.mxu0 0.0
    %3654 = vmatprep.subr.mxu0 0.0
    %3655 = vmatpush1.msra.mxu0 0.0
    %3656 = vmatprep.subr.mxu0 0.0
    %3657 = vmatpush1.msra.mxu0 0.0
    %3658 = vmatprep.subr.mxu0 0.0
    %3659 = vmatpush1.msra.mxu0 0.0
    %3660 = vmatprep.subr.mxu0 0.0
    %3661 = vmatpush1.msra.mxu0 0.0
    %3662 = vmatprep.mubr.f32.mxu0 0.0
    %v3663 = vand.u32 %v3497, 4294901760
    %3664 = vmatmul.mubr.f32.gmra.mrb[0].mxu0 %v3663
    %v3665 = vpop.f32.mrb[0].mxu0
    %v3666 = vadd.f32 %v3575, %v3665
    %v3667 = vpop.f32.mrb[0].mxu0
    %3668 = vdwg.mxu0
    %3669 = vmatprep.subr.mxu0 0.0
    %v3670 = vand.u32 %v14, 4294901760
    %v3671 = vsub.f32 %v14, %v3670
    %3672 = vmatpush1.msra.mxu0 %v3671
    %3673 = vmatprep.subr.mxu0 0.0
    %v3674 = vand.u32 %v15, 4294901760
    %v3675 = vsub.f32 %v15, %v3674
    %3676 = vmatpush1.msra.mxu0 %v3675
    %3677 = vmatprep.subr.mxu0 0.0
    %v3678 = vand.u32 %v16, 4294901760
    %v3679 = vsub.f32 %v16, %v3678
    %3680 = vmatpush1.msra.mxu0 %v3679
    %3681 = vmatprep.subr.mxu0 0.0
    %v3682 = vand.u32 %v17, 4294901760
    %v3683 = vsub.f32 %v17, %v3682
    %3684 = vmatpush1.msra.mxu0 %v3683
    %3685 = vmatprep.subr.mxu0 0.0
    %3686 = vmatpush1.msra.mxu0 0.0
    %3687 = vmatprep.subr.mxu0 0.0
    %3688 = vmatpush1.msra.mxu0 0.0
    %3689 = vmatprep.subr.mxu0 0.0
    %3690 = vmatpush1.msra.mxu0 0.0
    %3691 = vmatprep.subr.mxu0 0.0
    %3692 = vmatpush1.msra.mxu0 0.0
    %3693 = vmatprep.subr.mxu0 0.0
    %3694 = vmatpush1.msra.mxu0 0.0
    %3695 = vmatprep.subr.mxu0 0.0
    %3696 = vmatpush1.msra.mxu0 0.0
    %3697 = vmatprep.subr.mxu0 0.0
    %3698 = vmatpush1.msra.mxu0 0.0
    %3699 = vmatprep.subr.mxu0 0.0
    %3700 = vmatpush1.msra.mxu0 0.0
    %3701 = vmatprep.subr.mxu0 0.0
    %3702 = vmatpush1.msra.mxu0 0.0
    %3703 = vmatprep.subr.mxu0 0.0
    %3704 = vmatpush1.msra.mxu0 0.0
    %3705 = vmatprep.subr.mxu0 0.0
    %3706 = vmatpush1.msra.mxu0 0.0
    %3707 = vmatprep.subr.mxu0 0.0
    %3708 = vmatpush1.msra.mxu0 0.0
    %3709 = vmatprep.subr.mxu0 0.0
    %3710 = vmatpush1.msra.mxu0 0.0
    %3711 = vmatprep.subr.mxu0 0.0
    %3712 = vmatpush1.msra.mxu0 0.0
    %3713 = vmatprep.subr.mxu0 0.0
    %3714 = vmatpush1.msra.mxu0 0.0
    %3715 = vmatprep.subr.mxu0 0.0
    %3716 = vmatpush1.msra.mxu0 0.0
    %3717 = vmatprep.subr.mxu0 0.0
    %3718 = vmatpush1.msra.mxu0 0.0
    %3719 = vmatprep.subr.mxu0 0.0
    %3720 = vmatpush1.msra.mxu0 0.0
    %3721 = vmatprep.subr.mxu0 0.0
    %3722 = vmatpush1.msra.mxu0 0.0
    %3723 = vmatprep.subr.mxu0 0.0
    %3724 = vmatpush1.msra.mxu0 0.0
    %3725 = vmatprep.subr.mxu0 0.0
    %3726 = vmatpush1.msra.mxu0 0.0
    %3727 = vmatprep.subr.mxu0 0.0
    %3728 = vmatpush1.msra.mxu0 0.0
    %3729 = vmatprep.subr.mxu0 0.0
    %3730 = vmatpush1.msra.mxu0 0.0
    %3731 = vmatprep.subr.mxu0 0.0
    %3732 = vmatpush1.msra.mxu0 0.0
    %3733 = vmatprep.subr.mxu0 0.0
    %3734 = vmatpush1.msra.mxu0 0.0
    %3735 = vmatprep.subr.mxu0 0.0
    %3736 = vmatpush1.msra.mxu0 0.0
    %3737 = vmatprep.subr.mxu0 0.0
    %3738 = vmatpush1.msra.mxu0 0.0
    %3739 = vmatprep.subr.mxu0 0.0
    %3740 = vmatpush1.msra.mxu0 0.0
    %3741 = vmatprep.mubr.f32.mxu0 0.0
    %v3742 = vand.u32 %v3497, 4294901760
    %v3743 = vsub.f32 %v3497, %v3742
    %3744 = vmatmul.mubr.f32.gmra.mrb[0].mxu0 %v3743
    %v3745 = vpop.f32.mrb[0].mxu0
    %v3746 = vadd.f32 %v3666, %v3745
    %v3747 = vpop.f32.mrb[0].mxu0
    %3748 = vdwg.mxu0
    %3749 = vmatprep.subr.mxu0 0.0
    %v3750 = vand.u32 %v14, 4294901760
    %3751 = vmatpush1.msra.mxu0 %v3750
    %3752 = vmatprep.subr.mxu0 0.0
    %v3753 = vand.u32 %v15, 4294901760
    %3754 = vmatpush1.msra.mxu0 %v3753
    %3755 = vmatprep.subr.mxu0 0.0
    %v3756 = vand.u32 %v16, 4294901760
    %3757 = vmatpush1.msra.mxu0 %v3756
    %3758 = vmatprep.subr.mxu0 0.0
    %v3759 = vand.u32 %v17, 4294901760
    %3760 = vmatpush1.msra.mxu0 %v3759
    %3761 = vmatprep.subr.mxu0 0.0
    %3762 = vmatpush1.msra.mxu0 0.0
    %3763 = vmatprep.subr.mxu0 0.0
    %3764 = vmatpush1.msra.mxu0 0.0
    %3765 = vmatprep.subr.mxu0 0.0
    %3766 = vmatpush1.msra.mxu0 0.0
    %3767 = vmatprep.subr.mxu0 0.0
    %3768 = vmatpush1.msra.mxu0 0.0
    %3769 = vmatprep.subr.mxu0 0.0
    %3770 = vmatpush1.msra.mxu0 0.0
    %3771 = vmatprep.subr.mxu0 0.0
    %3772 = vmatpush1.msra.mxu0 0.0
    %3773 = vmatprep.subr.mxu0 0.0
    %3774 = vmatpush1.msra.mxu0 0.0
    %3775 = vmatprep.subr.mxu0 0.0
    %3776 = vmatpush1.msra.mxu0 0.0
    %3777 = vmatprep.subr.mxu0 0.0
    %3778 = vmatpush1.msra.mxu0 0.0
    %3779 = vmatprep.subr.mxu0 0.0
    %3780 = vmatpush1.msra.mxu0 0.0
    %3781 = vmatprep.subr.mxu0 0.0
    %3782 = vmatpush1.msra.mxu0 0.0
    %3783 = vmatprep.subr.mxu0 0.0
    %3784 = vmatpush1.msra.mxu0 0.0
    %3785 = vmatprep.subr.mxu0 0.0
    %3786 = vmatpush1.msra.mxu0 0.0
    %3787 = vmatprep.subr.mxu0 0.0
    %3788 = vmatpush1.msra.mxu0 0.0
    %3789 = vmatprep.subr.mxu0 0.0
    %3790 = vmatpush1.msra.mxu0 0.0
    %3791 = vmatprep.subr.mxu0 0.0
    %3792 = vmatpush1.msra.mxu0 0.0
    %3793 = vmatprep.subr.mxu0 0.0
    %3794 = vmatpush1.msra.mxu0 0.0
    %3795 = vmatprep.subr.mxu0 0.0
    %3796 = vmatpush1.msra.mxu0 0.0
    %3797 = vmatprep.subr.mxu0 0.0
    %3798 = vmatpush1.msra.mxu0 0.0
    %3799 = vmatprep.subr.mxu0 0.0
    %3800 = vmatpush1.msra.mxu0 0.0
    %3801 = vmatprep.subr.mxu0 0.0
    %3802 = vmatpush1.msra.mxu0 0.0
    %3803 = vmatprep.subr.mxu0 0.0
    %3804 = vmatpush1.msra.mxu0 0.0
    %3805 = vmatprep.subr.mxu0 0.0
    %3806 = vmatpush1.msra.mxu0 0.0
    %3807 = vmatprep.subr.mxu0 0.0
    %3808 = vmatpush1.msra.mxu0 0.0
    %3809 = vmatprep.subr.mxu0 0.0
    %3810 = vmatpush1.msra.mxu0 0.0
    %3811 = vmatprep.subr.mxu0 0.0
    %3812 = vmatpush1.msra.mxu0 0.0
    %3813 = vmatprep.subr.mxu0 0.0
    %3814 = vmatpush1.msra.mxu0 0.0
    %3815 = vmatprep.subr.mxu0 0.0
    %3816 = vmatpush1.msra.mxu0 0.0
    %3817 = vmatprep.mubr.f32.mxu0 0.0
    %v3818 = vand.u32 %v3497, 4294901760
    %v3819 = vsub.f32 %v3497, %v3818
    %v3820 = vand.u32 %v3819, 4294901760
    %3821 = vmatmul.mubr.f32.gmra.mrb[0].mxu0 %v3820
    %v3822 = vpop.f32.mrb[0].mxu0
    %v3823 = vadd.f32 %v3746, %v3822
    %v3824 = vpop.f32.mrb[0].mxu0
    %3825 = vdwg.mxu0
    %3826 = vmatprep.subr.mxu0 0.0
    %v3827 = vand.u32 %v14, 4294901760
    %v3828 = vsub.f32 %v14, %v3827
    %v3829 = vand.u32 %v3828, 4294901760
    %3830 = vmatpush1.msra.mxu0 %v3829
    %3831 = vmatprep.subr.mxu0 0.0
    %v3832 = vand.u32 %v15, 4294901760
    %v3833 = vsub.f32 %v15, %v3832
    %v3834 = vand.u32 %v3833, 4294901760
    %3835 = vmatpush1.msra.mxu0 %v3834
    %3836 = vmatprep.subr.mxu0 0.0
    %v3837 = vand.u32 %v16, 4294901760
    %v3838 = vsub.f32 %v16, %v3837
    %v3839 = vand.u32 %v3838, 4294901760
    %3840 = vmatpush1.msra.mxu0 %v3839
    %3841 = vmatprep.subr.mxu0 0.0
    %v3842 = vand.u32 %v17, 4294901760
    %v3843 = vsub.f32 %v17, %v3842
    %v3844 = vand.u32 %v3843, 4294901760
    %3845 = vmatpush1.msra.mxu0 %v3844
    %3846 = vmatprep.subr.mxu0 0.0
    %3847 = vmatpush1.msra.mxu0 0.0
    %3848 = vmatprep.subr.mxu0 0.0
    %3849 = vmatpush1.msra.mxu0 0.0
    %3850 = vmatprep.subr.mxu0 0.0
    %3851 = vmatpush1.msra.mxu0 0.0
    %3852 = vmatprep.subr.mxu0 0.0
    %3853 = vmatpush1.msra.mxu0 0.0
    %3854 = vmatprep.subr.mxu0 0.0
    %3855 = vmatpush1.msra.mxu0 0.0
    %3856 = vmatprep.subr.mxu0 0.0
    %3857 = vmatpush1.msra.mxu0 0.0
    %3858 = vmatprep.subr.mxu0 0.0
    %3859 = vmatpush1.msra.mxu0 0.0
    %3860 = vmatprep.subr.mxu0 0.0
    %3861 = vmatpush1.msra.mxu0 0.0
    %3862 = vmatprep.subr.mxu0 0.0
    %3863 = vmatpush1.msra.mxu0 0.0
    %3864 = vmatprep.subr.mxu0 0.0
    %3865 = vmatpush1.msra.mxu0 0.0
    %3866 = vmatprep.subr.mxu0 0.0
    %3867 = vmatpush1.msra.mxu0 0.0
    %3868 = vmatprep.subr.mxu0 0.0
    %3869 = vmatpush1.msra.mxu0 0.0
    %3870 = vmatprep.subr.mxu0 0.0
    %3871 = vmatpush1.msra.mxu0 0.0
    %3872 = vmatprep.subr.mxu0 0.0
    %3873 = vmatpush1.msra.mxu0 0.0
    %3874 = vmatprep.subr.mxu0 0.0
    %3875 = vmatpush1.msra.mxu0 0.0
    %3876 = vmatprep.subr.mxu0 0.0
    %3877 = vmatpush1.msra.mxu0 0.0
    %3878 = vmatprep.subr.mxu0 0.0
    %3879 = vmatpush1.msra.mxu0 0.0
    %3880 = vmatprep.subr.mxu0 0.0
    %3881 = vmatpush1.msra.mxu0 0.0
    %3882 = vmatprep.subr.mxu0 0.0
    %3883 = vmatpush1.msra.mxu0 0.0
    %3884 = vmatprep.subr.mxu0 0.0
    %3885 = vmatpush1.msra.mxu0 0.0
    %3886 = vmatprep.subr.mxu0 0.0
    %3887 = vmatpush1.msra.mxu0 0.0
    %3888 = vmatprep.subr.mxu0 0.0
    %3889 = vmatpush1.msra.mxu0 0.0
    %3890 = vmatprep.subr.mxu0 0.0
    %3891 = vmatpush1.msra.mxu0 0.0
    %3892 = vmatprep.subr.mxu0 0.0
    %3893 = vmatpush1.msra.mxu0 0.0
    %3894 = vmatprep.subr.mxu0 0.0
    %3895 = vmatpush1.msra.mxu0 0.0
    %3896 = vmatprep.subr.mxu0 0.0
    %3897 = vmatpush1.msra.mxu0 0.0
    %3898 = vmatprep.subr.mxu0 0.0
    %3899 = vmatpush1.msra.mxu0 0.0
    %3900 = vmatprep.subr.mxu0 0.0
    %3901 = vmatpush1.msra.mxu0 0.0
    %3902 = vmatprep.mubr.f32.mxu0 0.0
    %v3903 = vand.u32 %v3497, 4294901760
    %3904 = vmatmul.mubr.f32.gmra.mrb[0].mxu0 %v3903
    %v3905 = vpop.f32.mrb[0].mxu0
    %v3906 = vadd.f32 %v3823, %v3905
    %v3907 = vpop.f32.mrb[0].mxu0
    %3908 = vdwg.mxu0
    %3909 = vmatprep.subr.mxu0 0.0
    %v3910 = vand.u32 %v14, 4294901760
    %3911 = vmatpush1.msra.mxu0 %v3910
    %3912 = vmatprep.subr.mxu0 0.0
    %v3913 = vand.u32 %v15, 4294901760
    %3914 = vmatpush1.msra.mxu0 %v3913
    %3915 = vmatprep.subr.mxu0 0.0
    %v3916 = vand.u32 %v16, 4294901760
    %3917 = vmatpush1.msra.mxu0 %v3916
    %3918 = vmatprep.subr.mxu0 0.0
    %v3919 = vand.u32 %v17, 4294901760
    %3920 = vmatpush1.msra.mxu0 %v3919
    %3921 = vmatprep.subr.mxu0 0.0
    %3922 = vmatpush1.msra.mxu0 0.0
    %3923 = vmatprep.subr.mxu0 0.0
    %3924 = vmatpush1.msra.mxu0 0.0
    %3925 = vmatprep.subr.mxu0 0.0
    %3926 = vmatpush1.msra.mxu0 0.0
    %3927 = vmatprep.subr.mxu0 0.0
    %3928 = vmatpush1.msra.mxu0 0.0
    %3929 = vmatprep.subr.mxu0 0.0
    %3930 = vmatpush1.msra.mxu0 0.0
    %3931 = vmatprep.subr.mxu0 0.0
    %3932 = vmatpush1.msra.mxu0 0.0
    %3933 = vmatprep.subr.mxu0 0.0
    %3934 = vmatpush1.msra.mxu0 0.0
    %3935 = vmatprep.subr.mxu0 0.0
    %3936 = vmatpush1.msra.mxu0 0.0
    %3937 = vmatprep.subr.mxu0 0.0
    %3938 = vmatpush1.msra.mxu0 0.0
    %3939 = vmatprep.subr.mxu0 0.0
    %3940 = vmatpush1.msra.mxu0 0.0
    %3941 = vmatprep.subr.mxu0 0.0
    %3942 = vmatpush1.msra.mxu0 0.0
    %3943 = vmatprep.subr.mxu0 0.0
    %3944 = vmatpush1.msra.mxu0 0.0
    %3945 = vmatprep.subr.mxu0 0.0
    %3946 = vmatpush1.msra.mxu0 0.0
    %3947 = vmatprep.subr.mxu0 0.0
    %3948 = vmatpush1.msra.mxu0 0.0
    %3949 = vmatprep.subr.mxu0 0.0
    %3950 = vmatpush1.msra.mxu0 0.0
    %3951 = vmatprep.subr.mxu0 0.0
    %3952 = vmatpush1.msra.mxu0 0.0
    %3953 = vmatprep.subr.mxu0 0.0
    %3954 = vmatpush1.msra.mxu0 0.0
    %3955 = vmatprep.subr.mxu0 0.0
    %3956 = vmatpush1.msra.mxu0 0.0
    %3957 = vmatprep.subr.mxu0 0.0
    %3958 = vmatpush1.msra.mxu0 0.0
    %3959 = vmatprep.subr.mxu0 0.0
    %3960 = vmatpush1.msra.mxu0 0.0
    %3961 = vmatprep.subr.mxu0 0.0
    %3962 = vmatpush1.msra.mxu0 0.0
    %3963 = vmatprep.subr.mxu0 0.0
    %3964 = vmatpush1.msra.mxu0 0.0
    %3965 = vmatprep.subr.mxu0 0.0
    %3966 = vmatpush1.msra.mxu0 0.0
    %3967 = vmatprep.subr.mxu0 0.0
    %3968 = vmatpush1.msra.mxu0 0.0
    %3969 = vmatprep.subr.mxu0 0.0
    %3970 = vmatpush1.msra.mxu0 0.0
    %3971 = vmatprep.subr.mxu0 0.0
    %3972 = vmatpush1.msra.mxu0 0.0
    %3973 = vmatprep.subr.mxu0 0.0
    %3974 = vmatpush1.msra.mxu0 0.0
    %3975 = vmatprep.subr.mxu0 0.0
    %3976 = vmatpush1.msra.mxu0 0.0
    %3977 = vmatprep.mubr.f32.mxu0 0.0
    %v3978 = vand.u32 %v3497, 4294901760
    %3979 = vmatmul.mubr.f32.gmra.mrb[0].mxu0 %v3978
    %v3980 = vpop.f32.mrb[0].mxu0
    %v3981 = vadd.f32 %v3906, %v3980
    %v3982 = vpop.f32.mrb[0].mxu0
    %3983 = vdwg.mxu0
    %v3985 = vrot.slane %v3981, 4
    %v3987 = vadd.f32 %v536, %v3985
    %v3988 = vtanh.pop %v3987
    %v3990 = vrot.slane %v3988, 4
    %v3991 = vsel %vm539, %v3990, 0
    %3993 = vmatprep.subr.mxu0 0.0
    %v3994 = vand.u32 %v14, 4294901760
    %3995 = vmatpush1.msra.mxu0 %v3994
    %3996 = vmatprep.subr.mxu0 0.0
    %v3997 = vand.u32 %v15, 4294901760
    %3998 = vmatpush1.msra.mxu0 %v3997
    %3999 = vmatprep.subr.mxu0 0.0
    %v4000 = vand.u32 %v16, 4294901760
    %4001 = vmatpush1.msra.mxu0 %v4000
    %4002 = vmatprep.subr.mxu0 0.0
    %v4003 = vand.u32 %v17, 4294901760
    %4004 = vmatpush1.msra.mxu0 %v4003
    %4005 = vmatprep.subr.mxu0 0.0
    %4006 = vmatpush1.msra.mxu0 0.0
    %4007 = vmatprep.subr.mxu0 0.0
    %4008 = vmatpush1.msra.mxu0 0.0
    %4009 = vmatprep.subr.mxu0 0.0
    %4010 = vmatpush1.msra.mxu0 0.0
    %4011 = vmatprep.subr.mxu0 0.0
    %4012 = vmatpush1.msra.mxu0 0.0
    %4013 = vmatprep.subr.mxu0 0.0
    %4014 = vmatpush1.msra.mxu0 0.0
    %4015 = vmatprep.subr.mxu0 0.0
    %4016 = vmatpush1.msra.mxu0 0.0
    %4017 = vmatprep.subr.mxu0 0.0
    %4018 = vmatpush1.msra.mxu0 0.0
    %4019 = vmatprep.subr.mxu0 0.0
    %4020 = vmatpush1.msra.mxu0 0.0
    %4021 = vmatprep.subr.mxu0 0.0
    %4022 = vmatpush1.msra.mxu0 0.0
    %4023 = vmatprep.subr.mxu0 0.0
    %4024 = vmatpush1.msra.mxu0 0.0
    %4025 = vmatprep.subr.mxu0 0.0
    %4026 = vmatpush1.msra.mxu0 0.0
    %4027 = vmatprep.subr.mxu0 0.0
    %4028 = vmatpush1.msra.mxu0 0.0
    %4029 = vmatprep.subr.mxu0 0.0
    %4030 = vmatpush1.msra.mxu0 0.0
    %4031 = vmatprep.subr.mxu0 0.0
    %4032 = vmatpush1.msra.mxu0 0.0
    %4033 = vmatprep.subr.mxu0 0.0
    %4034 = vmatpush1.msra.mxu0 0.0
    %4035 = vmatprep.subr.mxu0 0.0
    %4036 = vmatpush1.msra.mxu0 0.0
    %4037 = vmatprep.subr.mxu0 0.0
    %4038 = vmatpush1.msra.mxu0 0.0
    %4039 = vmatprep.subr.mxu0 0.0
    %4040 = vmatpush1.msra.mxu0 0.0
    %4041 = vmatprep.subr.mxu0 0.0
    %4042 = vmatpush1.msra.mxu0 0.0
    %4043 = vmatprep.subr.mxu0 0.0
    %4044 = vmatpush1.msra.mxu0 0.0
    %4045 = vmatprep.subr.mxu0 0.0
    %4046 = vmatpush1.msra.mxu0 0.0
    %4047 = vmatprep.subr.mxu0 0.0
    %4048 = vmatpush1.msra.mxu0 0.0
    %4049 = vmatprep.subr.mxu0 0.0
    %4050 = vmatpush1.msra.mxu0 0.0
    %4051 = vmatprep.subr.mxu0 0.0
    %4052 = vmatpush1.msra.mxu0 0.0
    %4053 = vmatprep.subr.mxu0 0.0
    %4054 = vmatpush1.msra.mxu0 0.0
    %4055 = vmatprep.subr.mxu0 0.0
    %4056 = vmatpush1.msra.mxu0 0.0
    %4057 = vmatprep.subr.mxu0 0.0
    %4058 = vmatpush1.msra.mxu0 0.0
    %4059 = vmatprep.subr.mxu0 0.0
    %4060 = vmatpush1.msra.mxu0 0.0
    %4061 = vmatprep.mubr.f32.mxu0 0.0
    %v4062 = vand.u32 %v3991, 4294901760
    %v4063 = vsub.f32 %v3991, %v4062
    %v4064 = vand.u32 %v4063, 4294901760
    %v4065 = vsub.f32 %v4063, %v4064
    %v4066 = vand.u32 %v4065, 4294901760
    %4067 = vmatmul.mubr.f32.gmra.mrb[0].mxu0 %v4066
    %v4068 = vpop.f32.mrb[0].mxu0
    %v4069 = vadd.f32 0.0, %v4068
    %v4070 = vpop.f32.mrb[0].mxu0
    %4071 = vdwg.mxu0
    %4072 = vmatprep.subr.mxu0 0.0
    %v4073 = vand.u32 %v14, 4294901760
    %v4074 = vsub.f32 %v14, %v4073
    %v4075 = vand.u32 %v4074, 4294901760
    %v4076 = vsub.f32 %v4074, %v4075
    %v4077 = vand.u32 %v4076, 4294901760
    %4078 = vmatpush1.msra.mxu0 %v4077
    %4079 = vmatprep.subr.mxu0 0.0
    %v4080 = vand.u32 %v15, 4294901760
    %v4081 = vsub.f32 %v15, %v4080
    %v4082 = vand.u32 %v4081, 4294901760
    %v4083 = vsub.f32 %v4081, %v4082
    %v4084 = vand.u32 %v4083, 4294901760
    %4085 = vmatpush1.msra.mxu0 %v4084
    %4086 = vmatprep.subr.mxu0 0.0
    %v4087 = vand.u32 %v16, 4294901760
    %v4088 = vsub.f32 %v16, %v4087
    %v4089 = vand.u32 %v4088, 4294901760
    %v4090 = vsub.f32 %v4088, %v4089
    %v4091 = vand.u32 %v4090, 4294901760
    %4092 = vmatpush1.msra.mxu0 %v4091
    %4093 = vmatprep.subr.mxu0 0.0
    %v4094 = vand.u32 %v17, 4294901760
    %v4095 = vsub.f32 %v17, %v4094
    %v4096 = vand.u32 %v4095, 4294901760
    %v4097 = vsub.f32 %v4095, %v4096
    %v4098 = vand.u32 %v4097, 4294901760
    %4099 = vmatpush1.msra.mxu0 %v4098
    %4100 = vmatprep.subr.mxu0 0.0
    %4101 = vmatpush1.msra.mxu0 0.0
    %4102 = vmatprep.subr.mxu0 0.0
    %4103 = vmatpush1.msra.mxu0 0.0
    %4104 = vmatprep.subr.mxu0 0.0
    %4105 = vmatpush1.msra.mxu0 0.0
    %4106 = vmatprep.subr.mxu0 0.0
    %4107 = vmatpush1.msra.mxu0 0.0
    %4108 = vmatprep.subr.mxu0 0.0
    %4109 = vmatpush1.msra.mxu0 0.0
    %4110 = vmatprep.subr.mxu0 0.0
    %4111 = vmatpush1.msra.mxu0 0.0
    %4112 = vmatprep.subr.mxu0 0.0
    %4113 = vmatpush1.msra.mxu0 0.0
    %4114 = vmatprep.subr.mxu0 0.0
    %4115 = vmatpush1.msra.mxu0 0.0
    %4116 = vmatprep.subr.mxu0 0.0
    %4117 = vmatpush1.msra.mxu0 0.0
    %4118 = vmatprep.subr.mxu0 0.0
    %4119 = vmatpush1.msra.mxu0 0.0
    %4120 = vmatprep.subr.mxu0 0.0
    %4121 = vmatpush1.msra.mxu0 0.0
    %4122 = vmatprep.subr.mxu0 0.0
    %4123 = vmatpush1.msra.mxu0 0.0
    %4124 = vmatprep.subr.mxu0 0.0
    %4125 = vmatpush1.msra.mxu0 0.0
    %4126 = vmatprep.subr.mxu0 0.0
    %4127 = vmatpush1.msra.mxu0 0.0
    %4128 = vmatprep.subr.mxu0 0.0
    %4129 = vmatpush1.msra.mxu0 0.0
    %4130 = vmatprep.subr.mxu0 0.0
    %4131 = vmatpush1.msra.mxu0 0.0
    %4132 = vmatprep.subr.mxu0 0.0
    %4133 = vmatpush1.msra.mxu0 0.0
    %4134 = vmatprep.subr.mxu0 0.0
    %4135 = vmatpush1.msra.mxu0 0.0
    %4136 = vmatprep.subr.mxu0 0.0
    %4137 = vmatpush1.msra.mxu0 0.0
    %4138 = vmatprep.subr.mxu0 0.0
    %4139 = vmatpush1.msra.mxu0 0.0
    %4140 = vmatprep.subr.mxu0 0.0
    %4141 = vmatpush1.msra.mxu0 0.0
    %4142 = vmatprep.subr.mxu0 0.0
    %4143 = vmatpush1.msra.mxu0 0.0
    %4144 = vmatprep.subr.mxu0 0.0
    %4145 = vmatpush1.msra.mxu0 0.0
    %4146 = vmatprep.subr.mxu0 0.0
    %4147 = vmatpush1.msra.mxu0 0.0
    %4148 = vmatprep.subr.mxu0 0.0
    %4149 = vmatpush1.msra.mxu0 0.0
    %4150 = vmatprep.subr.mxu0 0.0
    %4151 = vmatpush1.msra.mxu0 0.0
    %4152 = vmatprep.subr.mxu0 0.0
    %4153 = vmatpush1.msra.mxu0 0.0
    %4154 = vmatprep.subr.mxu0 0.0
    %4155 = vmatpush1.msra.mxu0 0.0
    %4156 = vmatprep.mubr.f32.mxu0 0.0
    %v4157 = vand.u32 %v3991, 4294901760
    %4158 = vmatmul.mubr.f32.gmra.mrb[0].mxu0 %v4157
    %v4159 = vpop.f32.mrb[0].mxu0
    %v4160 = vadd.f32 %v4069, %v4159
    %v4161 = vpop.f32.mrb[0].mxu0
    %4162 = vdwg.mxu0
    %4163 = vmatprep.subr.mxu0 0.0
    %v4164 = vand.u32 %v14, 4294901760
    %v4165 = vsub.f32 %v14, %v4164
    %4166 = vmatpush1.msra.mxu0 %v4165
    %4167 = vmatprep.subr.mxu0 0.0
    %v4168 = vand.u32 %v15, 4294901760
    %v4169 = vsub.f32 %v15, %v4168
    %4170 = vmatpush1.msra.mxu0 %v4169
    %4171 = vmatprep.subr.mxu0 0.0
    %v4172 = vand.u32 %v16, 4294901760
    %v4173 = vsub.f32 %v16, %v4172
    %4174 = vmatpush1.msra.mxu0 %v4173
    %4175 = vmatprep.subr.mxu0 0.0
    %v4176 = vand.u32 %v17, 4294901760
    %v4177 = vsub.f32 %v17, %v4176
    %4178 = vmatpush1.msra.mxu0 %v4177
    %4179 = vmatprep.subr.mxu0 0.0
    %4180 = vmatpush1.msra.mxu0 0.0
    %4181 = vmatprep.subr.mxu0 0.0
    %4182 = vmatpush1.msra.mxu0 0.0
    %4183 = vmatprep.subr.mxu0 0.0
    %4184 = vmatpush1.msra.mxu0 0.0
    %4185 = vmatprep.subr.mxu0 0.0
    %4186 = vmatpush1.msra.mxu0 0.0
    %4187 = vmatprep.subr.mxu0 0.0
    %4188 = vmatpush1.msra.mxu0 0.0
    %4189 = vmatprep.subr.mxu0 0.0
    %4190 = vmatpush1.msra.mxu0 0.0
    %4191 = vmatprep.subr.mxu0 0.0
    %4192 = vmatpush1.msra.mxu0 0.0
    %4193 = vmatprep.subr.mxu0 0.0
    %4194 = vmatpush1.msra.mxu0 0.0
    %4195 = vmatprep.subr.mxu0 0.0
    %4196 = vmatpush1.msra.mxu0 0.0
    %4197 = vmatprep.subr.mxu0 0.0
    %4198 = vmatpush1.msra.mxu0 0.0
    %4199 = vmatprep.subr.mxu0 0.0
    %4200 = vmatpush1.msra.mxu0 0.0
    %4201 = vmatprep.subr.mxu0 0.0
    %4202 = vmatpush1.msra.mxu0 0.0
    %4203 = vmatprep.subr.mxu0 0.0
    %4204 = vmatpush1.msra.mxu0 0.0
    %4205 = vmatprep.subr.mxu0 0.0
    %4206 = vmatpush1.msra.mxu0 0.0
    %4207 = vmatprep.subr.mxu0 0.0
    %4208 = vmatpush1.msra.mxu0 0.0
    %4209 = vmatprep.subr.mxu0 0.0
    %4210 = vmatpush1.msra.mxu0 0.0
    %4211 = vmatprep.subr.mxu0 0.0
    %4212 = vmatpush1.msra.mxu0 0.0
    %4213 = vmatprep.subr.mxu0 0.0
    %4214 = vmatpush1.msra.mxu0 0.0
    %4215 = vmatprep.subr.mxu0 0.0
    %4216 = vmatpush1.msra.mxu0 0.0
    %4217 = vmatprep.subr.mxu0 0.0
    %4218 = vmatpush1.msra.mxu0 0.0
    %4219 = vmatprep.subr.mxu0 0.0
    %4220 = vmatpush1.msra.mxu0 0.0
    %4221 = vmatprep.subr.mxu0 0.0
    %4222 = vmatpush1.msra.mxu0 0.0
    %4223 = vmatprep.subr.mxu0 0.0
    %4224 = vmatpush1.msra.mxu0 0.0
    %4225 = vmatprep.subr.mxu0 0.0
    %4226 = vmatpush1.msra.mxu0 0.0
    %4227 = vmatprep.subr.mxu0 0.0
    %4228 = vmatpush1.msra.mxu0 0.0
    %4229 = vmatprep.subr.mxu0 0.0
    %4230 = vmatpush1.msra.mxu0 0.0
    %4231 = vmatprep.subr.mxu0 0.0
    %4232 = vmatpush1.msra.mxu0 0.0
    %4233 = vmatprep.subr.mxu0 0.0
    %4234 = vmatpush1.msra.mxu0 0.0
    %4235 = vmatprep.mubr.f32.mxu0 0.0
    %v4236 = vand.u32 %v3991, 4294901760
    %v4237 = vsub.f32 %v3991, %v4236
    %4238 = vmatmul.mubr.f32.gmra.mrb[0].mxu0 %v4237
    %v4239 = vpop.f32.mrb[0].mxu0
    %v4240 = vadd.f32 %v4160, %v4239
    %v4241 = vpop.f32.mrb[0].mxu0
    %4242 = vdwg.mxu0
    %4243 = vmatprep.subr.mxu0 0.0
    %v4244 = vand.u32 %v14, 4294901760
    %4245 = vmatpush1.msra.mxu0 %v4244
    %4246 = vmatprep.subr.mxu0 0.0
    %v4247 = vand.u32 %v15, 4294901760
    %4248 = vmatpush1.msra.mxu0 %v4247
    %4249 = vmatprep.subr.mxu0 0.0
    %v4250 = vand.u32 %v16, 4294901760
    %4251 = vmatpush1.msra.mxu0 %v4250
    %4252 = vmatprep.subr.mxu0 0.0
    %v4253 = vand.u32 %v17, 4294901760
    %4254 = vmatpush1.msra.mxu0 %v4253
    %4255 = vmatprep.subr.mxu0 0.0
    %4256 = vmatpush1.msra.mxu0 0.0
    %4257 = vmatprep.subr.mxu0 0.0
    %4258 = vmatpush1.msra.mxu0 0.0
    %4259 = vmatprep.subr.mxu0 0.0
    %4260 = vmatpush1.msra.mxu0 0.0
    %4261 = vmatprep.subr.mxu0 0.0
    %4262 = vmatpush1.msra.mxu0 0.0
    %4263 = vmatprep.subr.mxu0 0.0
    %4264 = vmatpush1.msra.mxu0 0.0
    %4265 = vmatprep.subr.mxu0 0.0
    %4266 = vmatpush1.msra.mxu0 0.0
    %4267 = vmatprep.subr.mxu0 0.0
    %4268 = vmatpush1.msra.mxu0 0.0
    %4269 = vmatprep.subr.mxu0 0.0
    %4270 = vmatpush1.msra.mxu0 0.0
    %4271 = vmatprep.subr.mxu0 0.0
    %4272 = vmatpush1.msra.mxu0 0.0
    %4273 = vmatprep.subr.mxu0 0.0
    %4274 = vmatpush1.msra.mxu0 0.0
    %4275 = vmatprep.subr.mxu0 0.0
    %4276 = vmatpush1.msra.mxu0 0.0
    %4277 = vmatprep.subr.mxu0 0.0
    %4278 = vmatpush1.msra.mxu0 0.0
    %4279 = vmatprep.subr.mxu0 0.0
    %4280 = vmatpush1.msra.mxu0 0.0
    %4281 = vmatprep.subr.mxu0 0.0
    %4282 = vmatpush1.msra.mxu0 0.0
    %4283 = vmatprep.subr.mxu0 0.0
    %4284 = vmatpush1.msra.mxu0 0.0
    %4285 = vmatprep.subr.mxu0 0.0
    %4286 = vmatpush1.msra.mxu0 0.0
    %4287 = vmatprep.subr.mxu0 0.0
    %4288 = vmatpush1.msra.mxu0 0.0
    %4289 = vmatprep.subr.mxu0 0.0
    %4290 = vmatpush1.msra.mxu0 0.0
    %4291 = vmatprep.subr.mxu0 0.0
    %4292 = vmatpush1.msra.mxu0 0.0
    %4293 = vmatprep.subr.mxu0 0.0
    %4294 = vmatpush1.msra.mxu0 0.0
    %4295 = vmatprep.subr.mxu0 0.0
    %4296 = vmatpush1.msra.mxu0 0.0
    %4297 = vmatprep.subr.mxu0 0.0
    %4298 = vmatpush1.msra.mxu0 0.0
    %4299 = vmatprep.subr.mxu0 0.0
    %4300 = vmatpush1.msra.mxu0 0.0
    %4301 = vmatprep.subr.mxu0 0.0
    %4302 = vmatpush1.msra.mxu0 0.0
    %4303 = vmatprep.subr.mxu0 0.0
    %4304 = vmatpush1.msra.mxu0 0.0
    %4305 = vmatprep.subr.mxu0 0.0
    %4306 = vmatpush1.msra.mxu0 0.0
    %4307 = vmatprep.subr.mxu0 0.0
    %4308 = vmatpush1.msra.mxu0 0.0
    %4309 = vmatprep.subr.mxu0 0.0
    %4310 = vmatpush1.msra.mxu0 0.0
    %4311 = vmatprep.mubr.f32.mxu0 0.0
    %v4312 = vand.u32 %v3991, 4294901760
    %v4313 = vsub.f32 %v3991, %v4312
    %v4314 = vand.u32 %v4313, 4294901760
    %4315 = vmatmul.mubr.f32.gmra.mrb[0].mxu0 %v4314
    %v4316 = vpop.f32.mrb[0].mxu0
    %v4317 = vadd.f32 %v4240, %v4316
    %v4318 = vpop.f32.mrb[0].mxu0
    %4319 = vdwg.mxu0
    %4320 = vmatprep.subr.mxu0 0.0
    %v4321 = vand.u32 %v14, 4294901760
    %v4322 = vsub.f32 %v14, %v4321
    %v4323 = vand.u32 %v4322, 4294901760
    %4324 = vmatpush1.msra.mxu0 %v4323
    %4325 = vmatprep.subr.mxu0 0.0
    %v4326 = vand.u32 %v15, 4294901760
    %v4327 = vsub.f32 %v15, %v4326
    %v4328 = vand.u32 %v4327, 4294901760
    %4329 = vmatpush1.msra.mxu0 %v4328
    %4330 = vmatprep.subr.mxu0 0.0
    %v4331 = vand.u32 %v16, 4294901760
    %v4332 = vsub.f32 %v16, %v4331
    %v4333 = vand.u32 %v4332, 4294901760
    %4334 = vmatpush1.msra.mxu0 %v4333
    %4335 = vmatprep.subr.mxu0 0.0
    %v4336 = vand.u32 %v17, 4294901760
    %v4337 = vsub.f32 %v17, %v4336
    %v4338 = vand.u32 %v4337, 4294901760
    %4339 = vmatpush1.msra.mxu0 %v4338
    %4340 = vmatprep.subr.mxu0 0.0
    %4341 = vmatpush1.msra.mxu0 0.0
    %4342 = vmatprep.subr.mxu0 0.0
    %4343 = vmatpush1.msra.mxu0 0.0
    %4344 = vmatprep.subr.mxu0 0.0
    %4345 = vmatpush1.msra.mxu0 0.0
    %4346 = vmatprep.subr.mxu0 0.0
    %4347 = vmatpush1.msra.mxu0 0.0
    %4348 = vmatprep.subr.mxu0 0.0
    %4349 = vmatpush1.msra.mxu0 0.0
    %4350 = vmatprep.subr.mxu0 0.0
    %4351 = vmatpush1.msra.mxu0 0.0
    %4352 = vmatprep.subr.mxu0 0.0
    %4353 = vmatpush1.msra.mxu0 0.0
    %4354 = vmatprep.subr.mxu0 0.0
    %4355 = vmatpush1.msra.mxu0 0.0
    %4356 = vmatprep.subr.mxu0 0.0
    %4357 = vmatpush1.msra.mxu0 0.0
    %4358 = vmatprep.subr.mxu0 0.0
    %4359 = vmatpush1.msra.mxu0 0.0
    %4360 = vmatprep.subr.mxu0 0.0
    %4361 = vmatpush1.msra.mxu0 0.0
    %4362 = vmatprep.subr.mxu0 0.0
    %4363 = vmatpush1.msra.mxu0 0.0
    %4364 = vmatprep.subr.mxu0 0.0
    %4365 = vmatpush1.msra.mxu0 0.0
    %4366 = vmatprep.subr.mxu0 0.0
    %4367 = vmatpush1.msra.mxu0 0.0
    %4368 = vmatprep.subr.mxu0 0.0
    %4369 = vmatpush1.msra.mxu0 0.0
    %4370 = vmatprep.subr.mxu0 0.0
    %4371 = vmatpush1.msra.mxu0 0.0
    %4372 = vmatprep.subr.mxu0 0.0
    %4373 = vmatpush1.msra.mxu0 0.0
    %4374 = vmatprep.subr.mxu0 0.0
    %4375 = vmatpush1.msra.mxu0 0.0
    %4376 = vmatprep.subr.mxu0 0.0
    %4377 = vmatpush1.msra.mxu0 0.0
    %4378 = vmatprep.subr.mxu0 0.0
    %4379 = vmatpush1.msra.mxu0 0.0
    %4380 = vmatprep.subr.mxu0 0.0
    %4381 = vmatpush1.msra.mxu0 0.0
    %4382 = vmatprep.subr.mxu0 0.0
    %4383 = vmatpush1.msra.mxu0 0.0
    %4384 = vmatprep.subr.mxu0 0.0
    %4385 = vmatpush1.msra.mxu0 0.0
    %4386 = vmatprep.subr.mxu0 0.0
    %4387 = vmatpush1.msra.mxu0 0.0
    %4388 = vmatprep.subr.mxu0 0.0
    %4389 = vmatpush1.msra.mxu0 0.0
    %4390 = vmatprep.subr.mxu0 0.0
    %4391 = vmatpush1.msra.mxu0 0.0
    %4392 = vmatprep.subr.mxu0 0.0
    %4393 = vmatpush1.msra.mxu0 0.0
    %4394 = vmatprep.subr.mxu0 0.0
    %4395 = vmatpush1.msra.mxu0 0.0
    %4396 = vmatprep.mubr.f32.mxu0 0.0
    %v4397 = vand.u32 %v3991, 4294901760
    %4398 = vmatmul.mubr.f32.gmra.mrb[0].mxu0 %v4397
    %v4399 = vpop.f32.mrb[0].mxu0
    %v4400 = vadd.f32 %v4317, %v4399
    %v4401 = vpop.f32.mrb[0].mxu0
    %4402 = vdwg.mxu0
    %4403 = vmatprep.subr.mxu0 0.0
    %v4404 = vand.u32 %v14, 4294901760
    %4405 = vmatpush1.msra.mxu0 %v4404
    %4406 = vmatprep.subr.mxu0 0.0
    %v4407 = vand.u32 %v15, 4294901760
    %4408 = vmatpush1.msra.mxu0 %v4407
    %4409 = vmatprep.subr.mxu0 0.0
    %v4410 = vand.u32 %v16, 4294901760
    %4411 = vmatpush1.msra.mxu0 %v4410
    %4412 = vmatprep.subr.mxu0 0.0
    %v4413 = vand.u32 %v17, 4294901760
    %4414 = vmatpush1.msra.mxu0 %v4413
    %4415 = vmatprep.subr.mxu0 0.0
    %4416 = vmatpush1.msra.mxu0 0.0
    %4417 = vmatprep.subr.mxu0 0.0
    %4418 = vmatpush1.msra.mxu0 0.0
    %4419 = vmatprep.subr.mxu0 0.0
    %4420 = vmatpush1.msra.mxu0 0.0
    %4421 = vmatprep.subr.mxu0 0.0
    %4422 = vmatpush1.msra.mxu0 0.0
    %4423 = vmatprep.subr.mxu0 0.0
    %4424 = vmatpush1.msra.mxu0 0.0
    %4425 = vmatprep.subr.mxu0 0.0
    %4426 = vmatpush1.msra.mxu0 0.0
    %4427 = vmatprep.subr.mxu0 0.0
    %4428 = vmatpush1.msra.mxu0 0.0
    %4429 = vmatprep.subr.mxu0 0.0
    %4430 = vmatpush1.msra.mxu0 0.0
    %4431 = vmatprep.subr.mxu0 0.0
    %4432 = vmatpush1.msra.mxu0 0.0
    %4433 = vmatprep.subr.mxu0 0.0
    %4434 = vmatpush1.msra.mxu0 0.0
    %4435 = vmatprep.subr.mxu0 0.0
    %4436 = vmatpush1.msra.mxu0 0.0
    %4437 = vmatprep.subr.mxu0 0.0
    %4438 = vmatpush1.msra.mxu0 0.0
    %4439 = vmatprep.subr.mxu0 0.0
    %4440 = vmatpush1.msra.mxu0 0.0
    %4441 = vmatprep.subr.mxu0 0.0
    %4442 = vmatpush1.msra.mxu0 0.0
    %4443 = vmatprep.subr.mxu0 0.0
    %4444 = vmatpush1.msra.mxu0 0.0
    %4445 = vmatprep.subr.mxu0 0.0
    %4446 = vmatpush1.msra.mxu0 0.0
    %4447 = vmatprep.subr.mxu0 0.0
    %4448 = vmatpush1.msra.mxu0 0.0
    %4449 = vmatprep.subr.mxu0 0.0
    %4450 = vmatpush1.msra.mxu0 0.0
    %4451 = vmatprep.subr.mxu0 0.0
    %4452 = vmatpush1.msra.mxu0 0.0
    %4453 = vmatprep.subr.mxu0 0.0
    %4454 = vmatpush1.msra.mxu0 0.0
    %4455 = vmatprep.subr.mxu0 0.0
    %4456 = vmatpush1.msra.mxu0 0.0
    %4457 = vmatprep.subr.mxu0 0.0
    %4458 = vmatpush1.msra.mxu0 0.0
    %4459 = vmatprep.subr.mxu0 0.0
    %4460 = vmatpush1.msra.mxu0 0.0
    %4461 = vmatprep.subr.mxu0 0.0
    %4462 = vmatpush1.msra.mxu0 0.0
    %4463 = vmatprep.subr.mxu0 0.0
    %4464 = vmatpush1.msra.mxu0 0.0
    %4465 = vmatprep.subr.mxu0 0.0
    %4466 = vmatpush1.msra.mxu0 0.0
    %4467 = vmatprep.subr.mxu0 0.0
    %4468 = vmatpush1.msra.mxu0 0.0
    %4469 = vmatprep.subr.mxu0 0.0
    %4470 = vmatpush1.msra.mxu0 0.0
    %4471 = vmatprep.mubr.f32.mxu0 0.0
    %v4472 = vand.u32 %v3991, 4294901760
    %4473 = vmatmul.mubr.f32.gmra.mrb[0].mxu0 %v4472
    %v4474 = vpop.f32.mrb[0].mxu0
    %v4475 = vadd.f32 %v4400, %v4474
    %v4476 = vpop.f32.mrb[0].mxu0
    %4477 = vdwg.mxu0
    %v4479 = vrot.slane %v4475, 2
    %v4481 = vadd.f32 %v536, %v4479
    %v4482 = vtanh.pop %v4481
    %v4483 = vmax.f32 %v4482, 0.0
    %v4484 = vlaneseq
    %v4485 = vshrl.u32 %v4484, 7
    %v4486 = vsub.s32 0, %v4485
    %v4487 = vrot.slane %v23, %v4486
    %v4489 = vrot.slane %v4483, 6
    %v4490 = vsel %vm539, %v4489, 0
    %4492 = vmatprep.subr.mxu0 0.0
    %v4493 = vand.u32 %v19, 4294901760
    %4494 = vmatpush1.msra.mxu0 %v4493
    %4495 = vmatprep.subr.mxu0 0.0
    %v4496 = vand.u32 %v20, 4294901760
    %4497 = vmatpush1.msra.mxu0 %v4496
    %4498 = vmatprep.subr.mxu0 0.0
    %v4499 = vand.u32 %v21, 4294901760
    %4500 = vmatpush1.msra.mxu0 %v4499
    %4501 = vmatprep.subr.mxu0 0.0
    %v4502 = vand.u32 %v22, 4294901760
    %4503 = vmatpush1.msra.mxu0 %v4502
    %4504 = vmatprep.subr.mxu0 0.0
    %4505 = vmatpush1.msra.mxu0 0.0
    %4506 = vmatprep.subr.mxu0 0.0
    %4507 = vmatpush1.msra.mxu0 0.0
    %4508 = vmatprep.subr.mxu0 0.0
    %4509 = vmatpush1.msra.mxu0 0.0
    %4510 = vmatprep.subr.mxu0 0.0
    %4511 = vmatpush1.msra.mxu0 0.0
    %4512 = vmatprep.subr.mxu0 0.0
    %4513 = vmatpush1.msra.mxu0 0.0
    %4514 = vmatprep.subr.mxu0 0.0
    %4515 = vmatpush1.msra.mxu0 0.0
    %4516 = vmatprep.subr.mxu0 0.0
    %4517 = vmatpush1.msra.mxu0 0.0
    %4518 = vmatprep.subr.mxu0 0.0
    %4519 = vmatpush1.msra.mxu0 0.0
    %4520 = vmatprep.subr.mxu0 0.0
    %4521 = vmatpush1.msra.mxu0 0.0
    %4522 = vmatprep.subr.mxu0 0.0
    %4523 = vmatpush1.msra.mxu0 0.0
    %4524 = vmatprep.subr.mxu0 0.0
    %4525 = vmatpush1.msra.mxu0 0.0
    %4526 = vmatprep.subr.mxu0 0.0
    %4527 = vmatpush1.msra.mxu0 0.0
    %4528 = vmatprep.subr.mxu0 0.0
    %4529 = vmatpush1.msra.mxu0 0.0
    %4530 = vmatprep.subr.mxu0 0.0
    %4531 = vmatpush1.msra.mxu0 0.0
    %4532 = vmatprep.subr.mxu0 0.0
    %4533 = vmatpush1.msra.mxu0 0.0
    %4534 = vmatprep.subr.mxu0 0.0
    %4535 = vmatpush1.msra.mxu0 0.0
    %4536 = vmatprep.subr.mxu0 0.0
    %4537 = vmatpush1.msra.mxu0 0.0
    %4538 = vmatprep.subr.mxu0 0.0
    %4539 = vmatpush1.msra.mxu0 0.0
    %4540 = vmatprep.subr.mxu0 0.0
    %4541 = vmatpush1.msra.mxu0 0.0
    %4542 = vmatprep.subr.mxu0 0.0
    %4543 = vmatpush1.msra.mxu0 0.0
    %4544 = vmatprep.subr.mxu0 0.0
    %4545 = vmatpush1.msra.mxu0 0.0
    %4546 = vmatprep.subr.mxu0 0.0
    %4547 = vmatpush1.msra.mxu0 0.0
    %4548 = vmatprep.subr.mxu0 0.0
    %4549 = vmatpush1.msra.mxu0 0.0
    %4550 = vmatprep.subr.mxu0 0.0
    %4551 = vmatpush1.msra.mxu0 0.0
    %4552 = vmatprep.subr.mxu0 0.0
    %4553 = vmatpush1.msra.mxu0 0.0
    %4554 = vmatprep.subr.mxu0 0.0
    %4555 = vmatpush1.msra.mxu0 0.0
    %4556 = vmatprep.subr.mxu0 0.0
    %4557 = vmatpush1.msra.mxu0 0.0
    %4558 = vmatprep.subr.mxu0 0.0
    %4559 = vmatpush1.msra.mxu0 0.0
    %4560 = vmatprep.mubr.f32.mxu0 0.0
    %v4561 = vand.u32 %v4490, 4294901760
    %v4562 = vsub.f32 %v4490, %v4561
    %v4563 = vand.u32 %v4562, 4294901760
    %v4564 = vsub.f32 %v4562, %v4563
    %v4565 = vand.u32 %v4564, 4294901760
    %4566 = vmatmul.mubr.f32.gmra.mrb[0].mxu0 %v4565
    %v4567 = vpop.f32.mrb[0].mxu0
    %v4568 = vadd.f32 %v4487, %v4567
    %v4569 = vpop.f32.mrb[0].mxu0
    %4570 = vdwg.mxu0
    %4571 = vmatprep.subr.mxu0 0.0
    %v4572 = vand.u32 %v19, 4294901760
    %v4573 = vsub.f32 %v19, %v4572
    %v4574 = vand.u32 %v4573, 4294901760
    %v4575 = vsub.f32 %v4573, %v4574
    %v4576 = vand.u32 %v4575, 4294901760
    %4577 = vmatpush1.msra.mxu0 %v4576
    %4578 = vmatprep.subr.mxu0 0.0
    %v4579 = vand.u32 %v20, 4294901760
    %v4580 = vsub.f32 %v20, %v4579
    %v4581 = vand.u32 %v4580, 4294901760
    %v4582 = vsub.f32 %v4580, %v4581
    %v4583 = vand.u32 %v4582, 4294901760
    %4584 = vmatpush1.msra.mxu0 %v4583
    %4585 = vmatprep.subr.mxu0 0.0
    %v4586 = vand.u32 %v21, 4294901760
    %v4587 = vsub.f32 %v21, %v4586
    %v4588 = vand.u32 %v4587, 4294901760
    %v4589 = vsub.f32 %v4587, %v4588
    %v4590 = vand.u32 %v4589, 4294901760
    %4591 = vmatpush1.msra.mxu0 %v4590
    %4592 = vmatprep.subr.mxu0 0.0
    %v4593 = vand.u32 %v22, 4294901760
    %v4594 = vsub.f32 %v22, %v4593
    %v4595 = vand.u32 %v4594, 4294901760
    %v4596 = vsub.f32 %v4594, %v4595
    %v4597 = vand.u32 %v4596, 4294901760
    %4598 = vmatpush1.msra.mxu0 %v4597
    %4599 = vmatprep.subr.mxu0 0.0
    %4600 = vmatpush1.msra.mxu0 0.0
    %4601 = vmatprep.subr.mxu0 0.0
    %4602 = vmatpush1.msra.mxu0 0.0
    %4603 = vmatprep.subr.mxu0 0.0
    %4604 = vmatpush1.msra.mxu0 0.0
    %4605 = vmatprep.subr.mxu0 0.0
    %4606 = vmatpush1.msra.mxu0 0.0
    %4607 = vmatprep.subr.mxu0 0.0
    %4608 = vmatpush1.msra.mxu0 0.0
    %4609 = vmatprep.subr.mxu0 0.0
    %4610 = vmatpush1.msra.mxu0 0.0
    %4611 = vmatprep.subr.mxu0 0.0
    %4612 = vmatpush1.msra.mxu0 0.0
    %4613 = vmatprep.subr.mxu0 0.0
    %4614 = vmatpush1.msra.mxu0 0.0
    %4615 = vmatprep.subr.mxu0 0.0
    %4616 = vmatpush1.msra.mxu0 0.0
    %4617 = vmatprep.subr.mxu0 0.0
    %4618 = vmatpush1.msra.mxu0 0.0
    %4619 = vmatprep.subr.mxu0 0.0
    %4620 = vmatpush1.msra.mxu0 0.0
    %4621 = vmatprep.subr.mxu0 0.0
    %4622 = vmatpush1.msra.mxu0 0.0
    %4623 = vmatprep.subr.mxu0 0.0
    %4624 = vmatpush1.msra.mxu0 0.0
    %4625 = vmatprep.subr.mxu0 0.0
    %4626 = vmatpush1.msra.mxu0 0.0
    %4627 = vmatprep.subr.mxu0 0.0
    %4628 = vmatpush1.msra.mxu0 0.0
    %4629 = vmatprep.subr.mxu0 0.0
    %4630 = vmatpush1.msra.mxu0 0.0
    %4631 = vmatprep.subr.mxu0 0.0
    %4632 = vmatpush1.msra.mxu0 0.0
    %4633 = vmatprep.subr.mxu0 0.0
    %4634 = vmatpush1.msra.mxu0 0.0
    %4635 = vmatprep.subr.mxu0 0.0
    %4636 = vmatpush1.msra.mxu0 0.0
    %4637 = vmatprep.subr.mxu0 0.0
    %4638 = vmatpush1.msra.mxu0 0.0
    %4639 = vmatprep.subr.mxu0 0.0
    %4640 = vmatpush1.msra.mxu0 0.0
    %4641 = vmatprep.subr.mxu0 0.0
    %4642 = vmatpush1.msra.mxu0 0.0
    %4643 = vmatprep.subr.mxu0 0.0
    %4644 = vmatpush1.msra.mxu0 0.0
    %4645 = vmatprep.subr.mxu0 0.0
    %4646 = vmatpush1.msra.mxu0 0.0
    %4647 = vmatprep.subr.mxu0 0.0
    %4648 = vmatpush1.msra.mxu0 0.0
    %4649 = vmatprep.subr.mxu0 0.0
    %4650 = vmatpush1.msra.mxu0 0.0
    %4651 = vmatprep.subr.mxu0 0.0
    %4652 = vmatpush1.msra.mxu0 0.0
    %4653 = vmatprep.subr.mxu0 0.0
    %4654 = vmatpush1.msra.mxu0 0.0
    %4655 = vmatprep.mubr.f32.mxu0 0.0
    %v4656 = vand.u32 %v4490, 4294901760
    %4657 = vmatmul.mubr.f32.gmra.mrb[0].mxu0 %v4656
    %v4658 = vpop.f32.mrb[0].mxu0
    %v4659 = vadd.f32 %v4568, %v4658
    %v4660 = vpop.f32.mrb[0].mxu0
    %4661 = vdwg.mxu0
    %4662 = vmatprep.subr.mxu0 0.0
    %v4663 = vand.u32 %v19, 4294901760
    %v4664 = vsub.f32 %v19, %v4663
    %4665 = vmatpush1.msra.mxu0 %v4664
    %4666 = vmatprep.subr.mxu0 0.0
    %v4667 = vand.u32 %v20, 4294901760
    %v4668 = vsub.f32 %v20, %v4667
    %4669 = vmatpush1.msra.mxu0 %v4668
    %4670 = vmatprep.subr.mxu0 0.0
    %v4671 = vand.u32 %v21, 4294901760
    %v4672 = vsub.f32 %v21, %v4671
    %4673 = vmatpush1.msra.mxu0 %v4672
    %4674 = vmatprep.subr.mxu0 0.0
    %v4675 = vand.u32 %v22, 4294901760
    %v4676 = vsub.f32 %v22, %v4675
    %4677 = vmatpush1.msra.mxu0 %v4676
    %4678 = vmatprep.subr.mxu0 0.0
    %4679 = vmatpush1.msra.mxu0 0.0
    %4680 = vmatprep.subr.mxu0 0.0
    %4681 = vmatpush1.msra.mxu0 0.0
    %4682 = vmatprep.subr.mxu0 0.0
    %4683 = vmatpush1.msra.mxu0 0.0
    %4684 = vmatprep.subr.mxu0 0.0
    %4685 = vmatpush1.msra.mxu0 0.0
    %4686 = vmatprep.subr.mxu0 0.0
    %4687 = vmatpush1.msra.mxu0 0.0
    %4688 = vmatprep.subr.mxu0 0.0
    %4689 = vmatpush1.msra.mxu0 0.0
    %4690 = vmatprep.subr.mxu0 0.0
    %4691 = vmatpush1.msra.mxu0 0.0
    %4692 = vmatprep.subr.mxu0 0.0
    %4693 = vmatpush1.msra.mxu0 0.0
    %4694 = vmatprep.subr.mxu0 0.0
    %4695 = vmatpush1.msra.mxu0 0.0
    %4696 = vmatprep.subr.mxu0 0.0
    %4697 = vmatpush1.msra.mxu0 0.0
    %4698 = vmatprep.subr.mxu0 0.0
    %4699 = vmatpush1.msra.mxu0 0.0
    %4700 = vmatprep.subr.mxu0 0.0
    %4701 = vmatpush1.msra.mxu0 0.0
    %4702 = vmatprep.subr.mxu0 0.0
    %4703 = vmatpush1.msra.mxu0 0.0
    %4704 = vmatprep.subr.mxu0 0.0
    %4705 = vmatpush1.msra.mxu0 0.0
    %4706 = vmatprep.subr.mxu0 0.0
    %4707 = vmatpush1.msra.mxu0 0.0
    %4708 = vmatprep.subr.mxu0 0.0
    %4709 = vmatpush1.msra.mxu0 0.0
    %4710 = vmatprep.subr.mxu0 0.0
    %4711 = vmatpush1.msra.mxu0 0.0
    %4712 = vmatprep.subr.mxu0 0.0
    %4713 = vmatpush1.msra.mxu0 0.0
    %4714 = vmatprep.subr.mxu0 0.0
    %4715 = vmatpush1.msra.mxu0 0.0
    %4716 = vmatprep.subr.mxu0 0.0
    %4717 = vmatpush1.msra.mxu0 0.0
    %4718 = vmatprep.subr.mxu0 0.0
    %4719 = vmatpush1.msra.mxu0 0.0
    %4720 = vmatprep.subr.mxu0 0.0
    %4721 = vmatpush1.msra.mxu0 0.0
    %4722 = vmatprep.subr.mxu0 0.0
    %4723 = vmatpush1.msra.mxu0 0.0
    %4724 = vmatprep.subr.mxu0 0.0
    %4725 = vmatpush1.msra.mxu0 0.0
    %4726 = vmatprep.subr.mxu0 0.0
    %4727 = vmatpush1.msra.mxu0 0.0
    %4728 = vmatprep.subr.mxu0 0.0
    %4729 = vmatpush1.msra.mxu0 0.0
    %4730 = vmatprep.subr.mxu0 0.0
    %4731 = vmatpush1.msra.mxu0 0.0
    %4732 = vmatprep.subr.mxu0 0.0
    %4733 = vmatpush1.msra.mxu0 0.0
    %4734 = vmatprep.mubr.f32.mxu0 0.0
    %v4735 = vand.u32 %v4490, 4294901760
    %v4736 = vsub.f32 %v4490, %v4735
    %4737 = vmatmul.mubr.f32.gmra.mrb[0].mxu0 %v4736
    %v4738 = vpop.f32.mrb[0].mxu0
    %v4739 = vadd.f32 %v4659, %v4738
    %v4740 = vpop.f32.mrb[0].mxu0
    %4741 = vdwg.mxu0
    %4742 = vmatprep.subr.mxu0 0.0
    %v4743 = vand.u32 %v19, 4294901760
    %4744 = vmatpush1.msra.mxu0 %v4743
    %4745 = vmatprep.subr.mxu0 0.0
    %v4746 = vand.u32 %v20, 4294901760
    %4747 = vmatpush1.msra.mxu0 %v4746
    %4748 = vmatprep.subr.mxu0 0.0
    %v4749 = vand.u32 %v21, 4294901760
    %4750 = vmatpush1.msra.mxu0 %v4749
    %4751 = vmatprep.subr.mxu0 0.0
    %v4752 = vand.u32 %v22, 4294901760
    %4753 = vmatpush1.msra.mxu0 %v4752
    %4754 = vmatprep.subr.mxu0 0.0
    %4755 = vmatpush1.msra.mxu0 0.0
    %4756 = vmatprep.subr.mxu0 0.0
    %4757 = vmatpush1.msra.mxu0 0.0
    %4758 = vmatprep.subr.mxu0 0.0
    %4759 = vmatpush1.msra.mxu0 0.0
    %4760 = vmatprep.subr.mxu0 0.0
    %4761 = vmatpush1.msra.mxu0 0.0
    %4762 = vmatprep.subr.mxu0 0.0
    %4763 = vmatpush1.msra.mxu0 0.0
    %4764 = vmatprep.subr.mxu0 0.0
    %4765 = vmatpush1.msra.mxu0 0.0
    %4766 = vmatprep.subr.mxu0 0.0
    %4767 = vmatpush1.msra.mxu0 0.0
    %4768 = vmatprep.subr.mxu0 0.0
    %4769 = vmatpush1.msra.mxu0 0.0
    %4770 = vmatprep.subr.mxu0 0.0
    %4771 = vmatpush1.msra.mxu0 0.0
    %4772 = vmatprep.subr.mxu0 0.0
    %4773 = vmatpush1.msra.mxu0 0.0
    %4774 = vmatprep.subr.mxu0 0.0
    %4775 = vmatpush1.msra.mxu0 0.0
    %4776 = vmatprep.subr.mxu0 0.0
    %4777 = vmatpush1.msra.mxu0 0.0
    %4778 = vmatprep.subr.mxu0 0.0
    %4779 = vmatpush1.msra.mxu0 0.0
    %4780 = vmatprep.subr.mxu0 0.0
    %4781 = vmatpush1.msra.mxu0 0.0
    %4782 = vmatprep.subr.mxu0 0.0
    %4783 = vmatpush1.msra.mxu0 0.0
    %4784 = vmatprep.subr.mxu0 0.0
    %4785 = vmatpush1.msra.mxu0 0.0
    %4786 = vmatprep.subr.mxu0 0.0
    %4787 = vmatpush1.msra.mxu0 0.0
    %4788 = vmatprep.subr.mxu0 0.0
    %4789 = vmatpush1.msra.mxu0 0.0
    %4790 = vmatprep.subr.mxu0 0.0
    %4791 = vmatpush1.msra.mxu0 0.0
    %4792 = vmatprep.subr.mxu0 0.0
    %4793 = vmatpush1.msra.mxu0 0.0
    %4794 = vmatprep.subr.mxu0 0.0
    %4795 = vmatpush1.msra.mxu0 0.0
    %4796 = vmatprep.subr.mxu0 0.0
    %4797 = vmatpush1.msra.mxu0 0.0
    %4798 = vmatprep.subr.mxu0 0.0
    %4799 = vmatpush1.msra.mxu0 0.0
    %4800 = vmatprep.subr.mxu0 0.0
    %4801 = vmatpush1.msra.mxu0 0.0
    %4802 = vmatprep.subr.mxu0 0.0
    %4803 = vmatpush1.msra.mxu0 0.0
    %4804 = vmatprep.subr.mxu0 0.0
    %4805 = vmatpush1.msra.mxu0 0.0
    %4806 = vmatprep.subr.mxu0 0.0
    %4807 = vmatpush1.msra.mxu0 0.0
    %4808 = vmatprep.subr.mxu0 0.0
    %4809 = vmatpush1.msra.mxu0 0.0
    %4810 = vmatprep.mubr.f32.mxu0 0.0
    %v4811 = vand.u32 %v4490, 4294901760
    %v4812 = vsub.f32 %v4490, %v4811
    %v4813 = vand.u32 %v4812, 4294901760
    %4814 = vmatmul.mubr.f32.gmra.mrb[0].mxu0 %v4813
    %v4815 = vpop.f32.mrb[0].mxu0
    %v4816 = vadd.f32 %v4739, %v4815
    %v4817 = vpop.f32.mrb[0].mxu0
    %4818 = vdwg.mxu0
    %4819 = vmatprep.subr.mxu0 0.0
    %v4820 = vand.u32 %v19, 4294901760
    %v4821 = vsub.f32 %v19, %v4820
    %v4822 = vand.u32 %v4821, 4294901760
    %4823 = vmatpush1.msra.mxu0 %v4822
    %4824 = vmatprep.subr.mxu0 0.0
    %v4825 = vand.u32 %v20, 4294901760
    %v4826 = vsub.f32 %v20, %v4825
    %v4827 = vand.u32 %v4826, 4294901760
    %4828 = vmatpush1.msra.mxu0 %v4827
    %4829 = vmatprep.subr.mxu0 0.0
    %v4830 = vand.u32 %v21, 4294901760
    %v4831 = vsub.f32 %v21, %v4830
    %v4832 = vand.u32 %v4831, 4294901760
    %4833 = vmatpush1.msra.mxu0 %v4832
    %4834 = vmatprep.subr.mxu0 0.0
    %v4835 = vand.u32 %v22, 4294901760
    %v4836 = vsub.f32 %v22, %v4835
    %v4837 = vand.u32 %v4836, 4294901760
    %4838 = vmatpush1.msra.mxu0 %v4837
    %4839 = vmatprep.subr.mxu0 0.0
    %4840 = vmatpush1.msra.mxu0 0.0
    %4841 = vmatprep.subr.mxu0 0.0
    %4842 = vmatpush1.msra.mxu0 0.0
    %4843 = vmatprep.subr.mxu0 0.0
    %4844 = vmatpush1.msra.mxu0 0.0
    %4845 = vmatprep.subr.mxu0 0.0
    %4846 = vmatpush1.msra.mxu0 0.0
    %4847 = vmatprep.subr.mxu0 0.0
    %4848 = vmatpush1.msra.mxu0 0.0
    %4849 = vmatprep.subr.mxu0 0.0
    %4850 = vmatpush1.msra.mxu0 0.0
    %4851 = vmatprep.subr.mxu0 0.0
    %4852 = vmatpush1.msra.mxu0 0.0
    %4853 = vmatprep.subr.mxu0 0.0
    %4854 = vmatpush1.msra.mxu0 0.0
    %4855 = vmatprep.subr.mxu0 0.0
    %4856 = vmatpush1.msra.mxu0 0.0
    %4857 = vmatprep.subr.mxu0 0.0
    %4858 = vmatpush1.msra.mxu0 0.0
    %4859 = vmatprep.subr.mxu0 0.0
    %4860 = vmatpush1.msra.mxu0 0.0
    %4861 = vmatprep.subr.mxu0 0.0
    %4862 = vmatpush1.msra.mxu0 0.0
    %4863 = vmatprep.subr.mxu0 0.0
    %4864 = vmatpush1.msra.mxu0 0.0
    %4865 = vmatprep.subr.mxu0 0.0
    %4866 = vmatpush1.msra.mxu0 0.0
    %4867 = vmatprep.subr.mxu0 0.0
    %4868 = vmatpush1.msra.mxu0 0.0
    %4869 = vmatprep.subr.mxu0 0.0
    %4870 = vmatpush1.msra.mxu0 0.0
    %4871 = vmatprep.subr.mxu0 0.0
    %4872 = vmatpush1.msra.mxu0 0.0
    %4873 = vmatprep.subr.mxu0 0.0
    %4874 = vmatpush1.msra.mxu0 0.0
    %4875 = vmatprep.subr.mxu0 0.0
    %4876 = vmatpush1.msra.mxu0 0.0
    %4877 = vmatprep.subr.mxu0 0.0
    %4878 = vmatpush1.msra.mxu0 0.0
    %4879 = vmatprep.subr.mxu0 0.0
    %4880 = vmatpush1.msra.mxu0 0.0
    %4881 = vmatprep.subr.mxu0 0.0
    %4882 = vmatpush1.msra.mxu0 0.0
    %4883 = vmatprep.subr.mxu0 0.0
    %4884 = vmatpush1.msra.mxu0 0.0
    %4885 = vmatprep.subr.mxu0 0.0
    %4886 = vmatpush1.msra.mxu0 0.0
    %4887 = vmatprep.subr.mxu0 0.0
    %4888 = vmatpush1.msra.mxu0 0.0
    %4889 = vmatprep.subr.mxu0 0.0
    %4890 = vmatpush1.msra.mxu0 0.0
    %4891 = vmatprep.subr.mxu0 0.0
    %4892 = vmatpush1.msra.mxu0 0.0
    %4893 = vmatprep.subr.mxu0 0.0
    %4894 = vmatpush1.msra.mxu0 0.0
    %4895 = vmatprep.mubr.f32.mxu0 0.0
    %v4896 = vand.u32 %v4490, 4294901760
    %4897 = vmatmul.mubr.f32.gmra.mrb[0].mxu0 %v4896
    %v4898 = vpop.f32.mrb[0].mxu0
    %v4899 = vadd.f32 %v4816, %v4898
    %v4900 = vpop.f32.mrb[0].mxu0
    %4901 = vdwg.mxu0
    %4902 = vmatprep.subr.mxu0 0.0
    %v4903 = vand.u32 %v19, 4294901760
    %4904 = vmatpush1.msra.mxu0 %v4903
    %4905 = vmatprep.subr.mxu0 0.0
    %v4906 = vand.u32 %v20, 4294901760
    %4907 = vmatpush1.msra.mxu0 %v4906
    %4908 = vmatprep.subr.mxu0 0.0
    %v4909 = vand.u32 %v21, 4294901760
    %4910 = vmatpush1.msra.mxu0 %v4909
    %4911 = vmatprep.subr.mxu0 0.0
    %v4912 = vand.u32 %v22, 4294901760
    %4913 = vmatpush1.msra.mxu0 %v4912
    %4914 = vmatprep.subr.mxu0 0.0
    %4915 = vmatpush1.msra.mxu0 0.0
    %4916 = vmatprep.subr.mxu0 0.0
    %4917 = vmatpush1.msra.mxu0 0.0
    %4918 = vmatprep.subr.mxu0 0.0
    %4919 = vmatpush1.msra.mxu0 0.0
    %4920 = vmatprep.subr.mxu0 0.0
    %4921 = vmatpush1.msra.mxu0 0.0
    %4922 = vmatprep.subr.mxu0 0.0
    %4923 = vmatpush1.msra.mxu0 0.0
    %4924 = vmatprep.subr.mxu0 0.0
    %4925 = vmatpush1.msra.mxu0 0.0
    %4926 = vmatprep.subr.mxu0 0.0
    %4927 = vmatpush1.msra.mxu0 0.0
    %4928 = vmatprep.subr.mxu0 0.0
    %4929 = vmatpush1.msra.mxu0 0.0
    %4930 = vmatprep.subr.mxu0 0.0
    %4931 = vmatpush1.msra.mxu0 0.0
    %4932 = vmatprep.subr.mxu0 0.0
    %4933 = vmatpush1.msra.mxu0 0.0
    %4934 = vmatprep.subr.mxu0 0.0
    %4935 = vmatpush1.msra.mxu0 0.0
    %4936 = vmatprep.subr.mxu0 0.0
    %4937 = vmatpush1.msra.mxu0 0.0
    %4938 = vmatprep.subr.mxu0 0.0
    %4939 = vmatpush1.msra.mxu0 0.0
    %4940 = vmatprep.subr.mxu0 0.0
    %4941 = vmatpush1.msra.mxu0 0.0
    %4942 = vmatprep.subr.mxu0 0.0
    %4943 = vmatpush1.msra.mxu0 0.0
    %4944 = vmatprep.subr.mxu0 0.0
    %4945 = vmatpush1.msra.mxu0 0.0
    %4946 = vmatprep.subr.mxu0 0.0
    %4947 = vmatpush1.msra.mxu0 0.0
    %4948 = vmatprep.subr.mxu0 0.0
    %4949 = vmatpush1.msra.mxu0 0.0
    %4950 = vmatprep.subr.mxu0 0.0
    %4951 = vmatpush1.msra.mxu0 0.0
    %4952 = vmatprep.subr.mxu0 0.0
    %4953 = vmatpush1.msra.mxu0 0.0
    %4954 = vmatprep.subr.mxu0 0.0
    %4955 = vmatpush1.msra.mxu0 0.0
    %4956 = vmatprep.subr.mxu0 0.0
    %4957 = vmatpush1.msra.mxu0 0.0
    %4958 = vmatprep.subr.mxu0 0.0
    %4959 = vmatpush1.msra.mxu0 0.0
    %4960 = vmatprep.subr.mxu0 0.0
    %4961 = vmatpush1.msra.mxu0 0.0
    %4962 = vmatprep.subr.mxu0 0.0
    %4963 = vmatpush1.msra.mxu0 0.0
    %4964 = vmatprep.subr.mxu0 0.0
    %4965 = vmatpush1.msra.mxu0 0.0
    %4966 = vmatprep.subr.mxu0 0.0
    %4967 = vmatpush1.msra.mxu0 0.0
    %4968 = vmatprep.subr.mxu0 0.0
    %4969 = vmatpush1.msra.mxu0 0.0
    %4970 = vmatprep.mubr.f32.mxu0 0.0
    %v4971 = vand.u32 %v4490, 4294901760
    %4972 = vmatmul.mubr.f32.gmra.mrb[0].mxu0 %v4971
    %v4973 = vpop.f32.mrb[0].mxu0
    %v4974 = vadd.f32 %v4899, %v4973
    %v4975 = vpop.f32.mrb[0].mxu0
    %4976 = vdwg.mxu0
    %vm4977 = vcmask 58368
    %4978 = vst.msk [vmem:[#allocation2] sm:$0x3] %vm4977, %v4974
    // Predicated region
    $region10: #{rnn_forward.1} parent=1 // pred_check
      _
    $region11: #{rnn_forward.1} parent=1 // pred_check_branch
      %4980 = sbr.rel (0) target = $region13
    $region12: #{rnn_forward.1} parent=1 // pred_region
      %s4982 = ssub.s32 32, 32
      %4983 = vsyncadd [#allocation3], %s4982
      %s4985 = sshll.u32 [#allocation2], 4
      %s4986 = int_to_ptr.vmem [resolvable:$true] %s4985
      %4988 = dma.vmem_to_hbm [thread:$0]  %s4986, 32, %s2, [#allocation3]
    $region13: #{rnn_forward.1} parent=1 // pred_fallthru
      _
    // Predicated region
    $region14: #{rnn_forward.1} parent=1 // pred_check
      _
    $region15: #{rnn_forward.1} parent=1 // pred_check_branch
      %4990 = sbr.rel (0) target = $region17
    $region16: #{rnn_forward.1} parent=1 // pred_region
      %4991 = dma.done [#allocation3], 32
    $region17: #{rnn_forward.1} parent=1 // pred_fallthru
      _
    %4992 = vsyncpa [#allocation3], 1

</llo_original>
